<compile_context>
chip_gen: v6e
topology: v6e:2x2x1
jax: 0.10.0
libtpu: 0.0.40
codegen_flags: <defaults>
</compile_context>

<pallas_src>
import numpy as np
import jax
import jax.numpy as jnp
from jax import lax
from jax.experimental import pallas as pl
from jax.experimental.pallas import tpu as pltpu


# ---------------------------------------------------------------------------
# In-kernel helpers (traced inside the Pallas kernel; all shapes are static)
# ---------------------------------------------------------------------------
def _shift_mats(h):
    """0/1 (h,h) matrices: Pup@z = z shifted up one row (last row -> 0),
    Pdn@z = z shifted down one row (first row -> 0)."""
    r = lax.broadcasted_iota(jnp.int32, (h, h), 0)
    c = lax.broadcasted_iota(jnp.int32, (h, h), 1)
    pup = (c == r + 1).astype(jnp.float32)
    pdn = (c == r - 1).astype(jnp.float32)
    return pup, pdn


def _pool_mats(h):
    """0/1 (h//2, h) row-selection matrices: even rows / odd rows."""
    r = lax.broadcasted_iota(jnp.int32, (h // 2, h), 0)
    c = lax.broadcasted_iota(jnp.int32, (h // 2, h), 1)
    se = (c == 2 * r).astype(jnp.float32)
    so = (c == 2 * r + 1).astype(jnp.float32)
    return se, so


def _conv_relu_pool(a, wcat_ref, bias_ref):
    """One [conv3x3(pad=1) (+folded BN) + ReLU + maxpool2] block.

    a        : (H, W*Cin) f32, lane-dense, columns ordered (x, ci).
    wcat_ref : (W*Cin, 3*W*Cout) bf16.  Three block-tridiagonal slabs
               [dy=0 | dy=+1 | dy=-1]; SAME padding along W and the maxpool
               output-column permutation ([even x | odd x]) are folded in.
    bias_ref : (1, W*Cout) f32 (conv bias + folded BN, tiled over x).
    returns  : (H//2, (W//2)*Cout) f32, columns ordered (x_out, co).
    """
    h = a.shape[0]
    s = bias_ref.shape[1]                                   # W * Cout
    # Single wide MXU matmul per layer (bf16 operands, f32 accumulation).
    z = jnp.dot(a.astype(wcat_ref.dtype), wcat_ref[...],
                preferred_element_type=jnp.float32)         # (H, 3*S)
    z0, zp, zm = z[:, :s], z[:, s:2 * s], z[:, 2 * s:]      # 128-aligned slabs
    pup, pdn = _shift_mats(h)
    pre = (z0
           + jnp.dot(pup, zp, preferred_element_type=jnp.float32)
           + jnp.dot(pdn, zm, preferred_element_type=jnp.float32)
           + bias_ref[...])
    act = jnp.maximum(pre, 0.0)                             # ReLU
    half = s // 2
    pw = jnp.maximum(act[:, :half], act[:, half:])          # maxpool along W
    se, so = _pool_mats(h)                                  # maxpool along H
    return jnp.maximum(jnp.dot(se, pw, preferred_element_type=jnp.float32),
                       jnp.dot(so, pw, preferred_element_type=jnp.float32))


# ---------------------------------------------------------------------------
# Fused Pallas kernel: whole CNN forward for one image per grid step
# ---------------------------------------------------------------------------
def cnn_kernel(x_ref,
               wc1, bc1, wc2, bc2, wc3, bc3, wc4, bc4,
               wm1, bm1, wm2, bm2,
               o_ref):
    a = x_ref[0]                                            # (16, 16) f32 image
    a = _conv_relu_pool(a, wc1, bc1)                        # (8, 8*32 = 256)
    a = _conv_relu_pool(a, wc2, bc2)                        # (4, 4*32 = 128)
    a = _conv_relu_pool(a, wc3, bc3)                        # (2, 2*32 =  64)
    a = _conv_relu_pool(a, wc4, bc4)                        # (1, 1*64 =  64)

    # block2 MLP: Linear -> ReLU -> Dropout(identity, eval) -> Linear
    # TODO(synk): Dropout(p=0.5)/Dropout2d are training-mode ops; identity here.
    hid = jnp.dot(a.astype(wm1.dtype), wm1[...],
                  preferred_element_type=jnp.float32) + bm1[...]
    hid = jnp.maximum(hid, 0.0)
    out = jnp.dot(hid.astype(wm2.dtype), wm2[...],
                  preferred_element_type=jnp.float32) + bm2[...]
    o_ref[0] = out.astype(o_ref.dtype)                      # (1, C)


# ---------------------------------------------------------------------------
# Wrapper: parameter layout prep + single batch-parallel pallas_call
# ---------------------------------------------------------------------------
def _full_block_spec(shape):
    zero = (0,) * len(shape)
    return pl.BlockSpec(shape, lambda b, _z=zero: _z)


@jax.jit
def cnn_forward(x_nchw, kparams):
    n, cin, h, w = x_nchw.shape
    assert cin == 1, "fused kernel supports nchannels == 1"
    assert h == 16 and w == 16, "fused kernel assumes a 16x16 input"
    c_out = kparams[-1].shape[1]

    # nchannels == 1: NCHW -> (N, H, W) is a pure reshape; 16 real lanes
    # instead of a trailing dim of 1 (which would pad to 128 lanes).
    x3 = x_nchw.reshape(n, h, w).astype(jnp.float32)

    in_specs = [pl.BlockSpec((1, h, w), lambda b: (b, 0, 0))]
    in_specs += [_full_block_spec(p.shape) for p in kparams]

    out = pl.pallas_call(
        cnn_kernel,
        grid=(n,),
        in_specs=in_specs,
        out_specs=pl.BlockSpec((1, 1, c_out), lambda b: (b, 0, 0)),
        out_shape=jax.ShapeDtypeStruct((n, 1, c_out), jnp.float32),
        compiler_params=pltpu.CompilerParams(
            dimension_semantics=("parallel",)),
    )(x3, *kparams)
    return out.reshape(n, c_out)


# ---------------------------------------------------------------------------
# Parameter preparation (runs once, outside the kernel)
# ---------------------------------------------------------------------------
def _block_tridiag_weight(w_hwio, width):
    """(3,3,Cin,Cout) HWIO conv weights -> (W*Cin, 3*W*Cout).

    The three dx taps and the SAME zero-padding along W become a
    block-tridiagonal matrix; output x-columns are permuted to
    [even x | odd x] so the 2x maxpool along W is a single halves-max.
    Slab order along the output columns: dy = 0, +1, -1.
    """
    w = np.asarray(w_hwio, np.float32)
    cin, cout = w.shape[2], w.shape[3]
    perm = list(range(0, width, 2)) + list(range(1, width, 2))
    slabs = []
    for ky in (1, 2, 0):                          # dy = 0, +1, -1
        big = np.zeros((width * cin, width * cout), np.float32)
        for slot, x in enumerate(perm):
            for dx in (-1, 0, 1):
                xin = x + dx
                if 0 <= xin < width:
                    big[xin * cin:(xin + 1) * cin,
                        slot * cout:(slot + 1) * cout] = w[ky, dx + 1]
        slabs.append(big)
    return np.concatenate(slabs, axis=1)


def prepare_kernel_params(conv_params, mlp_params, nrows, ncols,
                          mxu_dtype=jnp.bfloat16):
    """Convert reference-layout params to the fused kernel's layout.

    Conv weights -> block-tridiagonal bf16 matrices (dx taps, W-padding and the
    W-pool column permutation folded in); biases (with eval-mode BN already
    folded) -> f32 rows tiled over x.  MLP weights -> bf16.
    """
    assert nrows % 16 == 0 and ncols % 16 == 0
    widths = [ncols, ncols // 2, ncols // 4, ncols // 8]
    kp = []
    for (w, b), width in zip(conv_params, widths):
        cout = w.shape[3]
        big = _block_tridiag_weight(np.asarray(w), width)
        bias_row = np.tile(np.asarray(b).reshape(cout), width).reshape(1, width * cout)
        kp += [jnp.asarray(big, mxu_dtype), jnp.asarray(bias_row, jnp.float32)]

    w1, b1, w2, b2 = mlp_params
    cf = conv_params[-1][0].shape[-1]
    hf, wf = nrows // 16, ncols // 16
    # TODO(synk): hf == wf == 1 keeps the PyTorch NCHW .view(-1, Z) flatten
    # trivial; larger inputs would need the flatten permutation folded into w1.
    assert hf == 1 and wf == 1, "fused kernel assumes a 16x16 input (1x1 final map)"
    assert w1.shape[0] == cf * hf * wf
    kp += [jnp.asarray(w1, mxu_dtype), jnp.asarray(b1, jnp.float32),
           jnp.asarray(w2, mxu_dtype), jnp.asarray(b2, jnp.float32)]
    return tuple(kp)


# ---------------------------------------------------------------------------
# Deterministic synthetic parameters (eval-mode BN folded into conv)
# ---------------------------------------------------------------------------
def init_params(key, nchannels=1, Z=64, mlp_dim=32, C=4):
    cins = [nchannels, 32, 32, 32]
    couts = [32, 32, 32, 64]
    eps = 1e-5
    conv_params = []
    for i in range(4):
        key, kw, kb, kg, kbe, km, kv = jax.random.split(key, 7)
        w = 0.1 * jax.random.normal(kw, (3, 3, cins[i], couts[i]), jnp.float32)
        b = 0.1 * jax.random.normal(kb, (couts[i],), jnp.float32)
        if i > 0:  # layers 2-4 have BatchNorm2d; fold eval-mode BN into conv
            gamma = 1.0 + 0.1 * jax.random.normal(kg, (couts[i],), jnp.float32)
            beta = 0.1 * jax.random.normal(kbe, (couts[i],), jnp.float32)
            mean = 0.1 * jax.random.normal(km, (couts[i],), jnp.float32)
            var = 1.0 + 0.1 * jax.random.uniform(kv, (couts[i],), jnp.float32)
            scale = gamma / jnp.sqrt(var + eps)
            w = w * scale[None, None, None, :]
            b = (b - mean) * scale + beta
        conv_params.append((w, b.reshape(1, couts[i])))

    key, k1, k2, k3, k4 = jax.random.split(key, 5)
    w1 = 0.1 * jax.random.normal(k1, (Z, mlp_dim), jnp.float32)
    b1 = 0.1 * jax.random.normal(k2, (1, mlp_dim), jnp.float32)
    w2 = 0.1 * jax.random.normal(k3, (mlp_dim, C), jnp.float32)
    b2 = 0.1 * jax.random.normal(k4, (1, C), jnp.float32)
    return conv_params, (w1, b1, w2, b2)


# ---------------------------------------------------------------------------
# Pure-JAX reference (independent of the Pallas path) for a sanity check
# ---------------------------------------------------------------------------
def ref_forward(x_nchw, conv_params, mlp_params):
    x = jnp.transpose(x_nchw, (0, 2, 3, 1)).astype(jnp.float32)
    for (w, b) in conv_params:
        y = jax.lax.conv_general_dilated(
            x, w, window_strides=(1, 1), padding="SAME",
            dimension_numbers=("NHWC", "HWIO", "NHWC"),
            precision=jax.lax.Precision.HIGHEST) + b
        y = jnp.maximum(y, 0.0)
        N, H, W, Cc = y.shape
        x = y.reshape(N, H // 2, 2, W // 2, 2, Cc).max(axis=(2, 4))
    N = x.shape[0]
    x = jnp.transpose(x, (0, 3, 1, 2)).reshape(N, -1)   # PyTorch NCHW flatten
    w1, b1, w2, b2 = mlp_params
    h = jnp.maximum(jnp.dot(x, w1, precision="highest") + b1, 0.0)
    return jnp.dot(h, w2, precision="highest") + b2


if __name__ == "__main__":
    # Small shapes: batch=2, nchannels=1, nrows=ncols=16 -> Z = 64*1*1 = 64,
    # mlp_dim=32, C=4
    key = jax.random.PRNGKey(0)
    key, kx = jax.random.split(key)
    x = jax.random.normal(kx, (2, 1, 16, 16), jnp.float32)   # NCHW (PyTorch layout)

    conv_params, mlp_params = init_params(key, nchannels=1, Z=64, mlp_dim=32, C=4)
    kparams = prepare_kernel_params(conv_params, mlp_params, nrows=16, ncols=16)

    logits = jax.block_until_ready(cnn_forward(x, kparams))
    assert logits.shape == (2, 4), logits.shape

    ref = ref_forward(x, conv_params, mlp_params)
    # Tolerance accounts for bf16 MXU operands (f32 accumulation) in the kernel
    # vs. a HIGHEST-precision f32 reference.
    assert jnp.allclose(logits, ref, rtol=3e-2, atol=3e-2), (
        "mismatch vs reference", jnp.max(jnp.abs(logits - ref)))

    print("KERNEL_OK")
</pallas_src>

<mosaic_0001>
module attributes {stable_mosaic.version = 11 : i64} {
  func.func @cnn_kernel(%arg0: i32, %arg1: memref<1x16x16xf32, #tpu.memory_space<vmem>>, %arg2: memref<16x1536xbf16, #tpu.memory_space<vmem>>, %arg3: memref<1x512xf32, #tpu.memory_space<vmem>>, %arg4: memref<256x768xbf16, #tpu.memory_space<vmem>>, %arg5: memref<1x256xf32, #tpu.memory_space<vmem>>, %arg6: memref<128x384xbf16, #tpu.memory_space<vmem>>, %arg7: memref<1x128xf32, #tpu.memory_space<vmem>>, %arg8: memref<64x384xbf16, #tpu.memory_space<vmem>>, %arg9: memref<1x128xf32, #tpu.memory_space<vmem>>, %arg10: memref<64x32xbf16, #tpu.memory_space<vmem>>, %arg11: memref<1x32xf32, #tpu.memory_space<vmem>>, %arg12: memref<32x4xbf16, #tpu.memory_space<vmem>>, %arg13: memref<1x4xf32, #tpu.memory_space<vmem>>, %arg14: memref<1x1x4xf32, #tpu.memory_space<vmem>>) attributes {dimension_semantics = [#tpu.dimension_semantics<parallel>], iteration_bounds = array<i64: 2>, scalar_prefetch = 0 : i64, scratch_operands = 0 : i64, tpu.core_type = #tpu.core_type<tc>, window_params = [{transform_indices = @transform_0, window_bounds = array<i64: 1, 16, 16>}, {pipeline_mode = #tpu.pipeline_mode<synchronous>, transform_indices = @transform_1, window_bounds = array<i64: 16, 1536>}, {pipeline_mode = #tpu.pipeline_mode<synchronous>, transform_indices = @transform_2, window_bounds = array<i64: 1, 512>}, {pipeline_mode = #tpu.pipeline_mode<synchronous>, transform_indices = @transform_3, window_bounds = array<i64: 256, 768>}, {pipeline_mode = #tpu.pipeline_mode<synchronous>, transform_indices = @transform_4, window_bounds = array<i64: 1, 256>}, {pipeline_mode = #tpu.pipeline_mode<synchronous>, transform_indices = @transform_5, window_bounds = array<i64: 128, 384>}, {pipeline_mode = #tpu.pipeline_mode<synchronous>, transform_indices = @transform_6, window_bounds = array<i64: 1, 128>}, {pipeline_mode = #tpu.pipeline_mode<synchronous>, transform_indices = @transform_7, window_bounds = array<i64: 64, 384>}, {pipeline_mode = #tpu.pipeline_mode<synchronous>, transform_indices = @transform_8, window_bounds = array<i64: 1, 128>}, {pipeline_mode = #tpu.pipeline_mode<synchronous>, transform_indices = @transform_9, window_bounds = array<i64: 64, 32>}, {pipeline_mode = #tpu.pipeline_mode<synchronous>, transform_indices = @transform_10, window_bounds = array<i64: 1, 32>}, {pipeline_mode = #tpu.pipeline_mode<synchronous>, transform_indices = @transform_11, window_bounds = array<i64: 32, 4>}, {pipeline_mode = #tpu.pipeline_mode<synchronous>, transform_indices = @transform_12, window_bounds = array<i64: 1, 4>}, {transform_indices = @transform_13, window_bounds = array<i64: 1, 1, 4>}]} {
    %c0 = arith.constant 0 : index
    %c0_0 = arith.constant 0 : index
    %c0_1 = arith.constant 0 : index
    %0 = vector.load %arg1[%c0, %c0_0, %c0_1] : memref<1x16x16xf32, #tpu.memory_space<vmem>>, vector<1x16x16xf32>
    %1 = vector.shape_cast %0 : vector<1x16x16xf32> to vector<16x16xf32>
    %2 = arith.truncf %1 : vector<16x16xf32> to vector<16x16xbf16>
    %c0_2 = arith.constant 0 : index
    %c0_3 = arith.constant 0 : index
    %3 = vector.load %arg2[%c0_2, %c0_3] : memref<16x1536xbf16, #tpu.memory_space<vmem>>, vector<16x1536xbf16>
    %cst = arith.constant dense<0.000000e+00> : vector<16x1536xf32>
    %4 = tpu.matmul %2, %3, %cst {dimension_numbers = #tpu.dot_dimension_numbers<[1], [0], [0], [1], [0, 0, 1, 1], [], []>} : vector<16x16xbf16>, vector<16x1536xbf16>, vector<16x1536xf32> -> vector<16x1536xf32>
    %5 = vector.extract_strided_slice %4 {offsets = [0, 0], sizes = [16, 512], strides = [1, 1]} : vector<16x1536xf32> to vector<16x512xf32>
    %6 = vector.extract_strided_slice %4 {offsets = [0, 512], sizes = [16, 512], strides = [1, 1]} : vector<16x1536xf32> to vector<16x512xf32>
    %7 = vector.extract_strided_slice %4 {offsets = [0, 1024], sizes = [16, 512], strides = [1, 1]} : vector<16x1536xf32> to vector<16x512xf32>
    %8 = tpu.iota {dimensions = array<i32: 0>} : vector<16x16xi32>
    %9 = tpu.iota {dimensions = array<i32: 1>} : vector<16x16xi32>
    %c1_i32 = arith.constant 1 : i32
    %10 = vector.broadcast %c1_i32 : i32 to vector<16x16xi32>
    %11 = arith.addi %8, %10 : vector<16x16xi32>
    %12 = arith.cmpi eq, %9, %11 : vector<16x16xi32>
    %13 = arith.extui %12 : vector<16x16xi1> to vector<16x16xi32>
    %14 = arith.sitofp %13 : vector<16x16xi32> to vector<16x16xf32>
    %c1_i32_4 = arith.constant 1 : i32
    %15 = vector.broadcast %c1_i32_4 : i32 to vector<16x16xi32>
    %16 = arith.subi %8, %15 : vector<16x16xi32>
    %17 = arith.cmpi eq, %9, %16 : vector<16x16xi32>
    %18 = arith.extui %17 : vector<16x16xi1> to vector<16x16xi32>
    %19 = arith.sitofp %18 : vector<16x16xi32> to vector<16x16xf32>
    %cst_5 = arith.constant dense<0.000000e+00> : vector<16x512xf32>
    %20 = tpu.matmul %14, %6, %cst_5 {dimension_numbers = #tpu.dot_dimension_numbers<[1], [0], [0], [1], [0, 0, 1, 1], [], []>} : vector<16x16xf32>, vector<16x512xf32>, vector<16x512xf32> -> vector<16x512xf32>
    %21 = arith.addf %5, %20 : vector<16x512xf32>
    %cst_6 = arith.constant dense<0.000000e+00> : vector<16x512xf32>
    %22 = tpu.matmul %19, %7, %cst_6 {dimension_numbers = #tpu.dot_dimension_numbers<[1], [0], [0], [1], [0, 0, 1, 1], [], []>} : vector<16x16xf32>, vector<16x512xf32>, vector<16x512xf32> -> vector<16x512xf32>
    %23 = arith.addf %21, %22 : vector<16x512xf32>
    %c0_7 = arith.constant 0 : index
    %c0_8 = arith.constant 0 : index
    %24 = vector.load %arg3[%c0_7, %c0_8] : memref<1x512xf32, #tpu.memory_space<vmem>>, vector<1x512xf32>
    %25 = vector.broadcast %24 : vector<1x512xf32> to vector<16x512xf32>
    %26 = arith.addf %23, %25 : vector<16x512xf32>
    %cst_9 = arith.constant 0.000000e+00 : f32
    %27 = vector.broadcast %cst_9 : f32 to vector<16x512xf32>
    %28 = arith.maximumf %26, %27 : vector<16x512xf32>
    %29 = vector.extract_strided_slice %28 {offsets = [0, 0], sizes = [16, 256], strides = [1, 1]} : vector<16x512xf32> to vector<16x256xf32>
    %30 = vector.extract_strided_slice %28 {offsets = [0, 256], sizes = [16, 256], strides = [1, 1]} : vector<16x512xf32> to vector<16x256xf32>
    %31 = arith.maximumf %29, %30 : vector<16x256xf32>
    %32 = tpu.iota {dimensions = array<i32: 0>} : vector<8x16xi32>
    %33 = tpu.iota {dimensions = array<i32: 1>} : vector<8x16xi32>
    %c2_i32 = arith.constant 2 : i32
    %34 = vector.broadcast %c2_i32 : i32 to vector<8x16xi32>
    %35 = arith.muli %34, %32 : vector<8x16xi32>
    %36 = arith.cmpi eq, %33, %35 : vector<8x16xi32>
    %37 = arith.extui %36 : vector<8x16xi1> to vector<8x16xi32>
    %38 = arith.sitofp %37 : vector<8x16xi32> to vector<8x16xf32>
    %c2_i32_10 = arith.constant 2 : i32
    %39 = vector.broadcast %c2_i32_10 : i32 to vector<8x16xi32>
    %40 = arith.muli %39, %32 : vector<8x16xi32>
    %c1_i32_11 = arith.constant 1 : i32
    %41 = vector.broadcast %c1_i32_11 : i32 to vector<8x16xi32>
    %42 = arith.addi %40, %41 : vector<8x16xi32>
    %43 = arith.cmpi eq, %33, %42 : vector<8x16xi32>
    %44 = arith.extui %43 : vector<8x16xi1> to vector<8x16xi32>
    %45 = arith.sitofp %44 : vector<8x16xi32> to vector<8x16xf32>
    %cst_12 = arith.constant dense<0.000000e+00> : vector<8x256xf32>
    %46 = tpu.matmul %38, %31, %cst_12 {dimension_numbers = #tpu.dot_dimension_numbers<[1], [0], [0], [1], [0, 0, 1, 1], [], []>} : vector<8x16xf32>, vector<16x256xf32>, vector<8x256xf32> -> vector<8x256xf32>
    %cst_13 = arith.constant dense<0.000000e+00> : vector<8x256xf32>
    %47 = tpu.matmul %45, %31, %cst_13 {dimension_numbers = #tpu.dot_dimension_numbers<[1], [0], [0], [1], [0, 0, 1, 1], [], []>} : vector<8x16xf32>, vector<16x256xf32>, vector<8x256xf32> -> vector<8x256xf32>
    %48 = arith.maximumf %46, %47 : vector<8x256xf32>
    %49 = arith.truncf %48 : vector<8x256xf32> to vector<8x256xbf16>
    %c0_14 = arith.constant 0 : index
    %c0_15 = arith.constant 0 : index
    %50 = vector.load %arg4[%c0_14, %c0_15] : memref<256x768xbf16, #tpu.memory_space<vmem>>, vector<256x768xbf16>
    %cst_16 = arith.constant dense<0.000000e+00> : vector<8x768xf32>
    %51 = tpu.matmul %49, %50, %cst_16 {dimension_numbers = #tpu.dot_dimension_numbers<[1], [0], [0], [1], [0, 0, 1, 1], [], []>} : vector<8x256xbf16>, vector<256x768xbf16>, vector<8x768xf32> -> vector<8x768xf32>
    %52 = vector.extract_strided_slice %51 {offsets = [0, 0], sizes = [8, 256], strides = [1, 1]} : vector<8x768xf32> to vector<8x256xf32>
    %53 = vector.extract_strided_slice %51 {offsets = [0, 256], sizes = [8, 256], strides = [1, 1]} : vector<8x768xf32> to vector<8x256xf32>
    %54 = vector.extract_strided_slice %51 {offsets = [0, 512], sizes = [8, 256], strides = [1, 1]} : vector<8x768xf32> to vector<8x256xf32>
    %55 = tpu.iota {dimensions = array<i32: 0>} : vector<8x8xi32>
    %56 = tpu.iota {dimensions = array<i32: 1>} : vector<8x8xi32>
    %c1_i32_17 = arith.constant 1 : i32
    %57 = vector.broadcast %c1_i32_17 : i32 to vector<8x8xi32>
    %58 = arith.addi %55, %57 : vector<8x8xi32>
    %59 = arith.cmpi eq, %56, %58 : vector<8x8xi32>
    %60 = arith.extui %59 : vector<8x8xi1> to vector<8x8xi32>
    %61 = arith.sitofp %60 : vector<8x8xi32> to vector<8x8xf32>
    %c1_i32_18 = arith.constant 1 : i32
    %62 = vector.broadcast %c1_i32_18 : i32 to vector<8x8xi32>
    %63 = arith.subi %55, %62 : vector<8x8xi32>
    %64 = arith.cmpi eq, %56, %63 : vector<8x8xi32>
    %65 = arith.extui %64 : vector<8x8xi1> to vector<8x8xi32>
    %66 = arith.sitofp %65 : vector<8x8xi32> to vector<8x8xf32>
    %cst_19 = arith.constant dense<0.000000e+00> : vector<8x256xf32>
    %67 = tpu.matmul %61, %53, %cst_19 {dimension_numbers = #tpu.dot_dimension_numbers<[1], [0], [0], [1], [0, 0, 1, 1], [], []>} : vector<8x8xf32>, vector<8x256xf32>, vector<8x256xf32> -> vector<8x256xf32>
    %68 = arith.addf %52, %67 : vector<8x256xf32>
    %cst_20 = arith.constant dense<0.000000e+00> : vector<8x256xf32>
    %69 = tpu.matmul %66, %54, %cst_20 {dimension_numbers = #tpu.dot_dimension_numbers<[1], [0], [0], [1], [0, 0, 1, 1], [], []>} : vector<8x8xf32>, vector<8x256xf32>, vector<8x256xf32> -> vector<8x256xf32>
    %70 = arith.addf %68, %69 : vector<8x256xf32>
    %c0_21 = arith.constant 0 : index
    %c0_22 = arith.constant 0 : index
    %71 = vector.load %arg5[%c0_21, %c0_22] : memref<1x256xf32, #tpu.memory_space<vmem>>, vector<1x256xf32>
    %72 = vector.broadcast %71 : vector<1x256xf32> to vector<8x256xf32>
    %73 = arith.addf %70, %72 : vector<8x256xf32>
    %cst_23 = arith.constant 0.000000e+00 : f32
    %74 = vector.broadcast %cst_23 : f32 to vector<8x256xf32>
    %75 = arith.maximumf %73, %74 : vector<8x256xf32>
    %76 = vector.extract_strided_slice %75 {offsets = [0, 0], sizes = [8, 128], strides = [1, 1]} : vector<8x256xf32> to vector<8x128xf32>
    %77 = vector.extract_strided_slice %75 {offsets = [0, 128], sizes = [8, 128], strides = [1, 1]} : vector<8x256xf32> to vector<8x128xf32>
    %78 = arith.maximumf %76, %77 : vector<8x128xf32>
    %79 = tpu.iota {dimensions = array<i32: 0>} : vector<4x8xi32>
    %80 = tpu.iota {dimensions = array<i32: 1>} : vector<4x8xi32>
    %c2_i32_24 = arith.constant 2 : i32
    %81 = vector.broadcast %c2_i32_24 : i32 to vector<4x8xi32>
    %82 = arith.muli %81, %79 : vector<4x8xi32>
    %83 = arith.cmpi eq, %80, %82 : vector<4x8xi32>
    %84 = arith.extui %83 : vector<4x8xi1> to vector<4x8xi32>
    %85 = arith.sitofp %84 : vector<4x8xi32> to vector<4x8xf32>
    %c2_i32_25 = arith.constant 2 : i32
    %86 = vector.broadcast %c2_i32_25 : i32 to vector<4x8xi32>
    %87 = arith.muli %86, %79 : vector<4x8xi32>
    %c1_i32_26 = arith.constant 1 : i32
    %88 = vector.broadcast %c1_i32_26 : i32 to vector<4x8xi32>
    %89 = arith.addi %87, %88 : vector<4x8xi32>
    %90 = arith.cmpi eq, %80, %89 : vector<4x8xi32>
    %91 = arith.extui %90 : vector<4x8xi1> to vector<4x8xi32>
    %92 = arith.sitofp %91 : vector<4x8xi32> to vector<4x8xf32>
    %cst_27 = arith.constant dense<0.000000e+00> : vector<4x128xf32>
    %93 = tpu.matmul %85, %78, %cst_27 {dimension_numbers = #tpu.dot_dimension_numbers<[1], [0], [0], [1], [0, 0, 1, 1], [], []>} : vector<4x8xf32>, vector<8x128xf32>, vector<4x128xf32> -> vector<4x128xf32>
    %cst_28 = arith.constant dense<0.000000e+00> : vector<4x128xf32>
    %94 = tpu.matmul %92, %78, %cst_28 {dimension_numbers = #tpu.dot_dimension_numbers<[1], [0], [0], [1], [0, 0, 1, 1], [], []>} : vector<4x8xf32>, vector<8x128xf32>, vector<4x128xf32> -> vector<4x128xf32>
    %95 = arith.maximumf %93, %94 : vector<4x128xf32>
    %96 = arith.truncf %95 : vector<4x128xf32> to vector<4x128xbf16>
    %c0_29 = arith.constant 0 : index
    %c0_30 = arith.constant 0 : index
    %97 = vector.load %arg6[%c0_29, %c0_30] : memref<128x384xbf16, #tpu.memory_space<vmem>>, vector<128x384xbf16>
    %cst_31 = arith.constant dense<0.000000e+00> : vector<4x384xf32>
    %98 = tpu.matmul %96, %97, %cst_31 {dimension_numbers = #tpu.dot_dimension_numbers<[1], [0], [0], [1], [0, 0, 1, 1], [], []>} : vector<4x128xbf16>, vector<128x384xbf16>, vector<4x384xf32> -> vector<4x384xf32>
    %99 = vector.extract_strided_slice %98 {offsets = [0, 0], sizes = [4, 128], strides = [1, 1]} : vector<4x384xf32> to vector<4x128xf32>
    %100 = vector.extract_strided_slice %98 {offsets = [0, 128], sizes = [4, 128], strides = [1, 1]} : vector<4x384xf32> to vector<4x128xf32>
    %101 = vector.extract_strided_slice %98 {offsets = [0, 256], sizes = [4, 128], strides = [1, 1]} : vector<4x384xf32> to vector<4x128xf32>
    %102 = tpu.iota {dimensions = array<i32: 0>} : vector<4x4xi32>
    %103 = tpu.iota {dimensions = array<i32: 1>} : vector<4x4xi32>
    %c1_i32_32 = arith.constant 1 : i32
    %104 = vector.broadcast %c1_i32_32 : i32 to vector<4x4xi32>
    %105 = arith.addi %102, %104 : vector<4x4xi32>
    %106 = arith.cmpi eq, %103, %105 : vector<4x4xi32>
    %107 = arith.extui %106 : vector<4x4xi1> to vector<4x4xi32>
    %108 = arith.sitofp %107 : vector<4x4xi32> to vector<4x4xf32>
    %c1_i32_33 = arith.constant 1 : i32
    %109 = vector.broadcast %c1_i32_33 : i32 to vector<4x4xi32>
    %110 = arith.subi %102, %109 : vector<4x4xi32>
    %111 = arith.cmpi eq, %103, %110 : vector<4x4xi32>
    %112 = arith.extui %111 : vector<4x4xi1> to vector<4x4xi32>
    %113 = arith.sitofp %112 : vector<4x4xi32> to vector<4x4xf32>
    %cst_34 = arith.constant dense<0.000000e+00> : vector<4x128xf32>
    %114 = tpu.matmul %108, %100, %cst_34 {dimension_numbers = #tpu.dot_dimension_numbers<[1], [0], [0], [1], [0, 0, 1, 1], [], []>} : vector<4x4xf32>, vector<4x128xf32>, vector<4x128xf32> -> vector<4x128xf32>
    %115 = arith.addf %99, %114 : vector<4x128xf32>
    %cst_35 = arith.constant dense<0.000000e+00> : vector<4x128xf32>
    %116 = tpu.matmul %113, %101, %cst_35 {dimension_numbers = #tpu.dot_dimension_numbers<[1], [0], [0], [1], [0, 0, 1, 1], [], []>} : vector<4x4xf32>, vector<4x128xf32>, vector<4x128xf32> -> vector<4x128xf32>
    %117 = arith.addf %115, %116 : vector<4x128xf32>
    %c0_36 = arith.constant 0 : index
    %c0_37 = arith.constant 0 : index
    %118 = vector.load %arg7[%c0_36, %c0_37] : memref<1x128xf32, #tpu.memory_space<vmem>>, vector<1x128xf32>
    %119 = vector.broadcast %118 : vector<1x128xf32> to vector<4x128xf32>
    %120 = arith.addf %117, %119 : vector<4x128xf32>
    %cst_38 = arith.constant 0.000000e+00 : f32
    %121 = vector.broadcast %cst_38 : f32 to vector<4x128xf32>
    %122 = arith.maximumf %120, %121 : vector<4x128xf32>
    %123 = vector.extract_strided_slice %122 {offsets = [0, 0], sizes = [4, 64], strides = [1, 1]} : vector<4x128xf32> to vector<4x64xf32>
    %124 = vector.extract_strided_slice %122 {offsets = [0, 64], sizes = [4, 64], strides = [1, 1]} : vector<4x128xf32> to vector<4x64xf32>
    %125 = arith.maximumf %123, %124 : vector<4x64xf32>
    %126 = tpu.iota {dimensions = array<i32: 0>} : vector<2x4xi32>
    %127 = tpu.iota {dimensions = array<i32: 1>} : vector<2x4xi32>
    %c2_i32_39 = arith.constant 2 : i32
    %128 = vector.broadcast %c2_i32_39 : i32 to vector<2x4xi32>
    %129 = arith.muli %128, %126 : vector<2x4xi32>
    %130 = arith.cmpi eq, %127, %129 : vector<2x4xi32>
    %131 = arith.extui %130 : vector<2x4xi1> to vector<2x4xi32>
    %132 = arith.sitofp %131 : vector<2x4xi32> to vector<2x4xf32>
    %c2_i32_40 = arith.constant 2 : i32
    %133 = vector.broadcast %c2_i32_40 : i32 to vector<2x4xi32>
    %134 = arith.muli %133, %126 : vector<2x4xi32>
    %c1_i32_41 = arith.constant 1 : i32
    %135 = vector.broadcast %c1_i32_41 : i32 to vector<2x4xi32>
    %136 = arith.addi %134, %135 : vector<2x4xi32>
    %137 = arith.cmpi eq, %127, %136 : vector<2x4xi32>
    %138 = arith.extui %137 : vector<2x4xi1> to vector<2x4xi32>
    %139 = arith.sitofp %138 : vector<2x4xi32> to vector<2x4xf32>
    %cst_42 = arith.constant dense<0.000000e+00> : vector<2x64xf32>
    %140 = tpu.matmul %132, %125, %cst_42 {dimension_numbers = #tpu.dot_dimension_numbers<[1], [0], [0], [1], [0, 0, 1, 1], [], []>} : vector<2x4xf32>, vector<4x64xf32>, vector<2x64xf32> -> vector<2x64xf32>
    %cst_43 = arith.constant dense<0.000000e+00> : vector<2x64xf32>
    %141 = tpu.matmul %139, %125, %cst_43 {dimension_numbers = #tpu.dot_dimension_numbers<[1], [0], [0], [1], [0, 0, 1, 1], [], []>} : vector<2x4xf32>, vector<4x64xf32>, vector<2x64xf32> -> vector<2x64xf32>
    %142 = arith.maximumf %140, %141 : vector<2x64xf32>
    %143 = arith.truncf %142 : vector<2x64xf32> to vector<2x64xbf16>
    %c0_44 = arith.constant 0 : index
    %c0_45 = arith.constant 0 : index
    %144 = vector.load %arg8[%c0_44, %c0_45] : memref<64x384xbf16, #tpu.memory_space<vmem>>, vector<64x384xbf16>
    %cst_46 = arith.constant dense<0.000000e+00> : vector<2x384xf32>
    %145 = tpu.matmul %143, %144, %cst_46 {dimension_numbers = #tpu.dot_dimension_numbers<[1], [0], [0], [1], [0, 0, 1, 1], [], []>} : vector<2x64xbf16>, vector<64x384xbf16>, vector<2x384xf32> -> vector<2x384xf32>
    %146 = vector.extract_strided_slice %145 {offsets = [0, 0], sizes = [2, 128], strides = [1, 1]} : vector<2x384xf32> to vector<2x128xf32>
    %147 = vector.extract_strided_slice %145 {offsets = [0, 128], sizes = [2, 128], strides = [1, 1]} : vector<2x384xf32> to vector<2x128xf32>
    %148 = vector.extract_strided_slice %145 {offsets = [0, 256], sizes = [2, 128], strides = [1, 1]} : vector<2x384xf32> to vector<2x128xf32>
    %149 = tpu.iota {dimensions = array<i32: 0>} : vector<2x2xi32>
    %150 = tpu.iota {dimensions = array<i32: 1>} : vector<2x2xi32>
    %c1_i32_47 = arith.constant 1 : i32
    %151 = vector.broadcast %c1_i32_47 : i32 to vector<2x2xi32>
    %152 = arith.addi %149, %151 : vector<2x2xi32>
    %153 = arith.cmpi eq, %150, %152 : vector<2x2xi32>
    %154 = arith.extui %153 : vector<2x2xi1> to vector<2x2xi32>
    %155 = arith.sitofp %154 : vector<2x2xi32> to vector<2x2xf32>
    %c1_i32_48 = arith.constant 1 : i32
    %156 = vector.broadcast %c1_i32_48 : i32 to vector<2x2xi32>
    %157 = arith.subi %149, %156 : vector<2x2xi32>
    %158 = arith.cmpi eq, %150, %157 : vector<2x2xi32>
    %159 = arith.extui %158 : vector<2x2xi1> to vector<2x2xi32>
    %160 = arith.sitofp %159 : vector<2x2xi32> to vector<2x2xf32>
    %cst_49 = arith.constant dense<0.000000e+00> : vector<2x128xf32>
    %161 = tpu.matmul %155, %147, %cst_49 {dimension_numbers = #tpu.dot_dimension_numbers<[1], [0], [0], [1], [0, 0, 1, 1], [], []>} : vector<2x2xf32>, vector<2x128xf32>, vector<2x128xf32> -> vector<2x128xf32>
    %162 = arith.addf %146, %161 : vector<2x128xf32>
    %cst_50 = arith.constant dense<0.000000e+00> : vector<2x128xf32>
    %163 = tpu.matmul %160, %148, %cst_50 {dimension_numbers = #tpu.dot_dimension_numbers<[1], [0], [0], [1], [0, 0, 1, 1], [], []>} : vector<2x2xf32>, vector<2x128xf32>, vector<2x128xf32> -> vector<2x128xf32>
    %164 = arith.addf %162, %163 : vector<2x128xf32>
    %c0_51 = arith.constant 0 : index
    %c0_52 = arith.constant 0 : index
    %165 = vector.load %arg9[%c0_51, %c0_52] : memref<1x128xf32, #tpu.memory_space<vmem>>, vector<1x128xf32>
    %166 = vector.broadcast %165 : vector<1x128xf32> to vector<2x128xf32>
    %167 = arith.addf %164, %166 : vector<2x128xf32>
    %cst_53 = arith.constant 0.000000e+00 : f32
    %168 = vector.broadcast %cst_53 : f32 to vector<2x128xf32>
    %169 = arith.maximumf %167, %168 : vector<2x128xf32>
    %170 = vector.extract_strided_slice %169 {offsets = [0, 0], sizes = [2, 64], strides = [1, 1]} : vector<2x128xf32> to vector<2x64xf32>
    %171 = vector.extract_strided_slice %169 {offsets = [0, 64], sizes = [2, 64], strides = [1, 1]} : vector<2x128xf32> to vector<2x64xf32>
    %172 = arith.maximumf %170, %171 : vector<2x64xf32>
    %173 = tpu.iota {dimensions = array<i32: 0>} : vector<1x2xi32>
    %174 = tpu.iota {dimensions = array<i32: 1>} : vector<1x2xi32>
    %c2_i32_54 = arith.constant 2 : i32
    %175 = vector.broadcast %c2_i32_54 : i32 to vector<1x2xi32>
    %176 = arith.muli %175, %173 : vector<1x2xi32>
    %177 = arith.cmpi eq, %174, %176 : vector<1x2xi32>
    %178 = arith.extui %177 : vector<1x2xi1> to vector<1x2xi32>
    %179 = arith.sitofp %178 : vector<1x2xi32> to vector<1x2xf32>
    %c2_i32_55 = arith.constant 2 : i32
    %180 = vector.broadcast %c2_i32_55 : i32 to vector<1x2xi32>
    %181 = arith.muli %180, %173 : vector<1x2xi32>
    %c1_i32_56 = arith.constant 1 : i32
    %182 = vector.broadcast %c1_i32_56 : i32 to vector<1x2xi32>
    %183 = arith.addi %181, %182 : vector<1x2xi32>
    %184 = arith.cmpi eq, %174, %183 : vector<1x2xi32>
    %185 = arith.extui %184 : vector<1x2xi1> to vector<1x2xi32>
    %186 = arith.sitofp %185 : vector<1x2xi32> to vector<1x2xf32>
    %cst_57 = arith.constant dense<0.000000e+00> : vector<1x64xf32>
    %187 = tpu.matmul %179, %172, %cst_57 {dimension_numbers = #tpu.dot_dimension_numbers<[1], [0], [0], [1], [0, 0, 1, 1], [], []>} : vector<1x2xf32>, vector<2x64xf32>, vector<1x64xf32> -> vector<1x64xf32>
    %cst_58 = arith.constant dense<0.000000e+00> : vector<1x64xf32>
    %188 = tpu.matmul %186, %172, %cst_58 {dimension_numbers = #tpu.dot_dimension_numbers<[1], [0], [0], [1], [0, 0, 1, 1], [], []>} : vector<1x2xf32>, vector<2x64xf32>, vector<1x64xf32> -> vector<1x64xf32>
    %189 = arith.maximumf %187, %188 : vector<1x64xf32>
    %190 = arith.truncf %189 : vector<1x64xf32> to vector<1x64xbf16>
    %c0_59 = arith.constant 0 : index
    %c0_60 = arith.constant 0 : index
    %191 = vector.load %arg10[%c0_59, %c0_60] : memref<64x32xbf16, #tpu.memory_space<vmem>>, vector<64x32xbf16>
    %cst_61 = arith.constant dense<0.000000e+00> : vector<1x32xf32>
    %192 = tpu.matmul %190, %191, %cst_61 {dimension_numbers = #tpu.dot_dimension_numbers<[1], [0], [0], [1], [0, 0, 1, 1], [], []>} : vector<1x64xbf16>, vector<64x32xbf16>, vector<1x32xf32> -> vector<1x32xf32>
    %c0_62 = arith.constant 0 : index
    %c0_63 = arith.constant 0 : index
    %193 = vector.load %arg11[%c0_62, %c0_63] : memref<1x32xf32, #tpu.memory_space<vmem>>, vector<1x32xf32>
    %194 = arith.addf %192, %193 : vector<1x32xf32>
    %cst_64 = arith.constant 0.000000e+00 : f32
    %195 = vector.broadcast %cst_64 : f32 to vector<1x32xf32>
    %196 = arith.maximumf %194, %195 : vector<1x32xf32>
    %197 = arith.truncf %196 : vector<1x32xf32> to vector<1x32xbf16>
    %c0_65 = arith.constant 0 : index
    %c0_66 = arith.constant 0 : index
    %198 = vector.load %arg12[%c0_65, %c0_66] : memref<32x4xbf16, #tpu.memory_space<vmem>>, vector<32x4xbf16>
    %cst_67 = arith.constant dense<0.000000e+00> : vector<1x4xf32>
    %199 = tpu.matmul %197, %198, %cst_67 {dimension_numbers = #tpu.dot_dimension_numbers<[1], [0], [0], [1], [0, 0, 1, 1], [], []>} : vector<1x32xbf16>, vector<32x4xbf16>, vector<1x4xf32> -> vector<1x4xf32>
    %c0_68 = arith.constant 0 : index
    %c0_69 = arith.constant 0 : index
    %200 = vector.load %arg13[%c0_68, %c0_69] : memref<1x4xf32, #tpu.memory_space<vmem>>, vector<1x4xf32>
    %201 = arith.addf %199, %200 : vector<1x4xf32>
    %c0_70 = arith.constant 0 : index
    %c0_71 = arith.constant 0 : index
    %c0_72 = arith.constant 0 : index
    %202 = vector.load %arg14[%c0_70, %c0_71, %c0_72] : memref<1x1x4xf32, #tpu.memory_space<vmem>>, vector<1x1x4xf32>
    %203 = vector.shape_cast %202 : vector<1x1x4xf32> to vector<1x4xf32>
    %204 = vector.shape_cast %201 : vector<1x4xf32> to vector<1x1x4xf32>
    tpu.vector_store %arg14[%c0_70, %c0_71, %c0_72], %204 {strides = array<i32>} : memref<1x1x4xf32, #tpu.memory_space<vmem>>, vector<1x1x4xf32>,
    return
  }
  func.func @transform_0(%arg0: i32) -> (i32, i32, i32) {
    %c0_i32 = arith.constant 0 : i32
    %c0_i32_0 = arith.constant 0 : i32
    %c0_i32_1 = arith.constant 0 : i32
    return %arg0, %c0_i32, %c0_i32_0 : i32, i32, i32
  }
  func.func @transform_1(%arg0: i32) -> (i32, i32) {
    %c0_i32 = arith.constant 0 : i32
    %c0_i32_0 = arith.constant 0 : i32
    %c0_i32_1 = arith.constant 0 : i32
    return %c0_i32, %c0_i32_0 : i32, i32
  }
  func.func @transform_2(%arg0: i32) -> (i32, i32) {
    %c0_i32 = arith.constant 0 : i32
    %c0_i32_0 = arith.constant 0 : i32
    %c0_i32_1 = arith.constant 0 : i32
    return %c0_i32, %c0_i32_0 : i32, i32
  }
  func.func @transform_3(%arg0: i32) -> (i32, i32) {
    %c0_i32 = arith.constant 0 : i32
    %c0_i32_0 = arith.constant 0 : i32
    %c0_i32_1 = arith.constant 0 : i32
    return %c0_i32, %c0_i32_0 : i32, i32
  }
  func.func @transform_4(%arg0: i32) -> (i32, i32) {
    %c0_i32 = arith.constant 0 : i32
    %c0_i32_0 = arith.constant 0 : i32
    %c0_i32_1 = arith.constant 0 : i32
    return %c0_i32, %c0_i32_0 : i32, i32
  }
  func.func @transform_5(%arg0: i32) -> (i32, i32) {
    %c0_i32 = arith.constant 0 : i32
    %c0_i32_0 = arith.constant 0 : i32
    %c0_i32_1 = arith.constant 0 : i32
    return %c0_i32, %c0_i32_0 : i32, i32
  }
  func.func @transform_6(%arg0: i32) -> (i32, i32) {
    %c0_i32 = arith.constant 0 : i32
    %c0_i32_0 = arith.constant 0 : i32
    %c0_i32_1 = arith.constant 0 : i32
    return %c0_i32, %c0_i32_0 : i32, i32
  }
  func.func @transform_7(%arg0: i32) -> (i32, i32) {
    %c0_i32 = arith.constant 0 : i32
    %c0_i32_0 = arith.constant 0 : i32
    %c0_i32_1 = arith.constant 0 : i32
    return %c0_i32, %c0_i32_0 : i32, i32
  }
  func.func @transform_8(%arg0: i32) -> (i32, i32) {
    %c0_i32 = arith.constant 0 : i32
    %c0_i32_0 = arith.constant 0 : i32
    %c0_i32_1 = arith.constant 0 : i32
    return %c0_i32, %c0_i32_0 : i32, i32
  }
  func.func @transform_9(%arg0: i32) -> (i32, i32) {
    %c0_i32 = arith.constant 0 : i32
    %c0_i32_0 = arith.constant 0 : i32
    %c0_i32_1 = arith.constant 0 : i32
    return %c0_i32, %c0_i32_0 : i32, i32
  }
  func.func @transform_10(%arg0: i32) -> (i32, i32) {
    %c0_i32 = arith.constant 0 : i32
    %c0_i32_0 = arith.constant 0 : i32
    %c0_i32_1 = arith.constant 0 : i32
    return %c0_i32, %c0_i32_0 : i32, i32
  }
  func.func @transform_11(%arg0: i32) -> (i32, i32) {
    %c0_i32 = arith.constant 0 : i32
    %c0_i32_0 = arith.constant 0 : i32
    %c0_i32_1 = arith.constant 0 : i32
    return %c0_i32, %c0_i32_0 : i32, i32
  }
  func.func @transform_12(%arg0: i32) -> (i32, i32) {
    %c0_i32 = arith.constant 0 : i32
    %c0_i32_0 = arith.constant 0 : i32
    %c0_i32_1 = arith.constant 0 : i32
    return %c0_i32, %c0_i32_0 : i32, i32
  }
  func.func @transform_13(%arg0: i32) -> (i32, i32, i32) {
    %c0_i32 = arith.constant 0 : i32
    %c0_i32_0 = arith.constant 0 : i32
    %c0_i32_1 = arith.constant 0 : i32
    return %arg0, %c0_i32, %c0_i32_0 : i32, i32, i32
  }
}

</mosaic_0001>

<llo_original>
// kernel: cnn_forward.1
$region0: #{cnn_forward.1}
  #allocation0 [shape = 'u32[]', space=smem, size = 0x4, offset = 0x4, fixed_abs, tag = 'smem constant byte address 0x4 - core index']
  #allocation1 [shape = 'u32[144,128]{1,0:T(1,128)}', space=vmem, size = 0x12000, scoped, tag = 'internal scratch']
  %s0 = inlined_call_operand.vmem [shape: f32[2,16,16], index: 0, kind: input, shape index: {}]
  %s1 = inlined_call_operand.hbm [shape: bf16[16,1536], index: 1, kind: input, shape index: {}]
  %s2 = inlined_call_operand.vmem [shape: f32[1,512], index: 2, kind: input, shape index: {}]
  %s3 = inlined_call_operand.hbm [shape: bf16[256,768], index: 3, kind: input, shape index: {}]
  %s4 = inlined_call_operand.vmem [shape: f32[1,256], index: 4, kind: input, shape index: {}]
  %s5 = inlined_call_operand.hbm [shape: bf16[128,384], index: 5, kind: input, shape index: {}]
  %s6 = inlined_call_operand.vmem [shape: f32[1,128], index: 6, kind: input, shape index: {}]
  %s7 = inlined_call_operand.hbm [shape: bf16[64,384], index: 7, kind: input, shape index: {}]
  %s8 = inlined_call_operand.vmem [shape: f32[1,128], index: 8, kind: input, shape index: {}]
  %s9 = inlined_call_operand.vmem [shape: bf16[64,32], index: 9, kind: input, shape index: {}]
  %s10 = inlined_call_operand.vmem [shape: f32[1,32], index: 10, kind: input, shape index: {}]
  %s11 = inlined_call_operand.vmem [shape: bf16[32,4], index: 11, kind: input, shape index: {}]
  %s12 = inlined_call_operand.vmem [shape: f32[1,4], index: 12, kind: input, shape index: {}]
  %s13 = inlined_call_operand.hbm [shape: f32[2,1,4], index: 13, kind: output, shape index: {}]
  %s14 = sld [smem:[#allocation0]]
  $region101: #{cnn_forward.1} parent=0
    _
  %s16 = ssub.s32 1, %s14
  %s17 = scalar_select 0, %s16, %s14
  $region1: #{cnn_forward.1} parent=0
    #allocation2 [shape = 'u8[49152]{0}', space=vmem, size = 0xc000, scoped, tag = 'input window, operand 1, single buffered']
    #allocation3 [shape = 's32[2]{0}', space=sflag, size = 0x8, scoped, tag = 'scoped memory for cnn_forward.1']
    #allocation4 [shape = 's32[2]{0}', space=sflag, size = 0x8, scoped, tag = 'scoped memory for cnn_forward.1']
    #allocation5 [shape = 'u8[393216]{0}', space=vmem, size = 0x60000, scoped, tag = 'input window, operand 3, single buffered']
    #allocation6 [shape = 's32[1]{0}', space=sflag, size = 0x4, scoped, tag = 'scoped memory for cnn_forward.1']
    #allocation7 [shape = 'u8[98304]{0}', space=vmem, size = 0x18000, scoped, tag = 'input window, operand 5, single buffered']
    #allocation8 [shape = 'u8[49152]{0}', space=vmem, size = 0xc000, scoped, tag = 'input window, operand 7, single buffered']
    #allocation9 [shape = 's32[1]{0}', space=sflag, size = 0x4, scoped, tag = 'scoped memory for cnn_forward.1']
    #allocation10 [shape = 'u8[1024]{0}', space=vmem, size = 0x400, scoped, tag = 'output window, operand 0']
    %18 = vsyncpa [#allocation3], 0
    %19 = vsyncpa [#allocation6], 0
    %20 = vsyncpa [#allocation9], 0
    %21 = vsyncpa [#allocation4], 0
    %s22 = scalar_lea.sflag [#allocation4], 1
    %23 = vsyncpa %s22, 0
    loop: start=0, step=1, limit=4
    $region2: #{cnn_forward.1} parent=1 // loop_pre_header
      _
    $region3: #{cnn_forward.1} parent=1 // loop_header
      %s25 = sphi 0, %s29
      %p26 = scmp.ge.s32.totalorder %s25, 4
      %s35 = sphi 0, %s37
      %s38 = sphi 0, %s35
      %s39 = sphi 0, %s38
      %s55 = sphi 0, %s39
      %s59 = sphi 0, %s59
      %s61 = sphi 0, %s59
      %s62 = sphi 0, %s61
      %s76 = sphi 0, %s62
      %s80 = sphi 0, %s80
      %s82 = sphi 0, %s80
      %s83 = sphi 0, %s82
      %s97 = sphi 0, %s83
      %s101 = sphi 0, %s101
      %s103 = sphi 0, %s101
      %s104 = sphi 0, %s103
      %s118 = sphi 0, %s104
      %s122 = sphi 0, %s122
      %s124 = sphi 0, %s122
      %s125 = sphi 0, %s124
      %s139 = sphi 0, %s125
      %s143 = sphi 0, %s143
      %s145 = sphi 0, %s143
      %s146 = sphi 0, %s145
      %s160 = sphi 0, %s146
      %s164 = sphi 0, %s164
      %s166 = sphi 0, %s164
      %s167 = sphi 0, %s166
      %s181 = sphi 0, %s167
      %s185 = sphi 0, %s185
      %s187 = sphi 0, %s185
      %s188 = sphi 0, %s187
      %s202 = sphi 0, %s188
      %s206 = sphi 0, %s206
      %s208 = sphi 0, %s206
      %s209 = sphi 0, %s208
      %s223 = sphi 0, %s209
      %s227 = sphi 0, %s227
      %s229 = sphi 0, %s227
      %s230 = sphi 0, %s229
      %s244 = sphi 0, %s230
      %s248 = sphi 0, %s248
      %s250 = sphi 0, %s248
      %s251 = sphi 0, %s250
      %s265 = sphi 0, %s251
      %s269 = sphi 0, %s269
      %s271 = sphi 0, %s269
      %s272 = sphi 0, %s271
      %s286 = sphi 0, %s272
      %s290 = sphi 0, %s290
      %s292 = sphi 0, %s290
      %s293 = sphi 0, %s292
      %s307 = sphi 0, %s293
      %s313 = sphi 0, %s315
      %s316 = sphi 0, %s313
      %s317 = sphi 0, %s316
      %s333 = sphi 0, %s317
    $region4: #{cnn_forward.1} parent=1 // loop_header_branch
      %28 = sbr.rel (%p26) target = $region8
    $region5: #{cnn_forward.1} parent=1 // loop_body
      %s30 = ssub.s32 %s25, 1
      %s31 = ssub.s32 %s25, 2
      %s32 = sadd.s32 %s25, 1
      %s33 = ssub.s32 %s25, %s32
      %p34 = scmp.eq.s32.totalorder %s33, 0
      %s36 = sadd.s32 %s35, 1
      %s37 = scalar_select %p34, %s35, %s36
      %p40 = pneg %p34
      %p41 = scmp.eq.s32.totalorder %s25, 1
      %p42 = por %p40, %p41
      %p43 = scmp.ne.s32.totalorder %s35, %s38
      %p44 = scmp.eq.s32.totalorder %s25, 0
      %p45 = por %p43, %p44
      %p46 = scmp.ne.s32.totalorder %s35, %s38
      %p47 = scmp.eq.s32.totalorder %s30, 1
      %p48 = por %p46, %p47
      %p49 = scmp.ne.s32.totalorder %s38, %s39
      %p50 = scmp.eq.s32.totalorder %s30, 0
      %p51 = por %p49, %p50
      %p52 = scmp.ne.s32.totalorder %s38, %s39
      %p53 = scmp.eq.s32.totalorder %s31, 1
      %p54 = por %p52, %p53
      %p56 = scmp.ne.s32.totalorder %s39, %s55
      %p57 = scmp.eq.s32.totalorder %s31, 0
      %p58 = por %p56, %p57
      %s60 = sadd.s32 %s59, 1
      %p63 = scmp.eq.s32.totalorder %s25, 1
      %p64 = scmp.ne.s32.totalorder %s59, %s61
      %p65 = scmp.eq.s32.totalorder %s25, 0
      %p66 = por %p64, %p65
      %p67 = scmp.ne.s32.totalorder %s59, %s61
      %p68 = scmp.eq.s32.totalorder %s30, 1
      %p69 = por %p67, %p68
      %p70 = scmp.ne.s32.totalorder %s61, %s62
      %p71 = scmp.eq.s32.totalorder %s30, 0
      %p72 = por %p70, %p71
      %p73 = scmp.ne.s32.totalorder %s61, %s62
      %p74 = scmp.eq.s32.totalorder %s31, 1
      %p75 = por %p73, %p74
      %p77 = scmp.ne.s32.totalorder %s62, %s76
      %p78 = scmp.eq.s32.totalorder %s31, 0
      %p79 = por %p77, %p78
      %s81 = sadd.s32 %s80, 1
      %p84 = scmp.eq.s32.totalorder %s25, 1
      %p85 = scmp.ne.s32.totalorder %s80, %s82
      %p86 = scmp.eq.s32.totalorder %s25, 0
      %p87 = por %p85, %p86
      %p88 = scmp.ne.s32.totalorder %s80, %s82
      %p89 = scmp.eq.s32.totalorder %s30, 1
      %p90 = por %p88, %p89
      %p91 = scmp.ne.s32.totalorder %s82, %s83
      %p92 = scmp.eq.s32.totalorder %s30, 0
      %p93 = por %p91, %p92
      %p94 = scmp.ne.s32.totalorder %s82, %s83
      %p95 = scmp.eq.s32.totalorder %s31, 1
      %p96 = por %p94, %p95
      %p98 = scmp.ne.s32.totalorder %s83, %s97
      %p99 = scmp.eq.s32.totalorder %s31, 0
      %p100 = por %p98, %p99
      %s102 = sadd.s32 %s101, 1
      %p105 = scmp.eq.s32.totalorder %s25, 1
      %p106 = scmp.ne.s32.totalorder %s101, %s103
      %p107 = scmp.eq.s32.totalorder %s25, 0
      %p108 = por %p106, %p107
      %p109 = scmp.ne.s32.totalorder %s101, %s103
      %p110 = scmp.eq.s32.totalorder %s30, 1
      %p111 = por %p109, %p110
      %p112 = scmp.ne.s32.totalorder %s103, %s104
      %p113 = scmp.eq.s32.totalorder %s30, 0
      %p114 = por %p112, %p113
      %p115 = scmp.ne.s32.totalorder %s103, %s104
      %p116 = scmp.eq.s32.totalorder %s31, 1
      %p117 = por %p115, %p116
      %p119 = scmp.ne.s32.totalorder %s104, %s118
      %p120 = scmp.eq.s32.totalorder %s31, 0
      %p121 = por %p119, %p120
      %s123 = sadd.s32 %s122, 1
      %p126 = scmp.eq.s32.totalorder %s25, 1
      %p127 = scmp.ne.s32.totalorder %s122, %s124
      %p128 = scmp.eq.s32.totalorder %s25, 0
      %p129 = por %p127, %p128
      %p130 = scmp.ne.s32.totalorder %s122, %s124
      %p131 = scmp.eq.s32.totalorder %s30, 1
      %p132 = por %p130, %p131
      %p133 = scmp.ne.s32.totalorder %s124, %s125
      %p134 = scmp.eq.s32.totalorder %s30, 0
      %p135 = por %p133, %p134
      %p136 = scmp.ne.s32.totalorder %s124, %s125
      %p137 = scmp.eq.s32.totalorder %s31, 1
      %p138 = por %p136, %p137
      %p140 = scmp.ne.s32.totalorder %s125, %s139
      %p141 = scmp.eq.s32.totalorder %s31, 0
      %p142 = por %p140, %p141
      %s144 = sadd.s32 %s143, 1
      %p147 = scmp.eq.s32.totalorder %s25, 1
      %p148 = scmp.ne.s32.totalorder %s143, %s145
      %p149 = scmp.eq.s32.totalorder %s25, 0
      %p150 = por %p148, %p149
      %p151 = scmp.ne.s32.totalorder %s143, %s145
      %p152 = scmp.eq.s32.totalorder %s30, 1
      %p153 = por %p151, %p152
      %p154 = scmp.ne.s32.totalorder %s145, %s146
      %p155 = scmp.eq.s32.totalorder %s30, 0
      %p156 = por %p154, %p155
      %p157 = scmp.ne.s32.totalorder %s145, %s146
      %p158 = scmp.eq.s32.totalorder %s31, 1
      %p159 = por %p157, %p158
      %p161 = scmp.ne.s32.totalorder %s146, %s160
      %p162 = scmp.eq.s32.totalorder %s31, 0
      %p163 = por %p161, %p162
      %s165 = sadd.s32 %s164, 1
      %p168 = scmp.eq.s32.totalorder %s25, 1
      %p169 = scmp.ne.s32.totalorder %s164, %s166
      %p170 = scmp.eq.s32.totalorder %s25, 0
      %p171 = por %p169, %p170
      %p172 = scmp.ne.s32.totalorder %s164, %s166
      %p173 = scmp.eq.s32.totalorder %s30, 1
      %p174 = por %p172, %p173
      %p175 = scmp.ne.s32.totalorder %s166, %s167
      %p176 = scmp.eq.s32.totalorder %s30, 0
      %p177 = por %p175, %p176
      %p178 = scmp.ne.s32.totalorder %s166, %s167
      %p179 = scmp.eq.s32.totalorder %s31, 1
      %p180 = por %p178, %p179
      %p182 = scmp.ne.s32.totalorder %s167, %s181
      %p183 = scmp.eq.s32.totalorder %s31, 0
      %p184 = por %p182, %p183
      %s186 = sadd.s32 %s185, 1
      %p189 = scmp.eq.s32.totalorder %s25, 1
      %p190 = scmp.ne.s32.totalorder %s185, %s187
      %p191 = scmp.eq.s32.totalorder %s25, 0
      %p192 = por %p190, %p191
      %p193 = scmp.ne.s32.totalorder %s185, %s187
      %p194 = scmp.eq.s32.totalorder %s30, 1
      %p195 = por %p193, %p194
      %p196 = scmp.ne.s32.totalorder %s187, %s188
      %p197 = scmp.eq.s32.totalorder %s30, 0
      %p198 = por %p196, %p197
      %p199 = scmp.ne.s32.totalorder %s187, %s188
      %p200 = scmp.eq.s32.totalorder %s31, 1
      %p201 = por %p199, %p200
      %p203 = scmp.ne.s32.totalorder %s188, %s202
      %p204 = scmp.eq.s32.totalorder %s31, 0
      %p205 = por %p203, %p204
      %s207 = sadd.s32 %s206, 1
      %p210 = scmp.eq.s32.totalorder %s25, 1
      %p211 = scmp.ne.s32.totalorder %s206, %s208
      %p212 = scmp.eq.s32.totalorder %s25, 0
      %p213 = por %p211, %p212
      %p214 = scmp.ne.s32.totalorder %s206, %s208
      %p215 = scmp.eq.s32.totalorder %s30, 1
      %p216 = por %p214, %p215
      %p217 = scmp.ne.s32.totalorder %s208, %s209
      %p218 = scmp.eq.s32.totalorder %s30, 0
      %p219 = por %p217, %p218
      %p220 = scmp.ne.s32.totalorder %s208, %s209
      %p221 = scmp.eq.s32.totalorder %s31, 1
      %p222 = por %p220, %p221
      %p224 = scmp.ne.s32.totalorder %s209, %s223
      %p225 = scmp.eq.s32.totalorder %s31, 0
      %p226 = por %p224, %p225
      %s228 = sadd.s32 %s227, 1
      %p231 = scmp.eq.s32.totalorder %s25, 1
      %p232 = scmp.ne.s32.totalorder %s227, %s229
      %p233 = scmp.eq.s32.totalorder %s25, 0
      %p234 = por %p232, %p233
      %p235 = scmp.ne.s32.totalorder %s227, %s229
      %p236 = scmp.eq.s32.totalorder %s30, 1
      %p237 = por %p235, %p236
      %p238 = scmp.ne.s32.totalorder %s229, %s230
      %p239 = scmp.eq.s32.totalorder %s30, 0
      %p240 = por %p238, %p239
      %p241 = scmp.ne.s32.totalorder %s229, %s230
      %p242 = scmp.eq.s32.totalorder %s31, 1
      %p243 = por %p241, %p242
      %p245 = scmp.ne.s32.totalorder %s230, %s244
      %p246 = scmp.eq.s32.totalorder %s31, 0
      %p247 = por %p245, %p246
      %s249 = sadd.s32 %s248, 1
      %p252 = scmp.eq.s32.totalorder %s25, 1
      %p253 = scmp.ne.s32.totalorder %s248, %s250
      %p254 = scmp.eq.s32.totalorder %s25, 0
      %p255 = por %p253, %p254
      %p256 = scmp.ne.s32.totalorder %s248, %s250
      %p257 = scmp.eq.s32.totalorder %s30, 1
      %p258 = por %p256, %p257
      %p259 = scmp.ne.s32.totalorder %s250, %s251
      %p260 = scmp.eq.s32.totalorder %s30, 0
      %p261 = por %p259, %p260
      %p262 = scmp.ne.s32.totalorder %s250, %s251
      %p263 = scmp.eq.s32.totalorder %s31, 1
      %p264 = por %p262, %p263
      %p266 = scmp.ne.s32.totalorder %s251, %s265
      %p267 = scmp.eq.s32.totalorder %s31, 0
      %p268 = por %p266, %p267
      %s270 = sadd.s32 %s269, 1
      %p273 = scmp.eq.s32.totalorder %s25, 1
      %p274 = scmp.ne.s32.totalorder %s269, %s271
      %p275 = scmp.eq.s32.totalorder %s25, 0
      %p276 = por %p274, %p275
      %p277 = scmp.ne.s32.totalorder %s269, %s271
      %p278 = scmp.eq.s32.totalorder %s30, 1
      %p279 = por %p277, %p278
      %p280 = scmp.ne.s32.totalorder %s271, %s272
      %p281 = scmp.eq.s32.totalorder %s30, 0
      %p282 = por %p280, %p281
      %p283 = scmp.ne.s32.totalorder %s271, %s272
      %p284 = scmp.eq.s32.totalorder %s31, 1
      %p285 = por %p283, %p284
      %p287 = scmp.ne.s32.totalorder %s272, %s286
      %p288 = scmp.eq.s32.totalorder %s31, 0
      %p289 = por %p287, %p288
      %s291 = sadd.s32 %s290, 1
      %p294 = scmp.eq.s32.totalorder %s25, 1
      %p295 = scmp.ne.s32.totalorder %s290, %s292
      %p296 = scmp.eq.s32.totalorder %s25, 0
      %p297 = por %p295, %p296
      %p298 = scmp.ne.s32.totalorder %s290, %s292
      %p299 = scmp.eq.s32.totalorder %s30, 1
      %p300 = por %p298, %p299
      %p301 = scmp.ne.s32.totalorder %s292, %s293
      %p302 = scmp.eq.s32.totalorder %s30, 0
      %p303 = por %p301, %p302
      %p304 = scmp.ne.s32.totalorder %s292, %s293
      %p305 = scmp.eq.s32.totalorder %s31, 1
      %p306 = por %p304, %p305
      %p308 = scmp.ne.s32.totalorder %s293, %s307
      %p309 = scmp.eq.s32.totalorder %s31, 0
      %p310 = por %p308, %p309
      %s311 = ssub.s32 %s25, %s32
      %p312 = scmp.eq.s32.totalorder %s311, 0
      %s314 = sadd.s32 %s313, 1
      %s315 = scalar_select %p312, %s313, %s314
      %p318 = pneg %p312
      %p319 = scmp.eq.s32.totalorder %s25, 1
      %p320 = por %p318, %p319
      %p321 = scmp.ne.s32.totalorder %s313, %s316
      %p322 = scmp.eq.s32.totalorder %s25, 0
      %p323 = por %p321, %p322
      %p324 = scmp.ne.s32.totalorder %s313, %s316
      %p325 = scmp.eq.s32.totalorder %s30, 1
      %p326 = por %p324, %p325
      %p327 = scmp.ne.s32.totalorder %s316, %s317
      %p328 = scmp.eq.s32.totalorder %s30, 0
      %p329 = por %p327, %p328
      %p330 = scmp.ne.s32.totalorder %s316, %s317
      %p331 = scmp.eq.s32.totalorder %s31, 1
      %p332 = por %p330, %p331
      %p334 = scmp.ne.s32.totalorder %s317, %s333
      %p335 = scmp.eq.s32.totalorder %s31, 0
      %p336 = por %p334, %p335
      %p337 = scmp.le.s32.totalorder 1, %s25
      %p338 = scmp.lt.s32.totalorder %s25, 3
      %p339 = pnand %p337, %p338
      %p340 = pneg %p339
      // Predicated region
      $region9: #{cnn_forward.1} parent=5 // pred_check
        _
      $region10: #{cnn_forward.1} parent=5 // pred_check_branch
        %342 = sbr.rel (%p339) target = $region12
      $region11: #{cnn_forward.1} parent=5 // pred_region
        %s343 = ssub.s32 %s25, 1
        // Predicated region
        $region13: #{cnn_forward.1} parent=11 // pred_check
          %p344 = pneg %p72
        $region14: #{cnn_forward.1} parent=11 // pred_check_branch
          %346 = sbr.rel (%p344) target = $region16
        $region15: #{cnn_forward.1} parent=11 // pred_region
          %s348 = ssub.s32 1536, 1536
          %349 = vsyncadd [#allocation3], %s348
          %s350 = sshll.u32 [#allocation2], 4
          %s351 = int_to_ptr.vmem [resolvable:$true] %s350
          %356 = dma.hbm_to_vmem [thread:$0]  %s1, 1536, %s351, [#allocation3], 768, 768, 48
        $region16: #{cnn_forward.1} parent=11 // pred_fallthru
          _
        // Predicated region
        $region17: #{cnn_forward.1} parent=11 // pred_check
          %p357 = pneg %p93
        $region18: #{cnn_forward.1} parent=11 // pred_check_branch
          %359 = sbr.rel (%p357) target = $region20
        $region19: #{cnn_forward.1} parent=11 // pred_region
          _
        $region20: #{cnn_forward.1} parent=11 // pred_fallthru
          _
        // Predicated region
        $region21: #{cnn_forward.1} parent=11 // pred_check
          %p360 = pneg %p114
        $region22: #{cnn_forward.1} parent=11 // pred_check_branch
          %362 = sbr.rel (%p360) target = $region24
        $region23: #{cnn_forward.1} parent=11 // pred_region
          %s364 = ssub.s32 12288, 12288
          %365 = vsyncadd [#allocation6], %s364
          %s366 = sshll.u32 [#allocation5], 4
          %s367 = int_to_ptr.vmem [resolvable:$true] %s366
          %372 = dma.hbm_to_vmem [thread:$0]  %s3, 12288, %s367, [#allocation6], 384, 384, 24
        $region24: #{cnn_forward.1} parent=11 // pred_fallthru
          _
        // Predicated region
        $region25: #{cnn_forward.1} parent=11 // pred_check
          %p373 = pneg %p135
        $region26: #{cnn_forward.1} parent=11 // pred_check_branch
          %375 = sbr.rel (%p373) target = $region28
        $region27: #{cnn_forward.1} parent=11 // pred_region
          _
        $region28: #{cnn_forward.1} parent=11 // pred_fallthru
          _
        // Predicated region
        $region29: #{cnn_forward.1} parent=11 // pred_check
          %p376 = pneg %p156
        $region30: #{cnn_forward.1} parent=11 // pred_check_branch
          %378 = sbr.rel (%p376) target = $region32
        $region31: #{cnn_forward.1} parent=11 // pred_region
          %s380 = ssub.s32 3072, 3072
          %381 = vsyncadd [#allocation6], %s380
          %s382 = sshll.u32 [#allocation7], 4
          %s383 = int_to_ptr.vmem [resolvable:$true] %s382
          %388 = dma.hbm_to_vmem [thread:$0]  %s5, 3072, %s383, [#allocation6], 192, 192, 12
        $region32: #{cnn_forward.1} parent=11 // pred_fallthru
          _
        // Predicated region
        $region33: #{cnn_forward.1} parent=11 // pred_check
          %p389 = pneg %p177
        $region34: #{cnn_forward.1} parent=11 // pred_check_branch
          %391 = sbr.rel (%p389) target = $region36
        $region35: #{cnn_forward.1} parent=11 // pred_region
          _
        $region36: #{cnn_forward.1} parent=11 // pred_fallthru
          _
        // Predicated region
        $region37: #{cnn_forward.1} parent=11 // pred_check
          %p392 = pneg %p198
        $region38: #{cnn_forward.1} parent=11 // pred_check_branch
          %394 = sbr.rel (%p392) target = $region40
        $region39: #{cnn_forward.1} parent=11 // pred_region
          %s396 = ssub.s32 1536, 1536
          %397 = vsyncadd [#allocation9], %s396
          %s398 = sshll.u32 [#allocation8], 4
          %s399 = int_to_ptr.vmem [resolvable:$true] %s398
          %404 = dma.hbm_to_vmem [thread:$0]  %s7, 1536, %s399, [#allocation9], 192, 192, 12
        $region40: #{cnn_forward.1} parent=11 // pred_fallthru
          _
        // Predicated region
        $region41: #{cnn_forward.1} parent=11 // pred_check
          %p405 = pneg %p219
        $region42: #{cnn_forward.1} parent=11 // pred_check_branch
          %407 = sbr.rel (%p405) target = $region44
        $region43: #{cnn_forward.1} parent=11 // pred_region
          _
        $region44: #{cnn_forward.1} parent=11 // pred_fallthru
          _
        // Predicated region
        $region45: #{cnn_forward.1} parent=11 // pred_check
          %p408 = pneg %p240
        $region46: #{cnn_forward.1} parent=11 // pred_check_branch
          %410 = sbr.rel (%p408) target = $region48
        $region47: #{cnn_forward.1} parent=11 // pred_region
          _
        $region48: #{cnn_forward.1} parent=11 // pred_fallthru
          _
        // Predicated region
        $region49: #{cnn_forward.1} parent=11 // pred_check
          %p411 = pneg %p261
        $region50: #{cnn_forward.1} parent=11 // pred_check_branch
          %413 = sbr.rel (%p411) target = $region52
        $region51: #{cnn_forward.1} parent=11 // pred_region
          _
        $region52: #{cnn_forward.1} parent=11 // pred_fallthru
          _
        // Predicated region
        $region53: #{cnn_forward.1} parent=11 // pred_check
          %p414 = pneg %p282
        $region54: #{cnn_forward.1} parent=11 // pred_check_branch
          %416 = sbr.rel (%p414) target = $region56
        $region55: #{cnn_forward.1} parent=11 // pred_region
          _
        $region56: #{cnn_forward.1} parent=11 // pred_fallthru
          _
        // Predicated region
        $region57: #{cnn_forward.1} parent=11 // pred_check
          %p417 = pneg %p303
        $region58: #{cnn_forward.1} parent=11 // pred_check_branch
          %419 = sbr.rel (%p417) target = $region60
        $region59: #{cnn_forward.1} parent=11 // pred_region
          _
        $region60: #{cnn_forward.1} parent=11 // pred_fallthru
          _
      $region12: #{cnn_forward.1} parent=5 // pred_fallthru
        _
      %p420 = scmp.lt.s32.totalorder %s25, 2
      // Predicated region
      $region61: #{cnn_forward.1} parent=5 // pred_check
        %p421 = pneg %p420
      $region62: #{cnn_forward.1} parent=5 // pred_check_branch
        %423 = sbr.rel (%p421) target = $region64
      $region63: #{cnn_forward.1} parent=5 // pred_region
        // Predicated region
        $region65: #{cnn_forward.1} parent=63 // pred_check
          %p424 = pneg %p45
        $region66: #{cnn_forward.1} parent=63 // pred_check_branch
          %426 = sbr.rel (%p424) target = $region68
        $region67: #{cnn_forward.1} parent=63 // pred_region
          %p427 = scmp.lt.s32.totalorder %s25, 1
          %s428 = scalar_select %p427, %s25, 1
          %s429 = smul.addr %s428, 2
          %s430 = smul.addr %s429, 8
          %s431 = scalar_lea.vmem %s0, %s430
        $region68: #{cnn_forward.1} parent=63 // pred_fallthru
          _
      $region64: #{cnn_forward.1} parent=5 // pred_fallthru
        _
      %p432 = scmp.le.s32.totalorder 1, %s25
      %p433 = scmp.lt.s32.totalorder %s25, 3
      %p434 = pnand %p432, %p433
      %p435 = pneg %p434
      // Predicated region
      $region69: #{cnn_forward.1} parent=5 // pred_check
        _
      $region70: #{cnn_forward.1} parent=5 // pred_check_branch
        %437 = sbr.rel (%p434) target = $region72
      $region71: #{cnn_forward.1} parent=5 // pred_region
        %s438 = ssub.s32 %s25, 1
        // Predicated region
        $region73: #{cnn_forward.1} parent=71 // pred_check
          %p439 = pneg %p72
        $region74: #{cnn_forward.1} parent=71 // pred_check_branch
          %441 = sbr.rel (%p439) target = $region76
        $region75: #{cnn_forward.1} parent=71 // pred_region
          %442 = dma.done [#allocation3], 1536
        $region76: #{cnn_forward.1} parent=71 // pred_fallthru
          _
        // Predicated region
        $region77: #{cnn_forward.1} parent=71 // pred_check
          %p443 = pneg %p114
        $region78: #{cnn_forward.1} parent=71 // pred_check_branch
          %445 = sbr.rel (%p443) target = $region80
        $region79: #{cnn_forward.1} parent=71 // pred_region
          %446 = dma.done [#allocation6], 12288
        $region80: #{cnn_forward.1} parent=71 // pred_fallthru
          _
        // Predicated region
        $region81: #{cnn_forward.1} parent=71 // pred_check
          %p447 = pneg %p156
        $region82: #{cnn_forward.1} parent=71 // pred_check_branch
          %449 = sbr.rel (%p447) target = $region84
        $region83: #{cnn_forward.1} parent=71 // pred_region
          %450 = dma.done [#allocation6], 3072
        $region84: #{cnn_forward.1} parent=71 // pred_fallthru
          _
        // Predicated region
        $region85: #{cnn_forward.1} parent=71 // pred_check
          %p451 = pneg %p198
        $region86: #{cnn_forward.1} parent=71 // pred_check_branch
          %453 = sbr.rel (%p451) target = $region88
        $region87: #{cnn_forward.1} parent=71 // pred_region
          %454 = dma.done [#allocation9], 1536
        $region88: #{cnn_forward.1} parent=71 // pred_fallthru
          _
        %p455 = scmp.lt.s32.totalorder %s30, 1
        %s456 = scalar_select %p455, %s30, 1
        %s457 = smul.addr %s456, 2
        %s458 = smul.addr %s457, 8
        %s459 = scalar_lea.vmem %s0, %s458
        %p460 = pneg %p51
        %p461 = pneg %p48
        %p462 = pneg %p72
        %p463 = pneg %p69
        %p464 = pneg %p93
        %p465 = pneg %p90
        %p466 = pneg %p114
        %p467 = pneg %p111
        %p468 = pneg %p135
        %p469 = pneg %p132
        %p470 = pneg %p156
        %p471 = pneg %p153
        %p472 = pneg %p177
        %p473 = pneg %p174
        %p474 = pneg %p198
        %p475 = pneg %p195
        %p476 = pneg %p219
        %p477 = pneg %p216
        %p478 = pneg %p240
        %p479 = pneg %p237
        %p480 = pneg %p261
        %p481 = pneg %p258
        %p482 = pneg %p282
        %p483 = pneg %p279
        %p484 = pneg %p303
        %p485 = pneg %p300
        %p486 = pneg %p329
        %p487 = pneg %p326
        %s488 = sand.u32 %s316, 1
        %s489 = scalar_lea.sflag [#allocation4], %s488
        %s490 = sand.u32 %s316, 1
        %s491 = scalar_lea.vmem [#allocation10], %s490
        %p492 = scmp.lt.s32.totalorder %s30, 1
        %s493 = scalar_select %p492, %s30, 1
        %s494 = smul.addr %s493, 2
        %s495 = smul.addr %s494, 8
        %s496 = scalar_lea.vmem %s0, %s495
        %v498 = vld [vmem:[%s496] sm:$0xff]
        %v499 = vld [vmem:[%s496 + $0x8] sm:$0xff]
        %v500 = vpack.c.bf16 %v499, %v498
        %v501 = vld [vmem:[#allocation2] sm:$0xff]
        %v502 = vld [vmem:[#allocation2 + $0x8] sm:$0xff]
        %v503 = vld [vmem:[#allocation2 + $0x10] sm:$0xff]
        %v504 = vld [vmem:[#allocation2 + $0x18] sm:$0xff]
        %v505 = vld [vmem:[#allocation2 + $0x20] sm:$0xff]
        %v506 = vld [vmem:[#allocation2 + $0x28] sm:$0xff]
        %v507 = vld [vmem:[#allocation2 + $0x30] sm:$0xff]
        %v508 = vld [vmem:[#allocation2 + $0x38] sm:$0xff]
        %v509 = vld [vmem:[#allocation2 + $0x40] sm:$0xff]
        %v510 = vld [vmem:[#allocation2 + $0x48] sm:$0xff]
        %v511 = vld [vmem:[#allocation2 + $0x50] sm:$0xff]
        %v512 = vld [vmem:[#allocation2 + $0x58] sm:$0xff]
        %v525 = vunpack.c.l.b16 %v501
        %v526 = vunpack.c.h.b16 %v501
        %v527 = vunpack.c.l.b16 %v502
        %v528 = vunpack.c.h.b16 %v502
        %v529 = vunpack.c.l.b16 %v503
        %v530 = vunpack.c.h.b16 %v503
        %v531 = vunpack.c.l.b16 %v504
        %v532 = vunpack.c.h.b16 %v504
        %v533 = vunpack.c.l.b16 %v505
        %v534 = vunpack.c.h.b16 %v505
        %v535 = vunpack.c.l.b16 %v506
        %v536 = vunpack.c.h.b16 %v506
        %v537 = vunpack.c.l.b16 %v507
        %v538 = vunpack.c.h.b16 %v507
        %v539 = vunpack.c.l.b16 %v508
        %v540 = vunpack.c.h.b16 %v508
        %v541 = vunpack.c.l.b16 %v509
        %v542 = vunpack.c.h.b16 %v509
        %v543 = vunpack.c.l.b16 %v510
        %v544 = vunpack.c.h.b16 %v510
        %v545 = vunpack.c.l.b16 %v511
        %v546 = vunpack.c.h.b16 %v511
        %v547 = vunpack.c.l.b16 %v512
        %v548 = vunpack.c.h.b16 %v512
        %v549 = vpack.c.b16 %v537, %v525
        %v550 = vpack.c.b16 %v538, %v526
        %v551 = vpack.c.b16 %v539, %v527
        %v552 = vpack.c.b16 %v540, %v528
        %v553 = vpack.c.b16 %v541, %v529
        %v554 = vpack.c.b16 %v542, %v530
        %v555 = vpack.c.b16 %v543, %v531
        %v556 = vpack.c.b16 %v544, %v532
        %v557 = vpack.c.b16 %v545, %v533
        %v558 = vpack.c.b16 %v546, %v534
        %v559 = vpack.c.b16 %v547, %v535
        %v560 = vpack.c.b16 %v548, %v536
        %vm573 = vcmask 130048
        %v575 = vsel %vm573, %v500, 0
        %577 = vmatprep.subr.bf16.mxu0 0
        %578 = vmatpush1.bf16.msra.mxu0 0
        %579 = vmatprep.subr.bf16.mxu0 0
        %580 = vmatpush1.bf16.msra.mxu0 0
        %581 = vmatprep.subr.bf16.mxu0 0
        %582 = vmatpush1.bf16.msra.mxu0 0
        %583 = vmatprep.subr.bf16.mxu0 0
        %584 = vmatpush1.bf16.msra.mxu0 0
        %585 = vmatprep.subr.bf16.mxu0 0
        %586 = vmatpush1.bf16.msra.mxu0 0
        %587 = vmatprep.subr.bf16.mxu0 0
        %588 = vmatpush1.bf16.msra.mxu0 0
        %589 = vmatprep.subr.bf16.mxu0 0
        %590 = vmatpush1.bf16.msra.mxu0 0
        %591 = vmatprep.subr.bf16.mxu0 %v550
        %592 = vmatpush1.bf16.msra.mxu0 %v549
        %593 = vmatprep.subr.bf16.mxu0 0
        %594 = vmatpush2.bf16.msra.mxu0 0
        %595 = vmatprep.subr.bf16.mxu0 0
        %596 = vmatpush2.bf16.msra.mxu0 0
        %597 = vmatprep.subr.bf16.mxu0 0
        %598 = vmatpush2.bf16.msra.mxu0 0
        %599 = vmatprep.subr.bf16.mxu0 0
        %600 = vmatpush2.bf16.msra.mxu0 0
        %601 = vmatprep.subr.bf16.mxu0 0
        %602 = vmatpush2.bf16.msra.mxu0 0
        %603 = vmatprep.subr.bf16.mxu0 0
        %604 = vmatpush2.bf16.msra.mxu0 0
        %605 = vmatprep.subr.bf16.mxu0 0
        %606 = vmatpush2.bf16.msra.mxu0 0
        %607 = vmatprep.subr.bf16.mxu0 0
        %608 = vmatpush2.bf16.msra.mxu0 0
        %609 = vmatprep.mubr.bf16.mxu0 0
        %610 = vmatmul.mubr.bf16.gmra.mxu0 %v575
        %v611 = vpop.f32.mrf.mxu0
        %v612 = vadd.f32 0.0, %v611
        %v613 = vpop.f32.mrf.mxu0
        %v614 = vadd.f32 0.0, %v613
        %v615 = vpop.f32.mrf.mxu0
        %v616 = vadd.f32 0.0, %v615
        %v617 = vpop.f32.mrf.mxu0
        %v618 = vadd.f32 0.0, %v617
        %619 = vdwg.mxu0
        %620 = vmatprep.subr.bf16.mxu0 0
        %621 = vmatpush1.bf16.msra.mxu0 0
        %622 = vmatprep.subr.bf16.mxu0 0
        %623 = vmatpush1.bf16.msra.mxu0 0
        %624 = vmatprep.subr.bf16.mxu0 0
        %625 = vmatpush1.bf16.msra.mxu0 0
        %626 = vmatprep.subr.bf16.mxu0 0
        %627 = vmatpush1.bf16.msra.mxu0 0
        %628 = vmatprep.subr.bf16.mxu0 0
        %629 = vmatpush1.bf16.msra.mxu0 0
        %630 = vmatprep.subr.bf16.mxu0 0
        %631 = vmatpush1.bf16.msra.mxu0 0
        %632 = vmatprep.subr.bf16.mxu0 0
        %633 = vmatpush1.bf16.msra.mxu0 0
        %634 = vmatprep.subr.bf16.mxu0 %v552
        %635 = vmatpush1.bf16.msra.mxu0 %v551
        %636 = vmatprep.subr.bf16.mxu0 0
        %637 = vmatpush2.bf16.msra.mxu0 0
        %638 = vmatprep.subr.bf16.mxu0 0
        %639 = vmatpush2.bf16.msra.mxu0 0
        %640 = vmatprep.subr.bf16.mxu0 0
        %641 = vmatpush2.bf16.msra.mxu0 0
        %642 = vmatprep.subr.bf16.mxu0 0
        %643 = vmatpush2.bf16.msra.mxu0 0
        %644 = vmatprep.subr.bf16.mxu0 0
        %645 = vmatpush2.bf16.msra.mxu0 0
        %646 = vmatprep.subr.bf16.mxu0 0
        %647 = vmatpush2.bf16.msra.mxu0 0
        %648 = vmatprep.subr.bf16.mxu0 0
        %649 = vmatpush2.bf16.msra.mxu0 0
        %650 = vmatprep.subr.bf16.mxu0 0
        %651 = vmatpush2.bf16.msra.mxu0 0
        %652 = vmatprep.mubr.bf16.mxu0 0
        %653 = vmatmul.mubr.bf16.gmra.mxu0 %v575
        %v654 = vpop.f32.mrf.mxu0
        %v655 = vadd.f32 0.0, %v654
        %v656 = vpop.f32.mrf.mxu0
        %v657 = vadd.f32 0.0, %v656
        %v658 = vpop.f32.mrf.mxu0
        %v659 = vadd.f32 0.0, %v658
        %v660 = vpop.f32.mrf.mxu0
        %v661 = vadd.f32 0.0, %v660
        %662 = vdwg.mxu0
        %663 = vmatprep.subr.bf16.mxu0 0
        %664 = vmatpush1.bf16.msra.mxu0 0
        %665 = vmatprep.subr.bf16.mxu0 0
        %666 = vmatpush1.bf16.msra.mxu0 0
        %667 = vmatprep.subr.bf16.mxu0 0
        %668 = vmatpush1.bf16.msra.mxu0 0
        %669 = vmatprep.subr.bf16.mxu0 0
        %670 = vmatpush1.bf16.msra.mxu0 0
        %671 = vmatprep.subr.bf16.mxu0 0
        %672 = vmatpush1.bf16.msra.mxu0 0
        %673 = vmatprep.subr.bf16.mxu0 0
        %674 = vmatpush1.bf16.msra.mxu0 0
        %675 = vmatprep.subr.bf16.mxu0 0
        %676 = vmatpush1.bf16.msra.mxu0 0
        %677 = vmatprep.subr.bf16.mxu0 %v554
        %678 = vmatpush1.bf16.msra.mxu0 %v553
        %679 = vmatprep.subr.bf16.mxu0 0
        %680 = vmatpush2.bf16.msra.mxu0 0
        %681 = vmatprep.subr.bf16.mxu0 0
        %682 = vmatpush2.bf16.msra.mxu0 0
        %683 = vmatprep.subr.bf16.mxu0 0
        %684 = vmatpush2.bf16.msra.mxu0 0
        %685 = vmatprep.subr.bf16.mxu0 0
        %686 = vmatpush2.bf16.msra.mxu0 0
        %687 = vmatprep.subr.bf16.mxu0 0
        %688 = vmatpush2.bf16.msra.mxu0 0
        %689 = vmatprep.subr.bf16.mxu0 0
        %690 = vmatpush2.bf16.msra.mxu0 0
        %691 = vmatprep.subr.bf16.mxu0 0
        %692 = vmatpush2.bf16.msra.mxu0 0
        %693 = vmatprep.subr.bf16.mxu0 0
        %694 = vmatpush2.bf16.msra.mxu0 0
        %695 = vmatprep.mubr.bf16.mxu0 0
        %696 = vmatmul.mubr.bf16.gmra.mxu0 %v575
        %v697 = vpop.f32.mrf.mxu0
        %v698 = vadd.f32 0.0, %v697
        %v699 = vpop.f32.mrf.mxu0
        %v700 = vadd.f32 0.0, %v699
        %v701 = vpop.f32.mrf.mxu0
        %v702 = vadd.f32 0.0, %v701
        %v703 = vpop.f32.mrf.mxu0
        %v704 = vadd.f32 0.0, %v703
        %705 = vdwg.mxu0
        %706 = vmatprep.subr.bf16.mxu0 0
        %707 = vmatpush1.bf16.msra.mxu0 0
        %708 = vmatprep.subr.bf16.mxu0 0
        %709 = vmatpush1.bf16.msra.mxu0 0
        %710 = vmatprep.subr.bf16.mxu0 0
        %711 = vmatpush1.bf16.msra.mxu0 0
        %712 = vmatprep.subr.bf16.mxu0 0
        %713 = vmatpush1.bf16.msra.mxu0 0
        %714 = vmatprep.subr.bf16.mxu0 0
        %715 = vmatpush1.bf16.msra.mxu0 0
        %716 = vmatprep.subr.bf16.mxu0 0
        %717 = vmatpush1.bf16.msra.mxu0 0
        %718 = vmatprep.subr.bf16.mxu0 0
        %719 = vmatpush1.bf16.msra.mxu0 0
        %720 = vmatprep.subr.bf16.mxu0 %v556
        %721 = vmatpush1.bf16.msra.mxu0 %v555
        %722 = vmatprep.subr.bf16.mxu0 0
        %723 = vmatpush2.bf16.msra.mxu0 0
        %724 = vmatprep.subr.bf16.mxu0 0
        %725 = vmatpush2.bf16.msra.mxu0 0
        %726 = vmatprep.subr.bf16.mxu0 0
        %727 = vmatpush2.bf16.msra.mxu0 0
        %728 = vmatprep.subr.bf16.mxu0 0
        %729 = vmatpush2.bf16.msra.mxu0 0
        %730 = vmatprep.subr.bf16.mxu0 0
        %731 = vmatpush2.bf16.msra.mxu0 0
        %732 = vmatprep.subr.bf16.mxu0 0
        %733 = vmatpush2.bf16.msra.mxu0 0
        %734 = vmatprep.subr.bf16.mxu0 0
        %735 = vmatpush2.bf16.msra.mxu0 0
        %736 = vmatprep.subr.bf16.mxu0 0
        %737 = vmatpush2.bf16.msra.mxu0 0
        %738 = vmatprep.mubr.bf16.mxu0 0
        %739 = vmatmul.mubr.bf16.gmra.mxu0 %v575
        %v740 = vpop.f32.mrf.mxu0
        %v741 = vadd.f32 0.0, %v740
        %v742 = vpop.f32.mrf.mxu0
        %v743 = vadd.f32 0.0, %v742
        %v744 = vpop.f32.mrf.mxu0
        %v745 = vadd.f32 0.0, %v744
        %v746 = vpop.f32.mrf.mxu0
        %v747 = vadd.f32 0.0, %v746
        %748 = vdwg.mxu0
        %749 = vmatprep.subr.bf16.mxu0 0
        %750 = vmatpush1.bf16.msra.mxu0 0
        %751 = vmatprep.subr.bf16.mxu0 0
        %752 = vmatpush1.bf16.msra.mxu0 0
        %753 = vmatprep.subr.bf16.mxu0 0
        %754 = vmatpush1.bf16.msra.mxu0 0
        %755 = vmatprep.subr.bf16.mxu0 0
        %756 = vmatpush1.bf16.msra.mxu0 0
        %757 = vmatprep.subr.bf16.mxu0 0
        %758 = vmatpush1.bf16.msra.mxu0 0
        %759 = vmatprep.subr.bf16.mxu0 0
        %760 = vmatpush1.bf16.msra.mxu0 0
        %761 = vmatprep.subr.bf16.mxu0 0
        %762 = vmatpush1.bf16.msra.mxu0 0
        %763 = vmatprep.subr.bf16.mxu0 %v558
        %764 = vmatpush1.bf16.msra.mxu0 %v557
        %765 = vmatprep.subr.bf16.mxu0 0
        %766 = vmatpush2.bf16.msra.mxu0 0
        %767 = vmatprep.subr.bf16.mxu0 0
        %768 = vmatpush2.bf16.msra.mxu0 0
        %769 = vmatprep.subr.bf16.mxu0 0
        %770 = vmatpush2.bf16.msra.mxu0 0
        %771 = vmatprep.subr.bf16.mxu0 0
        %772 = vmatpush2.bf16.msra.mxu0 0
        %773 = vmatprep.subr.bf16.mxu0 0
        %774 = vmatpush2.bf16.msra.mxu0 0
        %775 = vmatprep.subr.bf16.mxu0 0
        %776 = vmatpush2.bf16.msra.mxu0 0
        %777 = vmatprep.subr.bf16.mxu0 0
        %778 = vmatpush2.bf16.msra.mxu0 0
        %779 = vmatprep.subr.bf16.mxu0 0
        %780 = vmatpush2.bf16.msra.mxu0 0
        %781 = vmatprep.mubr.bf16.mxu0 0
        %782 = vmatmul.mubr.bf16.gmra.mxu0 %v575
        %v783 = vpop.f32.mrf.mxu0
        %v784 = vadd.f32 0.0, %v783
        %v785 = vpop.f32.mrf.mxu0
        %v786 = vadd.f32 0.0, %v785
        %v787 = vpop.f32.mrf.mxu0
        %v788 = vadd.f32 0.0, %v787
        %v789 = vpop.f32.mrf.mxu0
        %v790 = vadd.f32 0.0, %v789
        %791 = vdwg.mxu0
        %792 = vmatprep.subr.bf16.mxu0 0
        %793 = vmatpush1.bf16.msra.mxu0 0
        %794 = vmatprep.subr.bf16.mxu0 0
        %795 = vmatpush1.bf16.msra.mxu0 0
        %796 = vmatprep.subr.bf16.mxu0 0
        %797 = vmatpush1.bf16.msra.mxu0 0
        %798 = vmatprep.subr.bf16.mxu0 0
        %799 = vmatpush1.bf16.msra.mxu0 0
        %800 = vmatprep.subr.bf16.mxu0 0
        %801 = vmatpush1.bf16.msra.mxu0 0
        %802 = vmatprep.subr.bf16.mxu0 0
        %803 = vmatpush1.bf16.msra.mxu0 0
        %804 = vmatprep.subr.bf16.mxu0 0
        %805 = vmatpush1.bf16.msra.mxu0 0
        %806 = vmatprep.subr.bf16.mxu0 %v560
        %807 = vmatpush1.bf16.msra.mxu0 %v559
        %808 = vmatprep.subr.bf16.mxu0 0
        %809 = vmatpush2.bf16.msra.mxu0 0
        %810 = vmatprep.subr.bf16.mxu0 0
        %811 = vmatpush2.bf16.msra.mxu0 0
        %812 = vmatprep.subr.bf16.mxu0 0
        %813 = vmatpush2.bf16.msra.mxu0 0
        %814 = vmatprep.subr.bf16.mxu0 0
        %815 = vmatpush2.bf16.msra.mxu0 0
        %816 = vmatprep.subr.bf16.mxu0 0
        %817 = vmatpush2.bf16.msra.mxu0 0
        %818 = vmatprep.subr.bf16.mxu0 0
        %819 = vmatpush2.bf16.msra.mxu0 0
        %820 = vmatprep.subr.bf16.mxu0 0
        %821 = vmatpush2.bf16.msra.mxu0 0
        %822 = vmatprep.subr.bf16.mxu0 0
        %823 = vmatpush2.bf16.msra.mxu0 0
        %824 = vmatprep.mubr.bf16.mxu0 0
        %825 = vmatmul.mubr.bf16.gmra.mxu0 %v575
        %v826 = vpop.f32.mrf.mxu0
        %v827 = vadd.f32 0.0, %v826
        %v828 = vpop.f32.mrf.mxu0
        %v829 = vadd.f32 0.0, %v828
        %v830 = vpop.f32.mrf.mxu0
        %v831 = vadd.f32 0.0, %v830
        %v832 = vpop.f32.mrf.mxu0
        %v833 = vadd.f32 0.0, %v832
        %834 = vdwg.mxu0
        %v835 = vlaneseq
        %v836 = vshrl.u32 %v835, 7
        %v837 = vadd.s32 %v836, 8
        %v838 = vlaneseq
        %v839 = vand.u32 %v838, 127
        %v840 = vadd.s32 %v836, 1
        %v841 = vadd.s32 %v837, 1
        %vm842 = vcmp.eq.s32.totalorder %v839, %v840
        %vm843 = vcmp.eq.s32.totalorder %v839, %v841
        %v844 = vsel %vm842, 1, 0
        %v845 = vsel %vm843, 1, 0
        %v846 = vcvt.s32.f32 %v844
        %v847 = vcvt.s32.f32 %v845
        %v848 = vsub.s32 %v836, 1
        %v849 = vsub.s32 %v837, 1
        %vm850 = vcmp.eq.s32.totalorder %v839, %v848
        %vm851 = vcmp.eq.s32.totalorder %v839, %v849
        %v852 = vsel %vm850, 1, 0
        %v853 = vsel %vm851, 1, 0
        %v854 = vcvt.s32.f32 %v852
        %v855 = vcvt.s32.f32 %v853
        %v857 = vsel %vm573, %v846, 0
        %v860 = vsel %vm573, %v847, 0
        %862 = vmatprep.subr.mxu0 0.0
        %863 = vmatpush1.msra.mxu0 0.0
        %864 = vmatprep.subr.mxu0 0.0
        %865 = vmatpush1.msra.mxu0 0.0
        %866 = vmatprep.subr.mxu0 0.0
        %867 = vmatpush1.msra.mxu0 0.0
        %868 = vmatprep.subr.mxu0 0.0
        %869 = vmatpush1.msra.mxu0 0.0
        %870 = vmatprep.subr.mxu0 0.0
        %871 = vmatpush1.msra.mxu0 0.0
        %872 = vmatprep.subr.mxu0 0.0
        %873 = vmatpush1.msra.mxu0 0.0
        %874 = vmatprep.subr.mxu0 0.0
        %875 = vmatpush1.msra.mxu0 0.0
        %876 = vmatprep.subr.mxu0 0.0
        %877 = vmatpush1.msra.mxu0 0.0
        %878 = vmatprep.subr.mxu0 0.0
        %879 = vmatpush1.msra.mxu0 0.0
        %880 = vmatprep.subr.mxu0 0.0
        %881 = vmatpush1.msra.mxu0 0.0
        %882 = vmatprep.subr.mxu0 0.0
        %883 = vmatpush1.msra.mxu0 0.0
        %884 = vmatprep.subr.mxu0 0.0
        %885 = vmatpush1.msra.mxu0 0.0
        %886 = vmatprep.subr.mxu0 0.0
        %887 = vmatpush1.msra.mxu0 0.0
        %888 = vmatprep.subr.mxu0 0.0
        %889 = vmatpush1.msra.mxu0 0.0
        %890 = vmatprep.subr.mxu0 %v704
        %891 = vmatpush1.msra.mxu0 %v702
        %892 = vmatprep.subr.mxu0 %v700
        %893 = vmatpush1.msra.mxu0 %v698
        %894 = vmatprep.subr.mxu0 0.0
        %895 = vmatpush2.msra.mxu0 0.0
        %896 = vmatprep.subr.mxu0 0.0
        %897 = vmatpush2.msra.mxu0 0.0
        %898 = vmatprep.subr.mxu0 0.0
        %899 = vmatpush2.msra.mxu0 0.0
        %900 = vmatprep.subr.mxu0 0.0
        %901 = vmatpush2.msra.mxu0 0.0
        %902 = vmatprep.subr.mxu0 0.0
        %903 = vmatpush2.msra.mxu0 0.0
        %904 = vmatprep.subr.mxu0 0.0
        %905 = vmatpush2.msra.mxu0 0.0
        %906 = vmatprep.subr.mxu0 0.0
        %907 = vmatpush2.msra.mxu0 0.0
        %908 = vmatprep.subr.mxu0 0.0
        %909 = vmatpush2.msra.mxu0 0.0
        %910 = vmatprep.subr.mxu0 0.0
        %911 = vmatpush2.msra.mxu0 0.0
        %912 = vmatprep.subr.mxu0 0.0
        %913 = vmatpush2.msra.mxu0 0.0
        %914 = vmatprep.subr.mxu0 0.0
        %915 = vmatpush2.msra.mxu0 0.0
        %916 = vmatprep.subr.mxu0 0.0
        %917 = vmatpush2.msra.mxu0 0.0
        %918 = vmatprep.subr.mxu0 0.0
        %919 = vmatpush2.msra.mxu0 0.0
        %920 = vmatprep.subr.mxu0 0.0
        %921 = vmatpush2.msra.mxu0 0.0
        %922 = vmatprep.subr.mxu0 0.0
        %923 = vmatpush2.msra.mxu0 0.0
        %924 = vmatprep.subr.mxu0 0.0
        %925 = vmatpush2.msra.mxu0 0.0
        %926 = vmatprep.mubr.f32.mxu0 0.0
        %927 = vmatmul.mubr.f32.gmra.mxu0 %v857
        %v928 = vpop.f32.mrf.mxu0
        %v929 = vadd.f32 0.0, %v928
        %v930 = vpop.f32.mrf.mxu0
        %v931 = vadd.f32 0.0, %v930
        %932 = vmatprep.mubr.f32.mxu0 0.0
        %933 = vmatmul.mubr.f32.gmra.mxu0 %v860
        %v934 = vpop.f32.mrf.mxu0
        %v935 = vadd.f32 0.0, %v934
        %v936 = vpop.f32.mrf.mxu0
        %v937 = vadd.f32 0.0, %v936
        %938 = vdwg.mxu0
        %939 = vmatprep.subr.mxu0 0.0
        %940 = vmatpush1.msra.mxu0 0.0
        %941 = vmatprep.subr.mxu0 0.0
        %942 = vmatpush1.msra.mxu0 0.0
        %943 = vmatprep.subr.mxu0 0.0
        %944 = vmatpush1.msra.mxu0 0.0
        %945 = vmatprep.subr.mxu0 0.0
        %946 = vmatpush1.msra.mxu0 0.0
        %947 = vmatprep.subr.mxu0 0.0
        %948 = vmatpush1.msra.mxu0 0.0
        %949 = vmatprep.subr.mxu0 0.0
        %950 = vmatpush1.msra.mxu0 0.0
        %951 = vmatprep.subr.mxu0 0.0
        %952 = vmatpush1.msra.mxu0 0.0
        %953 = vmatprep.subr.mxu0 0.0
        %954 = vmatpush1.msra.mxu0 0.0
        %955 = vmatprep.subr.mxu0 0.0
        %956 = vmatpush1.msra.mxu0 0.0
        %957 = vmatprep.subr.mxu0 0.0
        %958 = vmatpush1.msra.mxu0 0.0
        %959 = vmatprep.subr.mxu0 0.0
        %960 = vmatpush1.msra.mxu0 0.0
        %961 = vmatprep.subr.mxu0 0.0
        %962 = vmatpush1.msra.mxu0 0.0
        %963 = vmatprep.subr.mxu0 0.0
        %964 = vmatpush1.msra.mxu0 0.0
        %965 = vmatprep.subr.mxu0 0.0
        %966 = vmatpush1.msra.mxu0 0.0
        %967 = vmatprep.subr.mxu0 %v747
        %968 = vmatpush1.msra.mxu0 %v745
        %969 = vmatprep.subr.mxu0 %v743
        %970 = vmatpush1.msra.mxu0 %v741
        %971 = vmatprep.subr.mxu0 0.0
        %972 = vmatpush2.msra.mxu0 0.0
        %973 = vmatprep.subr.mxu0 0.0
        %974 = vmatpush2.msra.mxu0 0.0
        %975 = vmatprep.subr.mxu0 0.0
        %976 = vmatpush2.msra.mxu0 0.0
        %977 = vmatprep.subr.mxu0 0.0
        %978 = vmatpush2.msra.mxu0 0.0
        %979 = vmatprep.subr.mxu0 0.0
        %980 = vmatpush2.msra.mxu0 0.0
        %981 = vmatprep.subr.mxu0 0.0
        %982 = vmatpush2.msra.mxu0 0.0
        %983 = vmatprep.subr.mxu0 0.0
        %984 = vmatpush2.msra.mxu0 0.0
        %985 = vmatprep.subr.mxu0 0.0
        %986 = vmatpush2.msra.mxu0 0.0
        %987 = vmatprep.subr.mxu0 0.0
        %988 = vmatpush2.msra.mxu0 0.0
        %989 = vmatprep.subr.mxu0 0.0
        %990 = vmatpush2.msra.mxu0 0.0
        %991 = vmatprep.subr.mxu0 0.0
        %992 = vmatpush2.msra.mxu0 0.0
        %993 = vmatprep.subr.mxu0 0.0
        %994 = vmatpush2.msra.mxu0 0.0
        %995 = vmatprep.subr.mxu0 0.0
        %996 = vmatpush2.msra.mxu0 0.0
        %997 = vmatprep.subr.mxu0 0.0
        %998 = vmatpush2.msra.mxu0 0.0
        %999 = vmatprep.subr.mxu0 0.0
        %1000 = vmatpush2.msra.mxu0 0.0
        %1001 = vmatprep.subr.mxu0 0.0
        %1002 = vmatpush2.msra.mxu0 0.0
        %1003 = vmatprep.mubr.f32.mxu0 0.0
        %1004 = vmatmul.mubr.f32.gmra.mxu0 %v857
        %v1005 = vpop.f32.mrf.mxu0
        %v1006 = vadd.f32 0.0, %v1005
        %v1007 = vpop.f32.mrf.mxu0
        %v1008 = vadd.f32 0.0, %v1007
        %1009 = vmatprep.mubr.f32.mxu0 0.0
        %1010 = vmatmul.mubr.f32.gmra.mxu0 %v860
        %v1011 = vpop.f32.mrf.mxu0
        %v1012 = vadd.f32 0.0, %v1011
        %v1013 = vpop.f32.mrf.mxu0
        %v1014 = vadd.f32 0.0, %v1013
        %1015 = vdwg.mxu0
        %v1016 = vadd.f32 %v612, %v929
        %v1017 = vadd.f32 %v614, %v931
        %v1018 = vadd.f32 %v655, %v1006
        %v1019 = vadd.f32 %v657, %v1008
        %v1020 = vadd.f32 %v616, %v935
        %v1021 = vadd.f32 %v618, %v937
        %v1022 = vadd.f32 %v659, %v1012
        %v1023 = vadd.f32 %v661, %v1014
        %v1025 = vsel %vm573, %v854, 0
        %v1028 = vsel %vm573, %v855, 0
        %1030 = vmatprep.subr.mxu0 0.0
        %1031 = vmatpush1.msra.mxu0 0.0
        %1032 = vmatprep.subr.mxu0 0.0
        %1033 = vmatpush1.msra.mxu0 0.0
        %1034 = vmatprep.subr.mxu0 0.0
        %1035 = vmatpush1.msra.mxu0 0.0
        %1036 = vmatprep.subr.mxu0 0.0
        %1037 = vmatpush1.msra.mxu0 0.0
        %1038 = vmatprep.subr.mxu0 0.0
        %1039 = vmatpush1.msra.mxu0 0.0
        %1040 = vmatprep.subr.mxu0 0.0
        %1041 = vmatpush1.msra.mxu0 0.0
        %1042 = vmatprep.subr.mxu0 0.0
        %1043 = vmatpush1.msra.mxu0 0.0
        %1044 = vmatprep.subr.mxu0 0.0
        %1045 = vmatpush1.msra.mxu0 0.0
        %1046 = vmatprep.subr.mxu0 0.0
        %1047 = vmatpush1.msra.mxu0 0.0
        %1048 = vmatprep.subr.mxu0 0.0
        %1049 = vmatpush1.msra.mxu0 0.0
        %1050 = vmatprep.subr.mxu0 0.0
        %1051 = vmatpush1.msra.mxu0 0.0
        %1052 = vmatprep.subr.mxu0 0.0
        %1053 = vmatpush1.msra.mxu0 0.0
        %1054 = vmatprep.subr.mxu0 0.0
        %1055 = vmatpush1.msra.mxu0 0.0
        %1056 = vmatprep.subr.mxu0 0.0
        %1057 = vmatpush1.msra.mxu0 0.0
        %1058 = vmatprep.subr.mxu0 %v790
        %1059 = vmatpush1.msra.mxu0 %v788
        %1060 = vmatprep.subr.mxu0 %v786
        %1061 = vmatpush1.msra.mxu0 %v784
        %1062 = vmatprep.subr.mxu0 0.0
        %1063 = vmatpush2.msra.mxu0 0.0
        %1064 = vmatprep.subr.mxu0 0.0
        %1065 = vmatpush2.msra.mxu0 0.0
        %1066 = vmatprep.subr.mxu0 0.0
        %1067 = vmatpush2.msra.mxu0 0.0
        %1068 = vmatprep.subr.mxu0 0.0
        %1069 = vmatpush2.msra.mxu0 0.0
        %1070 = vmatprep.subr.mxu0 0.0
        %1071 = vmatpush2.msra.mxu0 0.0
        %1072 = vmatprep.subr.mxu0 0.0
        %1073 = vmatpush2.msra.mxu0 0.0
        %1074 = vmatprep.subr.mxu0 0.0
        %1075 = vmatpush2.msra.mxu0 0.0
        %1076 = vmatprep.subr.mxu0 0.0
        %1077 = vmatpush2.msra.mxu0 0.0
        %1078 = vmatprep.subr.mxu0 0.0
        %1079 = vmatpush2.msra.mxu0 0.0
        %1080 = vmatprep.subr.mxu0 0.0
        %1081 = vmatpush2.msra.mxu0 0.0
        %1082 = vmatprep.subr.mxu0 0.0
        %1083 = vmatpush2.msra.mxu0 0.0
        %1084 = vmatprep.subr.mxu0 0.0
        %1085 = vmatpush2.msra.mxu0 0.0
        %1086 = vmatprep.subr.mxu0 0.0
        %1087 = vmatpush2.msra.mxu0 0.0
        %1088 = vmatprep.subr.mxu0 0.0
        %1089 = vmatpush2.msra.mxu0 0.0
        %1090 = vmatprep.subr.mxu0 0.0
        %1091 = vmatpush2.msra.mxu0 0.0
        %1092 = vmatprep.subr.mxu0 0.0
        %1093 = vmatpush2.msra.mxu0 0.0
        %1094 = vmatprep.mubr.f32.mxu0 0.0
        %1095 = vmatmul.mubr.f32.gmra.mxu0 %v1025
        %v1096 = vpop.f32.mrf.mxu0
        %v1097 = vadd.f32 0.0, %v1096
        %v1098 = vpop.f32.mrf.mxu0
        %v1099 = vadd.f32 0.0, %v1098
        %1100 = vmatprep.mubr.f32.mxu0 0.0
        %1101 = vmatmul.mubr.f32.gmra.mxu0 %v1028
        %v1102 = vpop.f32.mrf.mxu0
        %v1103 = vadd.f32 0.0, %v1102
        %v1104 = vpop.f32.mrf.mxu0
        %v1105 = vadd.f32 0.0, %v1104
        %1106 = vdwg.mxu0
        %1107 = vmatprep.subr.mxu0 0.0
        %1108 = vmatpush1.msra.mxu0 0.0
        %1109 = vmatprep.subr.mxu0 0.0
        %1110 = vmatpush1.msra.mxu0 0.0
        %1111 = vmatprep.subr.mxu0 0.0
        %1112 = vmatpush1.msra.mxu0 0.0
        %1113 = vmatprep.subr.mxu0 0.0
        %1114 = vmatpush1.msra.mxu0 0.0
        %1115 = vmatprep.subr.mxu0 0.0
        %1116 = vmatpush1.msra.mxu0 0.0
        %1117 = vmatprep.subr.mxu0 0.0
        %1118 = vmatpush1.msra.mxu0 0.0
        %1119 = vmatprep.subr.mxu0 0.0
        %1120 = vmatpush1.msra.mxu0 0.0
        %1121 = vmatprep.subr.mxu0 0.0
        %1122 = vmatpush1.msra.mxu0 0.0
        %1123 = vmatprep.subr.mxu0 0.0
        %1124 = vmatpush1.msra.mxu0 0.0
        %1125 = vmatprep.subr.mxu0 0.0
        %1126 = vmatpush1.msra.mxu0 0.0
        %1127 = vmatprep.subr.mxu0 0.0
        %1128 = vmatpush1.msra.mxu0 0.0
        %1129 = vmatprep.subr.mxu0 0.0
        %1130 = vmatpush1.msra.mxu0 0.0
        %1131 = vmatprep.subr.mxu0 0.0
        %1132 = vmatpush1.msra.mxu0 0.0
        %1133 = vmatprep.subr.mxu0 0.0
        %1134 = vmatpush1.msra.mxu0 0.0
        %1135 = vmatprep.subr.mxu0 %v833
        %1136 = vmatpush1.msra.mxu0 %v831
        %1137 = vmatprep.subr.mxu0 %v829
        %1138 = vmatpush1.msra.mxu0 %v827
        %1139 = vmatprep.subr.mxu0 0.0
        %1140 = vmatpush2.msra.mxu0 0.0
        %1141 = vmatprep.subr.mxu0 0.0
        %1142 = vmatpush2.msra.mxu0 0.0
        %1143 = vmatprep.subr.mxu0 0.0
        %1144 = vmatpush2.msra.mxu0 0.0
        %1145 = vmatprep.subr.mxu0 0.0
        %1146 = vmatpush2.msra.mxu0 0.0
        %1147 = vmatprep.subr.mxu0 0.0
        %1148 = vmatpush2.msra.mxu0 0.0
        %1149 = vmatprep.subr.mxu0 0.0
        %1150 = vmatpush2.msra.mxu0 0.0
        %1151 = vmatprep.subr.mxu0 0.0
        %1152 = vmatpush2.msra.mxu0 0.0
        %1153 = vmatprep.subr.mxu0 0.0
        %1154 = vmatpush2.msra.mxu0 0.0
        %1155 = vmatprep.subr.mxu0 0.0
        %1156 = vmatpush2.msra.mxu0 0.0
        %1157 = vmatprep.subr.mxu0 0.0
        %1158 = vmatpush2.msra.mxu0 0.0
        %1159 = vmatprep.subr.mxu0 0.0
        %1160 = vmatpush2.msra.mxu0 0.0
        %1161 = vmatprep.subr.mxu0 0.0
        %1162 = vmatpush2.msra.mxu0 0.0
        %1163 = vmatprep.subr.mxu0 0.0
        %1164 = vmatpush2.msra.mxu0 0.0
        %1165 = vmatprep.subr.mxu0 0.0
        %1166 = vmatpush2.msra.mxu0 0.0
        %1167 = vmatprep.subr.mxu0 0.0
        %1168 = vmatpush2.msra.mxu0 0.0
        %1169 = vmatprep.subr.mxu0 0.0
        %1170 = vmatpush2.msra.mxu0 0.0
        %1171 = vmatprep.mubr.f32.mxu0 0.0
        %1172 = vmatmul.mubr.f32.gmra.mxu0 %v1025
        %v1173 = vpop.f32.mrf.mxu0
        %v1174 = vadd.f32 0.0, %v1173
        %v1175 = vpop.f32.mrf.mxu0
        %v1176 = vadd.f32 0.0, %v1175
        %1177 = vmatprep.mubr.f32.mxu0 0.0
        %1178 = vmatmul.mubr.f32.gmra.mxu0 %v1028
        %v1179 = vpop.f32.mrf.mxu0
        %v1180 = vadd.f32 0.0, %v1179
        %v1181 = vpop.f32.mrf.mxu0
        %v1182 = vadd.f32 0.0, %v1181
        %1183 = vdwg.mxu0
        %v1184 = vadd.f32 %v1016, %v1097
        %v1185 = vadd.f32 %v1017, %v1099
        %v1186 = vadd.f32 %v1018, %v1174
        %v1187 = vadd.f32 %v1019, %v1176
        %v1188 = vadd.f32 %v1020, %v1103
        %v1189 = vadd.f32 %v1021, %v1105
        %v1190 = vadd.f32 %v1022, %v1180
        %v1191 = vadd.f32 %v1023, %v1182
        %v1192 = vld [vmem:[%s2] sm:$0xf]
        %v1194 = vlaneseq
        %v1195 = vshrl.u32 %v1194, 7
        %v1196 = vsub.s32 0, %v1195
        %v1197 = vrot.slane %v1192, %v1196
        %v1198 = vlaneseq
        %v1199 = vshrl.u32 %v1198, 7
        %v1200 = vsub.s32 1, %v1199
        %v1201 = vrot.slane %v1192, %v1200
        %v1202 = vlaneseq
        %v1203 = vshrl.u32 %v1202, 7
        %v1204 = vsub.s32 2, %v1203
        %v1205 = vrot.slane %v1192, %v1204
        %v1206 = vlaneseq
        %v1207 = vshrl.u32 %v1206, 7
        %v1208 = vsub.s32 3, %v1207
        %v1209 = vrot.slane %v1192, %v1208
        %v1214 = vadd.f32 %v1184, %v1197
        %v1215 = vadd.f32 %v1185, %v1201
        %v1216 = vadd.f32 %v1186, %v1205
        %v1217 = vadd.f32 %v1187, %v1209
        %v1218 = vadd.f32 %v1188, %v1197
        %v1219 = vadd.f32 %v1189, %v1201
        %v1220 = vadd.f32 %v1190, %v1205
        %v1221 = vadd.f32 %v1191, %v1209
        %v1222 = vmax.f32 %v1214, 0.0
        %v1223 = vmax.f32 %v1215, 0.0
        %v1224 = vmax.f32 %v1216, 0.0
        %v1225 = vmax.f32 %v1217, 0.0
        %v1226 = vmax.f32 %v1218, 0.0
        %v1227 = vmax.f32 %v1219, 0.0
        %v1228 = vmax.f32 %v1220, 0.0
        %v1229 = vmax.f32 %v1221, 0.0
        %v1230 = vmax.f32 %v1222, %v1224
        %v1231 = vmax.f32 %v1223, %v1225
        %v1232 = vmax.f32 %v1226, %v1228
        %v1233 = vmax.f32 %v1227, %v1229
        %v1234 = vmul.u32 %v836, 2
        %vm1235 = vcmp.eq.s32.totalorder %v839, %v1234
        %v1236 = vsel %vm1235, 1, 0
        %v1237 = vcvt.s32.f32 %v1236
        %v1238 = vadd.s32 %v1234, 1
        %vm1239 = vcmp.eq.s32.totalorder %v839, %v1238
        %v1240 = vsel %vm1239, 1, 0
        %v1241 = vcvt.s32.f32 %v1240
        %v1243 = vsel %vm573, %v1237, 0
        %1245 = vmatprep.subr.mxu0 0.0
        %1246 = vmatpush1.msra.mxu0 0.0
        %1247 = vmatprep.subr.mxu0 0.0
        %1248 = vmatpush1.msra.mxu0 0.0
        %1249 = vmatprep.subr.mxu0 0.0
        %1250 = vmatpush1.msra.mxu0 0.0
        %1251 = vmatprep.subr.mxu0 0.0
        %1252 = vmatpush1.msra.mxu0 0.0
        %1253 = vmatprep.subr.mxu0 0.0
        %1254 = vmatpush1.msra.mxu0 0.0
        %1255 = vmatprep.subr.mxu0 0.0
        %1256 = vmatpush1.msra.mxu0 0.0
        %1257 = vmatprep.subr.mxu0 0.0
        %1258 = vmatpush1.msra.mxu0 0.0
        %1259 = vmatprep.subr.mxu0 0.0
        %1260 = vmatpush1.msra.mxu0 0.0
        %1261 = vmatprep.subr.mxu0 0.0
        %1262 = vmatpush1.msra.mxu0 0.0
        %1263 = vmatprep.subr.mxu0 0.0
        %1264 = vmatpush1.msra.mxu0 0.0
        %1265 = vmatprep.subr.mxu0 0.0
        %1266 = vmatpush1.msra.mxu0 0.0
        %1267 = vmatprep.subr.mxu0 0.0
        %1268 = vmatpush1.msra.mxu0 0.0
        %1269 = vmatprep.subr.mxu0 0.0
        %1270 = vmatpush1.msra.mxu0 0.0
        %1271 = vmatprep.subr.mxu0 0.0
        %1272 = vmatpush1.msra.mxu0 0.0
        %1273 = vmatprep.subr.mxu0 %v1233
        %1274 = vmatpush1.msra.mxu0 %v1232
        %1275 = vmatprep.subr.mxu0 %v1231
        %1276 = vmatpush1.msra.mxu0 %v1230
        %1277 = vmatprep.subr.mxu0 0.0
        %1278 = vmatpush2.msra.mxu0 0.0
        %1279 = vmatprep.subr.mxu0 0.0
        %1280 = vmatpush2.msra.mxu0 0.0
        %1281 = vmatprep.subr.mxu0 0.0
        %1282 = vmatpush2.msra.mxu0 0.0
        %1283 = vmatprep.subr.mxu0 0.0
        %1284 = vmatpush2.msra.mxu0 0.0
        %1285 = vmatprep.subr.mxu0 0.0
        %1286 = vmatpush2.msra.mxu0 0.0
        %1287 = vmatprep.subr.mxu0 0.0
        %1288 = vmatpush2.msra.mxu0 0.0
        %1289 = vmatprep.subr.mxu0 0.0
        %1290 = vmatpush2.msra.mxu0 0.0
        %1291 = vmatprep.subr.mxu0 0.0
        %1292 = vmatpush2.msra.mxu0 0.0
        %1293 = vmatprep.subr.mxu0 0.0
        %1294 = vmatpush2.msra.mxu0 0.0
        %1295 = vmatprep.subr.mxu0 0.0
        %1296 = vmatpush2.msra.mxu0 0.0
        %1297 = vmatprep.subr.mxu0 0.0
        %1298 = vmatpush2.msra.mxu0 0.0
        %1299 = vmatprep.subr.mxu0 0.0
        %1300 = vmatpush2.msra.mxu0 0.0
        %1301 = vmatprep.subr.mxu0 0.0
        %1302 = vmatpush2.msra.mxu0 0.0
        %1303 = vmatprep.subr.mxu0 0.0
        %1304 = vmatpush2.msra.mxu0 0.0
        %1305 = vmatprep.subr.mxu0 0.0
        %1306 = vmatpush2.msra.mxu0 0.0
        %1307 = vmatprep.subr.mxu0 0.0
        %1308 = vmatpush2.msra.mxu0 0.0
        %1309 = vmatprep.mubr.f32.mxu0 0.0
        %1310 = vmatmul.mubr.f32.gmra.mxu0 %v1243
        %v1311 = vpop.f32.mrf.mxu0
        %v1312 = vadd.f32 0.0, %v1311
        %v1313 = vpop.f32.mrf.mxu0
        %v1314 = vadd.f32 0.0, %v1313
        %1315 = vdwg.mxu0
        %v1317 = vsel %vm573, %v1241, 0
        %1319 = vmatprep.subr.mxu0 0.0
        %1320 = vmatpush1.msra.mxu0 0.0
        %1321 = vmatprep.subr.mxu0 0.0
        %1322 = vmatpush1.msra.mxu0 0.0
        %1323 = vmatprep.subr.mxu0 0.0
        %1324 = vmatpush1.msra.mxu0 0.0
        %1325 = vmatprep.subr.mxu0 0.0
        %1326 = vmatpush1.msra.mxu0 0.0
        %1327 = vmatprep.subr.mxu0 0.0
        %1328 = vmatpush1.msra.mxu0 0.0
        %1329 = vmatprep.subr.mxu0 0.0
        %1330 = vmatpush1.msra.mxu0 0.0
        %1331 = vmatprep.subr.mxu0 0.0
        %1332 = vmatpush1.msra.mxu0 0.0
        %1333 = vmatprep.subr.mxu0 0.0
        %1334 = vmatpush1.msra.mxu0 0.0
        %1335 = vmatprep.subr.mxu0 0.0
        %1336 = vmatpush1.msra.mxu0 0.0
        %1337 = vmatprep.subr.mxu0 0.0
        %1338 = vmatpush1.msra.mxu0 0.0
        %1339 = vmatprep.subr.mxu0 0.0
        %1340 = vmatpush1.msra.mxu0 0.0
        %1341 = vmatprep.subr.mxu0 0.0
        %1342 = vmatpush1.msra.mxu0 0.0
        %1343 = vmatprep.subr.mxu0 0.0
        %1344 = vmatpush1.msra.mxu0 0.0
        %1345 = vmatprep.subr.mxu0 0.0
        %1346 = vmatpush1.msra.mxu0 0.0
        %1347 = vmatprep.subr.mxu0 %v1233
        %1348 = vmatpush1.msra.mxu0 %v1232
        %1349 = vmatprep.subr.mxu0 %v1231
        %1350 = vmatpush1.msra.mxu0 %v1230
        %1351 = vmatprep.subr.mxu0 0.0
        %1352 = vmatpush2.msra.mxu0 0.0
        %1353 = vmatprep.subr.mxu0 0.0
        %1354 = vmatpush2.msra.mxu0 0.0
        %1355 = vmatprep.subr.mxu0 0.0
        %1356 = vmatpush2.msra.mxu0 0.0
        %1357 = vmatprep.subr.mxu0 0.0
        %1358 = vmatpush2.msra.mxu0 0.0
        %1359 = vmatprep.subr.mxu0 0.0
        %1360 = vmatpush2.msra.mxu0 0.0
        %1361 = vmatprep.subr.mxu0 0.0
        %1362 = vmatpush2.msra.mxu0 0.0
        %1363 = vmatprep.subr.mxu0 0.0
        %1364 = vmatpush2.msra.mxu0 0.0
        %1365 = vmatprep.subr.mxu0 0.0
        %1366 = vmatpush2.msra.mxu0 0.0
        %1367 = vmatprep.subr.mxu0 0.0
        %1368 = vmatpush2.msra.mxu0 0.0
        %1369 = vmatprep.subr.mxu0 0.0
        %1370 = vmatpush2.msra.mxu0 0.0
        %1371 = vmatprep.subr.mxu0 0.0
        %1372 = vmatpush2.msra.mxu0 0.0
        %1373 = vmatprep.subr.mxu0 0.0
        %1374 = vmatpush2.msra.mxu0 0.0
        %1375 = vmatprep.subr.mxu0 0.0
        %1376 = vmatpush2.msra.mxu0 0.0
        %1377 = vmatprep.subr.mxu0 0.0
        %1378 = vmatpush2.msra.mxu0 0.0
        %1379 = vmatprep.subr.mxu0 0.0
        %1380 = vmatpush2.msra.mxu0 0.0
        %1381 = vmatprep.subr.mxu0 0.0
        %1382 = vmatpush2.msra.mxu0 0.0
        %1383 = vmatprep.mubr.f32.mxu0 0.0
        %1384 = vmatmul.mubr.f32.gmra.mxu0 %v1317
        %v1385 = vpop.f32.mrf.mxu0
        %v1386 = vadd.f32 0.0, %v1385
        %v1387 = vpop.f32.mrf.mxu0
        %v1388 = vadd.f32 0.0, %v1387
        %1389 = vdwg.mxu0
        %v1390 = vmax.f32 %v1312, %v1386
        %v1391 = vmax.f32 %v1314, %v1388
        %v1392 = vpack.c.bf16 %v1390, %v1390
        %v1393 = vpack.c.bf16 %v1391, %v1391
        %v1394 = vld [vmem:[#allocation5] sm:$0xff]
        %v1395 = vld [vmem:[#allocation5 + $0x8] sm:$0xff]
        %v1396 = vld [vmem:[#allocation5 + $0x10] sm:$0xff]
        %v1397 = vld [vmem:[#allocation5 + $0x18] sm:$0xff]
        %v1398 = vld [vmem:[#allocation5 + $0x20] sm:$0xff]
        %v1399 = vld [vmem:[#allocation5 + $0x28] sm:$0xff]
        %v1400 = vld [vmem:[#allocation5 + $0x30] sm:$0xff]
        %v1401 = vld [vmem:[#allocation5 + $0x38] sm:$0xff]
        %v1402 = vld [vmem:[#allocation5 + $0x40] sm:$0xff]
        %v1403 = vld [vmem:[#allocation5 + $0x48] sm:$0xff]
        %v1404 = vld [vmem:[#allocation5 + $0x50] sm:$0xff]
        %v1405 = vld [vmem:[#allocation5 + $0x58] sm:$0xff]
        %v1406 = vld [vmem:[#allocation5 + $0x60] sm:$0xff]
        %v1407 = vld [vmem:[#allocation5 + $0x68] sm:$0xff]
        %v1408 = vld [vmem:[#allocation5 + $0x70] sm:$0xff]
        %v1409 = vld [vmem:[#allocation5 + $0x78] sm:$0xff]
        %v1410 = vld [vmem:[#allocation5 + $0x80] sm:$0xff]
        %v1411 = vld [vmem:[#allocation5 + $0x88] sm:$0xff]
        %v1412 = vld [vmem:[#allocation5 + $0x90] sm:$0xff]
        %v1413 = vld [vmem:[#allocation5 + $0x98] sm:$0xff]
        %v1414 = vld [vmem:[#allocation5 + $0xa0] sm:$0xff]
        %v1415 = vld [vmem:[#allocation5 + $0xa8] sm:$0xff]
        %v1416 = vld [vmem:[#allocation5 + $0xb0] sm:$0xff]
        %v1417 = vld [vmem:[#allocation5 + $0xb8] sm:$0xff]
        %v1418 = vld [vmem:[#allocation5 + $0xc0] sm:$0xff]
        %v1419 = vld [vmem:[#allocation5 + $0xc8] sm:$0xff]
        %v1420 = vld [vmem:[#allocation5 + $0xd0] sm:$0xff]
        %v1421 = vld [vmem:[#allocation5 + $0xd8] sm:$0xff]
        %v1422 = vld [vmem:[#allocation5 + $0xe0] sm:$0xff]
        %v1423 = vld [vmem:[#allocation5 + $0xe8] sm:$0xff]
        %v1424 = vld [vmem:[#allocation5 + $0xf0] sm:$0xff]
        %v1425 = vld [vmem:[#allocation5 + $0xf8] sm:$0xff]
        %v1426 = vld [vmem:[#allocation5 + $0x100] sm:$0xff]
        %v1427 = vld [vmem:[#allocation5 + $0x108] sm:$0xff]
        %v1428 = vld [vmem:[#allocation5 + $0x110] sm:$0xff]
        %v1429 = vld [vmem:[#allocation5 + $0x118] sm:$0xff]
        %v1430 = vld [vmem:[#allocation5 + $0x120] sm:$0xff]
        %v1431 = vld [vmem:[#allocation5 + $0x128] sm:$0xff]
        %v1432 = vld [vmem:[#allocation5 + $0x130] sm:$0xff]
        %v1433 = vld [vmem:[#allocation5 + $0x138] sm:$0xff]
        %v1434 = vld [vmem:[#allocation5 + $0x140] sm:$0xff]
        %v1435 = vld [vmem:[#allocation5 + $0x148] sm:$0xff]
        %v1436 = vld [vmem:[#allocation5 + $0x150] sm:$0xff]
        %v1437 = vld [vmem:[#allocation5 + $0x158] sm:$0xff]
        %v1438 = vld [vmem:[#allocation5 + $0x160] sm:$0xff]
        %v1439 = vld [vmem:[#allocation5 + $0x168] sm:$0xff]
        %v1440 = vld [vmem:[#allocation5 + $0x170] sm:$0xff]
        %v1441 = vld [vmem:[#allocation5 + $0x178] sm:$0xff]
        %v1442 = vld [vmem:[#allocation5 + $0x180] sm:$0xff]
        %v1443 = vld [vmem:[#allocation5 + $0x188] sm:$0xff]
        %v1444 = vld [vmem:[#allocation5 + $0x190] sm:$0xff]
        %v1445 = vld [vmem:[#allocation5 + $0x198] sm:$0xff]
        %v1446 = vld [vmem:[#allocation5 + $0x1a0] sm:$0xff]
        %v1447 = vld [vmem:[#allocation5 + $0x1a8] sm:$0xff]
        %v1448 = vld [vmem:[#allocation5 + $0x1b0] sm:$0xff]
        %v1449 = vld [vmem:[#allocation5 + $0x1b8] sm:$0xff]
        %v1450 = vld [vmem:[#allocation5 + $0x1c0] sm:$0xff]
        %v1451 = vld [vmem:[#allocation5 + $0x1c8] sm:$0xff]
        %v1452 = vld [vmem:[#allocation5 + $0x1d0] sm:$0xff]
        %v1453 = vld [vmem:[#allocation5 + $0x1d8] sm:$0xff]
        %v1454 = vld [vmem:[#allocation5 + $0x1e0] sm:$0xff]
        %v1455 = vld [vmem:[#allocation5 + $0x1e8] sm:$0xff]
        %v1456 = vld [vmem:[#allocation5 + $0x1f0] sm:$0xff]
        %v1457 = vld [vmem:[#allocation5 + $0x1f8] sm:$0xff]
        %v1458 = vld [vmem:[#allocation5 + $0x200] sm:$0xff]
        %v1459 = vld [vmem:[#allocation5 + $0x208] sm:$0xff]
        %v1460 = vld [vmem:[#allocation5 + $0x210] sm:$0xff]
        %v1461 = vld [vmem:[#allocation5 + $0x218] sm:$0xff]
        %v1462 = vld [vmem:[#allocation5 + $0x220] sm:$0xff]
        %v1463 = vld [vmem:[#allocation5 + $0x228] sm:$0xff]
        %v1464 = vld [vmem:[#allocation5 + $0x230] sm:$0xff]
        %v1465 = vld [vmem:[#allocation5 + $0x238] sm:$0xff]
        %v1466 = vld [vmem:[#allocation5 + $0x240] sm:$0xff]
        %v1467 = vld [vmem:[#allocation5 + $0x248] sm:$0xff]
        %v1468 = vld [vmem:[#allocation5 + $0x250] sm:$0xff]
        %v1469 = vld [vmem:[#allocation5 + $0x258] sm:$0xff]
        %v1470 = vld [vmem:[#allocation5 + $0x260] sm:$0xff]
        %v1471 = vld [vmem:[#allocation5 + $0x268] sm:$0xff]
        %v1472 = vld [vmem:[#allocation5 + $0x270] sm:$0xff]
        %v1473 = vld [vmem:[#allocation5 + $0x278] sm:$0xff]
        %v1474 = vld [vmem:[#allocation5 + $0x280] sm:$0xff]
        %v1475 = vld [vmem:[#allocation5 + $0x288] sm:$0xff]
        %v1476 = vld [vmem:[#allocation5 + $0x290] sm:$0xff]
        %v1477 = vld [vmem:[#allocation5 + $0x298] sm:$0xff]
        %v1478 = vld [vmem:[#allocation5 + $0x2a0] sm:$0xff]
        %v1479 = vld [vmem:[#allocation5 + $0x2a8] sm:$0xff]
        %v1480 = vld [vmem:[#allocation5 + $0x2b0] sm:$0xff]
        %v1481 = vld [vmem:[#allocation5 + $0x2b8] sm:$0xff]
        %v1482 = vld [vmem:[#allocation5 + $0x2c0] sm:$0xff]
        %v1483 = vld [vmem:[#allocation5 + $0x2c8] sm:$0xff]
        %v1484 = vld [vmem:[#allocation5 + $0x2d0] sm:$0xff]
        %v1485 = vld [vmem:[#allocation5 + $0x2d8] sm:$0xff]
        %v1486 = vld [vmem:[#allocation5 + $0x2e0] sm:$0xff]
        %v1487 = vld [vmem:[#allocation5 + $0x2e8] sm:$0xff]
        %v1488 = vld [vmem:[#allocation5 + $0x2f0] sm:$0xff]
        %v1489 = vld [vmem:[#allocation5 + $0x2f8] sm:$0xff]
        %v1586 = vunpack.c.l.b16 %v1394
        %v1587 = vunpack.c.h.b16 %v1394
        %v1588 = vunpack.c.l.b16 %v1395
        %v1589 = vunpack.c.h.b16 %v1395
        %v1590 = vunpack.c.l.b16 %v1396
        %v1591 = vunpack.c.h.b16 %v1396
        %v1592 = vunpack.c.l.b16 %v1397
        %v1593 = vunpack.c.h.b16 %v1397
        %v1594 = vunpack.c.l.b16 %v1398
        %v1595 = vunpack.c.h.b16 %v1398
        %v1596 = vunpack.c.l.b16 %v1399
        %v1597 = vunpack.c.h.b16 %v1399
        %v1598 = vunpack.c.l.b16 %v1400
        %v1599 = vunpack.c.h.b16 %v1400
        %v1600 = vunpack.c.l.b16 %v1401
        %v1601 = vunpack.c.h.b16 %v1401
        %v1602 = vunpack.c.l.b16 %v1402
        %v1603 = vunpack.c.h.b16 %v1402
        %v1604 = vunpack.c.l.b16 %v1403
        %v1605 = vunpack.c.h.b16 %v1403
        %v1606 = vunpack.c.l.b16 %v1404
        %v1607 = vunpack.c.h.b16 %v1404
        %v1608 = vunpack.c.l.b16 %v1405
        %v1609 = vunpack.c.h.b16 %v1405
        %v1610 = vunpack.c.l.b16 %v1406
        %v1611 = vunpack.c.h.b16 %v1406
        %v1612 = vunpack.c.l.b16 %v1407
        %v1613 = vunpack.c.h.b16 %v1407
        %v1614 = vunpack.c.l.b16 %v1408
        %v1615 = vunpack.c.h.b16 %v1408
        %v1616 = vunpack.c.l.b16 %v1409
        %v1617 = vunpack.c.h.b16 %v1409
        %v1618 = vunpack.c.l.b16 %v1410
        %v1619 = vunpack.c.h.b16 %v1410
        %v1620 = vunpack.c.l.b16 %v1411
        %v1621 = vunpack.c.h.b16 %v1411
        %v1622 = vunpack.c.l.b16 %v1412
        %v1623 = vunpack.c.h.b16 %v1412
        %v1624 = vunpack.c.l.b16 %v1413
        %v1625 = vunpack.c.h.b16 %v1413
        %v1626 = vunpack.c.l.b16 %v1414
        %v1627 = vunpack.c.h.b16 %v1414
        %v1628 = vunpack.c.l.b16 %v1415
        %v1629 = vunpack.c.h.b16 %v1415
        %v1630 = vunpack.c.l.b16 %v1416
        %v1631 = vunpack.c.h.b16 %v1416
        %v1632 = vunpack.c.l.b16 %v1417
        %v1633 = vunpack.c.h.b16 %v1417
        %v1634 = vunpack.c.l.b16 %v1418
        %v1635 = vunpack.c.h.b16 %v1418
        %v1636 = vunpack.c.l.b16 %v1419
        %v1637 = vunpack.c.h.b16 %v1419
        %v1638 = vunpack.c.l.b16 %v1420
        %v1639 = vunpack.c.h.b16 %v1420
        %v1640 = vunpack.c.l.b16 %v1421
        %v1641 = vunpack.c.h.b16 %v1421
        %v1642 = vunpack.c.l.b16 %v1422
        %v1643 = vunpack.c.h.b16 %v1422
        %v1644 = vunpack.c.l.b16 %v1423
        %v1645 = vunpack.c.h.b16 %v1423
        %v1646 = vunpack.c.l.b16 %v1424
        %v1647 = vunpack.c.h.b16 %v1424
        %v1648 = vunpack.c.l.b16 %v1425
        %v1649 = vunpack.c.h.b16 %v1425
        %v1650 = vunpack.c.l.b16 %v1426
        %v1651 = vunpack.c.h.b16 %v1426
        %v1652 = vunpack.c.l.b16 %v1427
        %v1653 = vunpack.c.h.b16 %v1427
        %v1654 = vunpack.c.l.b16 %v1428
        %v1655 = vunpack.c.h.b16 %v1428
        %v1656 = vunpack.c.l.b16 %v1429
        %v1657 = vunpack.c.h.b16 %v1429
        %v1658 = vunpack.c.l.b16 %v1430
        %v1659 = vunpack.c.h.b16 %v1430
        %v1660 = vunpack.c.l.b16 %v1431
        %v1661 = vunpack.c.h.b16 %v1431
        %v1662 = vunpack.c.l.b16 %v1432
        %v1663 = vunpack.c.h.b16 %v1432
        %v1664 = vunpack.c.l.b16 %v1433
        %v1665 = vunpack.c.h.b16 %v1433
        %v1666 = vunpack.c.l.b16 %v1434
        %v1667 = vunpack.c.h.b16 %v1434
        %v1668 = vunpack.c.l.b16 %v1435
        %v1669 = vunpack.c.h.b16 %v1435
        %v1670 = vunpack.c.l.b16 %v1436
        %v1671 = vunpack.c.h.b16 %v1436
        %v1672 = vunpack.c.l.b16 %v1437
        %v1673 = vunpack.c.h.b16 %v1437
        %v1674 = vunpack.c.l.b16 %v1438
        %v1675 = vunpack.c.h.b16 %v1438
        %v1676 = vunpack.c.l.b16 %v1439
        %v1677 = vunpack.c.h.b16 %v1439
        %v1678 = vunpack.c.l.b16 %v1440
        %v1679 = vunpack.c.h.b16 %v1440
        %v1680 = vunpack.c.l.b16 %v1441
        %v1681 = vunpack.c.h.b16 %v1441
        %v1682 = vunpack.c.l.b16 %v1442
        %v1683 = vunpack.c.h.b16 %v1442
        %v1684 = vunpack.c.l.b16 %v1443
        %v1685 = vunpack.c.h.b16 %v1443
        %v1686 = vunpack.c.l.b16 %v1444
        %v1687 = vunpack.c.h.b16 %v1444
        %v1688 = vunpack.c.l.b16 %v1445
        %v1689 = vunpack.c.h.b16 %v1445
        %v1690 = vunpack.c.l.b16 %v1446
        %v1691 = vunpack.c.h.b16 %v1446
        %v1692 = vunpack.c.l.b16 %v1447
        %v1693 = vunpack.c.h.b16 %v1447
        %v1694 = vunpack.c.l.b16 %v1448
        %v1695 = vunpack.c.h.b16 %v1448
        %v1696 = vunpack.c.l.b16 %v1449
        %v1697 = vunpack.c.h.b16 %v1449
        %v1698 = vunpack.c.l.b16 %v1450
        %v1699 = vunpack.c.h.b16 %v1450
        %v1700 = vunpack.c.l.b16 %v1451
        %v1701 = vunpack.c.h.b16 %v1451
        %v1702 = vunpack.c.l.b16 %v1452
        %v1703 = vunpack.c.h.b16 %v1452
        %v1704 = vunpack.c.l.b16 %v1453
        %v1705 = vunpack.c.h.b16 %v1453
        %v1706 = vunpack.c.l.b16 %v1454
        %v1707 = vunpack.c.h.b16 %v1454
        %v1708 = vunpack.c.l.b16 %v1455
        %v1709 = vunpack.c.h.b16 %v1455
        %v1710 = vunpack.c.l.b16 %v1456
        %v1711 = vunpack.c.h.b16 %v1456
        %v1712 = vunpack.c.l.b16 %v1457
        %v1713 = vunpack.c.h.b16 %v1457
        %v1714 = vunpack.c.l.b16 %v1458
        %v1715 = vunpack.c.h.b16 %v1458
        %v1716 = vunpack.c.l.b16 %v1459
        %v1717 = vunpack.c.h.b16 %v1459
        %v1718 = vunpack.c.l.b16 %v1460
        %v1719 = vunpack.c.h.b16 %v1460
        %v1720 = vunpack.c.l.b16 %v1461
        %v1721 = vunpack.c.h.b16 %v1461
        %v1722 = vunpack.c.l.b16 %v1462
        %v1723 = vunpack.c.h.b16 %v1462
        %v1724 = vunpack.c.l.b16 %v1463
        %v1725 = vunpack.c.h.b16 %v1463
        %v1726 = vunpack.c.l.b16 %v1464
        %v1727 = vunpack.c.h.b16 %v1464
        %v1728 = vunpack.c.l.b16 %v1465
        %v1729 = vunpack.c.h.b16 %v1465
        %v1730 = vunpack.c.l.b16 %v1466
        %v1731 = vunpack.c.h.b16 %v1466
        %v1732 = vunpack.c.l.b16 %v1467
        %v1733 = vunpack.c.h.b16 %v1467
        %v1734 = vunpack.c.l.b16 %v1468
        %v1735 = vunpack.c.h.b16 %v1468
        %v1736 = vunpack.c.l.b16 %v1469
        %v1737 = vunpack.c.h.b16 %v1469
        %v1738 = vunpack.c.l.b16 %v1470
        %v1739 = vunpack.c.h.b16 %v1470
        %v1740 = vunpack.c.l.b16 %v1471
        %v1741 = vunpack.c.h.b16 %v1471
        %v1742 = vunpack.c.l.b16 %v1472
        %v1743 = vunpack.c.h.b16 %v1472
        %v1744 = vunpack.c.l.b16 %v1473
        %v1745 = vunpack.c.h.b16 %v1473
        %v1746 = vunpack.c.l.b16 %v1474
        %v1747 = vunpack.c.h.b16 %v1474
        %v1748 = vunpack.c.l.b16 %v1475
        %v1749 = vunpack.c.h.b16 %v1475
        %v1750 = vunpack.c.l.b16 %v1476
        %v1751 = vunpack.c.h.b16 %v1476
        %v1752 = vunpack.c.l.b16 %v1477
        %v1753 = vunpack.c.h.b16 %v1477
        %v1754 = vunpack.c.l.b16 %v1478
        %v1755 = vunpack.c.h.b16 %v1478
        %v1756 = vunpack.c.l.b16 %v1479
        %v1757 = vunpack.c.h.b16 %v1479
        %v1758 = vunpack.c.l.b16 %v1480
        %v1759 = vunpack.c.h.b16 %v1480
        %v1760 = vunpack.c.l.b16 %v1481
        %v1761 = vunpack.c.h.b16 %v1481
        %v1762 = vunpack.c.l.b16 %v1482
        %v1763 = vunpack.c.h.b16 %v1482
        %v1764 = vunpack.c.l.b16 %v1483
        %v1765 = vunpack.c.h.b16 %v1483
        %v1766 = vunpack.c.l.b16 %v1484
        %v1767 = vunpack.c.h.b16 %v1484
        %v1768 = vunpack.c.l.b16 %v1485
        %v1769 = vunpack.c.h.b16 %v1485
        %v1770 = vunpack.c.l.b16 %v1486
        %v1771 = vunpack.c.h.b16 %v1486
        %v1772 = vunpack.c.l.b16 %v1487
        %v1773 = vunpack.c.h.b16 %v1487
        %v1774 = vunpack.c.l.b16 %v1488
        %v1775 = vunpack.c.h.b16 %v1488
        %v1776 = vunpack.c.l.b16 %v1489
        %v1777 = vunpack.c.h.b16 %v1489
        %v1778 = vpack.c.b16 %v1592, %v1586
        %v1779 = vpack.c.b16 %v1593, %v1587
        %v1780 = vpack.c.b16 %v1594, %v1588
        %v1781 = vpack.c.b16 %v1595, %v1589
        %v1782 = vpack.c.b16 %v1596, %v1590
        %v1783 = vpack.c.b16 %v1597, %v1591
        %v1784 = vpack.c.b16 %v1604, %v1598
        %v1785 = vpack.c.b16 %v1605, %v1599
        %v1786 = vpack.c.b16 %v1606, %v1600
        %v1787 = vpack.c.b16 %v1607, %v1601
        %v1788 = vpack.c.b16 %v1608, %v1602
        %v1789 = vpack.c.b16 %v1609, %v1603
        %v1790 = vpack.c.b16 %v1616, %v1610
        %v1791 = vpack.c.b16 %v1617, %v1611
        %v1792 = vpack.c.b16 %v1618, %v1612
        %v1793 = vpack.c.b16 %v1619, %v1613
        %v1794 = vpack.c.b16 %v1620, %v1614
        %v1795 = vpack.c.b16 %v1621, %v1615
        %v1796 = vpack.c.b16 %v1628, %v1622
        %v1797 = vpack.c.b16 %v1629, %v1623
        %v1798 = vpack.c.b16 %v1630, %v1624
        %v1799 = vpack.c.b16 %v1631, %v1625
        %v1800 = vpack.c.b16 %v1632, %v1626
        %v1801 = vpack.c.b16 %v1633, %v1627
        %v1802 = vpack.c.b16 %v1640, %v1634
        %v1803 = vpack.c.b16 %v1641, %v1635
        %v1804 = vpack.c.b16 %v1642, %v1636
        %v1805 = vpack.c.b16 %v1643, %v1637
        %v1806 = vpack.c.b16 %v1644, %v1638
        %v1807 = vpack.c.b16 %v1645, %v1639
        %v1808 = vpack.c.b16 %v1652, %v1646
        %v1809 = vpack.c.b16 %v1653, %v1647
        %v1810 = vpack.c.b16 %v1654, %v1648
        %v1811 = vpack.c.b16 %v1655, %v1649
        %v1812 = vpack.c.b16 %v1656, %v1650
        %v1813 = vpack.c.b16 %v1657, %v1651
        %v1814 = vpack.c.b16 %v1664, %v1658
        %v1815 = vpack.c.b16 %v1665, %v1659
        %v1816 = vpack.c.b16 %v1666, %v1660
        %v1817 = vpack.c.b16 %v1667, %v1661
        %v1818 = vpack.c.b16 %v1668, %v1662
        %v1819 = vpack.c.b16 %v1669, %v1663
        %v1820 = vpack.c.b16 %v1676, %v1670
        %v1821 = vpack.c.b16 %v1677, %v1671
        %v1822 = vpack.c.b16 %v1678, %v1672
        %v1823 = vpack.c.b16 %v1679, %v1673
        %v1824 = vpack.c.b16 %v1680, %v1674
        %v1825 = vpack.c.b16 %v1681, %v1675
        %v1826 = vpack.c.b16 %v1688, %v1682
        %v1827 = vpack.c.b16 %v1689, %v1683
        %v1828 = vpack.c.b16 %v1690, %v1684
        %v1829 = vpack.c.b16 %v1691, %v1685
        %v1830 = vpack.c.b16 %v1692, %v1686
        %v1831 = vpack.c.b16 %v1693, %v1687
        %v1832 = vpack.c.b16 %v1700, %v1694
        %v1833 = vpack.c.b16 %v1701, %v1695
        %v1834 = vpack.c.b16 %v1702, %v1696
        %v1835 = vpack.c.b16 %v1703, %v1697
        %v1836 = vpack.c.b16 %v1704, %v1698
        %v1837 = vpack.c.b16 %v1705, %v1699
        %v1838 = vpack.c.b16 %v1712, %v1706
        %v1839 = vpack.c.b16 %v1713, %v1707
        %v1840 = vpack.c.b16 %v1714, %v1708
        %v1841 = vpack.c.b16 %v1715, %v1709
        %v1842 = vpack.c.b16 %v1716, %v1710
        %v1843 = vpack.c.b16 %v1717, %v1711
        %v1844 = vpack.c.b16 %v1724, %v1718
        %v1845 = vpack.c.b16 %v1725, %v1719
        %v1846 = vpack.c.b16 %v1726, %v1720
        %v1847 = vpack.c.b16 %v1727, %v1721
        %v1848 = vpack.c.b16 %v1728, %v1722
        %v1849 = vpack.c.b16 %v1729, %v1723
        %v1850 = vpack.c.b16 %v1736, %v1730
        %v1851 = vpack.c.b16 %v1737, %v1731
        %v1852 = vpack.c.b16 %v1738, %v1732
        %v1853 = vpack.c.b16 %v1739, %v1733
        %v1854 = vpack.c.b16 %v1740, %v1734
        %v1855 = vpack.c.b16 %v1741, %v1735
        %v1856 = vpack.c.b16 %v1748, %v1742
        %v1857 = vpack.c.b16 %v1749, %v1743
        %v1858 = vpack.c.b16 %v1750, %v1744
        %v1859 = vpack.c.b16 %v1751, %v1745
        %v1860 = vpack.c.b16 %v1752, %v1746
        %v1861 = vpack.c.b16 %v1753, %v1747
        %v1862 = vpack.c.b16 %v1760, %v1754
        %v1863 = vpack.c.b16 %v1761, %v1755
        %v1864 = vpack.c.b16 %v1762, %v1756
        %v1865 = vpack.c.b16 %v1763, %v1757
        %v1866 = vpack.c.b16 %v1764, %v1758
        %v1867 = vpack.c.b16 %v1765, %v1759
        %v1868 = vpack.c.b16 %v1772, %v1766
        %v1869 = vpack.c.b16 %v1773, %v1767
        %v1870 = vpack.c.b16 %v1774, %v1768
        %v1871 = vpack.c.b16 %v1775, %v1769
        %v1872 = vpack.c.b16 %v1776, %v1770
        %v1873 = vpack.c.b16 %v1777, %v1771
        %1970 = vmatprep.subr.bf16.mxu0 %v1821
        %1971 = vmatpush1.bf16.msra.mxu0 %v1820
        %1972 = vmatprep.subr.bf16.mxu0 %v1815
        %1973 = vmatpush1.bf16.msra.mxu0 %v1814
        %1974 = vmatprep.subr.bf16.mxu0 %v1809
        %1975 = vmatpush1.bf16.msra.mxu0 %v1808
        %1976 = vmatprep.subr.bf16.mxu0 %v1803
        %1977 = vmatpush1.bf16.msra.mxu0 %v1802
        %1978 = vmatprep.subr.bf16.mxu0 %v1797
        %1979 = vmatpush1.bf16.msra.mxu0 %v1796
        %1980 = vmatprep.subr.bf16.mxu0 %v1791
        %1981 = vmatpush1.bf16.msra.mxu0 %v1790
        %1982 = vmatprep.subr.bf16.mxu0 %v1785
        %1983 = vmatpush1.bf16.msra.mxu0 %v1784
        %1984 = vmatprep.subr.bf16.mxu0 %v1779
        %1985 = vmatpush1.bf16.msra.mxu0 %v1778
        %1986 = vmatprep.subr.bf16.mxu0 %v1869
        %1987 = vmatpush2.bf16.msra.mxu0 %v1868
        %1988 = vmatprep.subr.bf16.mxu0 %v1863
        %1989 = vmatpush2.bf16.msra.mxu0 %v1862
        %1990 = vmatprep.subr.bf16.mxu0 %v1857
        %1991 = vmatpush2.bf16.msra.mxu0 %v1856
        %1992 = vmatprep.subr.bf16.mxu0 %v1851
        %1993 = vmatpush2.bf16.msra.mxu0 %v1850
        %1994 = vmatprep.subr.bf16.mxu0 %v1845
        %1995 = vmatpush2.bf16.msra.mxu0 %v1844
        %1996 = vmatprep.subr.bf16.mxu0 %v1839
        %1997 = vmatpush2.bf16.msra.mxu0 %v1838
        %1998 = vmatprep.subr.bf16.mxu0 %v1833
        %1999 = vmatpush2.bf16.msra.mxu0 %v1832
        %2000 = vmatprep.subr.bf16.mxu0 %v1827
        %2001 = vmatpush2.bf16.msra.mxu0 %v1826
        %2002 = vmatprep.mubr.bf16.mxu0 %v1393
        %2003 = vmatmul.mubr.bf16.gmra.mxu0 %v1392
        %v2004 = vpop.f32.mrf.mxu0
        %v2005 = vadd.f32 0.0, %v2004
        %v2006 = vpop.f32.mrf.mxu0
        %v2007 = vadd.f32 0.0, %v2006
        %v2008 = vpop.f32.mrf.mxu0
        %v2009 = vpop.f32.mrf.mxu0
        %2010 = vdwg.mxu0
        %2011 = vmatprep.subr.bf16.mxu0 %v1823
        %2012 = vmatpush1.bf16.msra.mxu0 %v1822
        %2013 = vmatprep.subr.bf16.mxu0 %v1817
        %2014 = vmatpush1.bf16.msra.mxu0 %v1816
        %2015 = vmatprep.subr.bf16.mxu0 %v1811
        %2016 = vmatpush1.bf16.msra.mxu0 %v1810
        %2017 = vmatprep.subr.bf16.mxu0 %v1805
        %2018 = vmatpush1.bf16.msra.mxu0 %v1804
        %2019 = vmatprep.subr.bf16.mxu0 %v1799
        %2020 = vmatpush1.bf16.msra.mxu0 %v1798
        %2021 = vmatprep.subr.bf16.mxu0 %v1793
        %2022 = vmatpush1.bf16.msra.mxu0 %v1792
        %2023 = vmatprep.subr.bf16.mxu0 %v1787
        %2024 = vmatpush1.bf16.msra.mxu0 %v1786
        %2025 = vmatprep.subr.bf16.mxu0 %v1781
        %2026 = vmatpush1.bf16.msra.mxu0 %v1780
        %2027 = vmatprep.subr.bf16.mxu0 %v1871
        %2028 = vmatpush2.bf16.msra.mxu0 %v1870
        %2029 = vmatprep.subr.bf16.mxu0 %v1865
        %2030 = vmatpush2.bf16.msra.mxu0 %v1864
        %2031 = vmatprep.subr.bf16.mxu0 %v1859
        %2032 = vmatpush2.bf16.msra.mxu0 %v1858
        %2033 = vmatprep.subr.bf16.mxu0 %v1853
        %2034 = vmatpush2.bf16.msra.mxu0 %v1852
        %2035 = vmatprep.subr.bf16.mxu0 %v1847
        %2036 = vmatpush2.bf16.msra.mxu0 %v1846
        %2037 = vmatprep.subr.bf16.mxu0 %v1841
        %2038 = vmatpush2.bf16.msra.mxu0 %v1840
        %2039 = vmatprep.subr.bf16.mxu0 %v1835
        %2040 = vmatpush2.bf16.msra.mxu0 %v1834
        %2041 = vmatprep.subr.bf16.mxu0 %v1829
        %2042 = vmatpush2.bf16.msra.mxu0 %v1828
        %2043 = vmatprep.mubr.bf16.mxu0 %v1393
        %2044 = vmatmul.mubr.bf16.gmra.mxu0 %v1392
        %v2045 = vpop.f32.mrf.mxu0
        %v2046 = vadd.f32 0.0, %v2045
        %v2047 = vpop.f32.mrf.mxu0
        %v2048 = vadd.f32 0.0, %v2047
        %v2049 = vpop.f32.mrf.mxu0
        %v2050 = vpop.f32.mrf.mxu0
        %2051 = vdwg.mxu0
        %2052 = vmatprep.subr.bf16.mxu0 %v1825
        %2053 = vmatpush1.bf16.msra.mxu0 %v1824
        %2054 = vmatprep.subr.bf16.mxu0 %v1819
        %2055 = vmatpush1.bf16.msra.mxu0 %v1818
        %2056 = vmatprep.subr.bf16.mxu0 %v1813
        %2057 = vmatpush1.bf16.msra.mxu0 %v1812
        %2058 = vmatprep.subr.bf16.mxu0 %v1807
        %2059 = vmatpush1.bf16.msra.mxu0 %v1806
        %2060 = vmatprep.subr.bf16.mxu0 %v1801
        %2061 = vmatpush1.bf16.msra.mxu0 %v1800
        %2062 = vmatprep.subr.bf16.mxu0 %v1795
        %2063 = vmatpush1.bf16.msra.mxu0 %v1794
        %2064 = vmatprep.subr.bf16.mxu0 %v1789
        %2065 = vmatpush1.bf16.msra.mxu0 %v1788
        %2066 = vmatprep.subr.bf16.mxu0 %v1783
        %2067 = vmatpush1.bf16.msra.mxu0 %v1782
        %2068 = vmatprep.subr.bf16.mxu0 %v1873
        %2069 = vmatpush2.bf16.msra.mxu0 %v1872
        %2070 = vmatprep.subr.bf16.mxu0 %v1867
        %2071 = vmatpush2.bf16.msra.mxu0 %v1866
        %2072 = vmatprep.subr.bf16.mxu0 %v1861
        %2073 = vmatpush2.bf16.msra.mxu0 %v1860
        %2074 = vmatprep.subr.bf16.mxu0 %v1855
        %2075 = vmatpush2.bf16.msra.mxu0 %v1854
        %2076 = vmatprep.subr.bf16.mxu0 %v1849
        %2077 = vmatpush2.bf16.msra.mxu0 %v1848
        %2078 = vmatprep.subr.bf16.mxu0 %v1843
        %2079 = vmatpush2.bf16.msra.mxu0 %v1842
        %2080 = vmatprep.subr.bf16.mxu0 %v1837
        %2081 = vmatpush2.bf16.msra.mxu0 %v1836
        %2082 = vmatprep.subr.bf16.mxu0 %v1831
        %2083 = vmatpush2.bf16.msra.mxu0 %v1830
        %2084 = vmatprep.mubr.bf16.mxu0 %v1393
        %2085 = vmatmul.mubr.bf16.gmra.mxu0 %v1392
        %v2086 = vpop.f32.mrf.mxu0
        %v2087 = vadd.f32 0.0, %v2086
        %v2088 = vpop.f32.mrf.mxu0
        %v2089 = vadd.f32 0.0, %v2088
        %v2090 = vpop.f32.mrf.mxu0
        %v2091 = vpop.f32.mrf.mxu0
        %2092 = vdwg.mxu0
        %vm2093 = vcmask 64512
        %v2094 = vsel %vm2093, %v846, 0
        %2096 = vmatprep.subr.mxu0 0.0
        %2097 = vmatpush1.msra.mxu0 0.0
        %2098 = vmatprep.subr.mxu0 0.0
        %2099 = vmatpush1.msra.mxu0 0.0
        %2100 = vmatprep.subr.mxu0 0.0
        %2101 = vmatpush1.msra.mxu0 0.0
        %2102 = vmatprep.subr.mxu0 0.0
        %2103 = vmatpush1.msra.mxu0 0.0
        %2104 = vmatprep.subr.mxu0 0.0
        %2105 = vmatpush1.msra.mxu0 0.0
        %2106 = vmatprep.subr.mxu0 0.0
        %2107 = vmatpush1.msra.mxu0 0.0
        %2108 = vmatprep.subr.mxu0 0.0
        %2109 = vmatpush1.msra.mxu0 0.0
        %2110 = vmatprep.subr.mxu0 0.0
        %2111 = vmatpush1.msra.mxu0 0.0
        %2112 = vmatprep.subr.mxu0 0.0
        %2113 = vmatpush1.msra.mxu0 0.0
        %2114 = vmatprep.subr.mxu0 0.0
        %2115 = vmatpush1.msra.mxu0 0.0
        %2116 = vmatprep.subr.mxu0 0.0
        %2117 = vmatpush1.msra.mxu0 0.0
        %2118 = vmatprep.subr.mxu0 0.0
        %2119 = vmatpush1.msra.mxu0 0.0
        %2120 = vmatprep.subr.mxu0 0.0
        %2121 = vmatpush1.msra.mxu0 0.0
        %2122 = vmatprep.subr.mxu0 0.0
        %2123 = vmatpush1.msra.mxu0 0.0
        %2124 = vmatprep.subr.mxu0 0.0
        %2125 = vmatpush1.msra.mxu0 0.0
        %2126 = vmatprep.subr.mxu0 %v2048
        %2127 = vmatpush1.msra.mxu0 %v2046
        %2128 = vmatprep.subr.mxu0 0.0
        %2129 = vmatpush2.msra.mxu0 0.0
        %2130 = vmatprep.subr.mxu0 0.0
        %2131 = vmatpush2.msra.mxu0 0.0
        %2132 = vmatprep.subr.mxu0 0.0
        %2133 = vmatpush2.msra.mxu0 0.0
        %2134 = vmatprep.subr.mxu0 0.0
        %2135 = vmatpush2.msra.mxu0 0.0
        %2136 = vmatprep.subr.mxu0 0.0
        %2137 = vmatpush2.msra.mxu0 0.0
        %2138 = vmatprep.subr.mxu0 0.0
        %2139 = vmatpush2.msra.mxu0 0.0
        %2140 = vmatprep.subr.mxu0 0.0
        %2141 = vmatpush2.msra.mxu0 0.0
        %2142 = vmatprep.subr.mxu0 0.0
        %2143 = vmatpush2.msra.mxu0 0.0
        %2144 = vmatprep.subr.mxu0 0.0
        %2145 = vmatpush2.msra.mxu0 0.0
        %2146 = vmatprep.subr.mxu0 0.0
        %2147 = vmatpush2.msra.mxu0 0.0
        %2148 = vmatprep.subr.mxu0 0.0
        %2149 = vmatpush2.msra.mxu0 0.0
        %2150 = vmatprep.subr.mxu0 0.0
        %2151 = vmatpush2.msra.mxu0 0.0
        %2152 = vmatprep.subr.mxu0 0.0
        %2153 = vmatpush2.msra.mxu0 0.0
        %2154 = vmatprep.subr.mxu0 0.0
        %2155 = vmatpush2.msra.mxu0 0.0
        %2156 = vmatprep.subr.mxu0 0.0
        %2157 = vmatpush2.msra.mxu0 0.0
        %2158 = vmatprep.subr.mxu0 0.0
        %2159 = vmatpush2.msra.mxu0 0.0
        %2160 = vmatprep.mubr.f32.mxu0 0.0
        %2161 = vmatmul.mubr.f32.gmra.mxu0 %v2094
        %v2162 = vpop.f32.mrf.mxu0
        %v2163 = vadd.f32 0.0, %v2162
        %v2164 = vpop.f32.mrf.mxu0
        %v2165 = vadd.f32 0.0, %v2164
        %2166 = vdwg.mxu0
        %v2167 = vadd.f32 %v2005, %v2163
        %v2168 = vadd.f32 %v2007, %v2165
        %v2169 = vsel %vm2093, %v854, 0
        %2171 = vmatprep.subr.mxu0 0.0
        %2172 = vmatpush1.msra.mxu0 0.0
        %2173 = vmatprep.subr.mxu0 0.0
        %2174 = vmatpush1.msra.mxu0 0.0
        %2175 = vmatprep.subr.mxu0 0.0
        %2176 = vmatpush1.msra.mxu0 0.0
        %2177 = vmatprep.subr.mxu0 0.0
        %2178 = vmatpush1.msra.mxu0 0.0
        %2179 = vmatprep.subr.mxu0 0.0
        %2180 = vmatpush1.msra.mxu0 0.0
        %2181 = vmatprep.subr.mxu0 0.0
        %2182 = vmatpush1.msra.mxu0 0.0
        %2183 = vmatprep.subr.mxu0 0.0
        %2184 = vmatpush1.msra.mxu0 0.0
        %2185 = vmatprep.subr.mxu0 0.0
        %2186 = vmatpush1.msra.mxu0 0.0
        %2187 = vmatprep.subr.mxu0 0.0
        %2188 = vmatpush1.msra.mxu0 0.0
        %2189 = vmatprep.subr.mxu0 0.0
        %2190 = vmatpush1.msra.mxu0 0.0
        %2191 = vmatprep.subr.mxu0 0.0
        %2192 = vmatpush1.msra.mxu0 0.0
        %2193 = vmatprep.subr.mxu0 0.0
        %2194 = vmatpush1.msra.mxu0 0.0
        %2195 = vmatprep.subr.mxu0 0.0
        %2196 = vmatpush1.msra.mxu0 0.0
        %2197 = vmatprep.subr.mxu0 0.0
        %2198 = vmatpush1.msra.mxu0 0.0
        %2199 = vmatprep.subr.mxu0 0.0
        %2200 = vmatpush1.msra.mxu0 0.0
        %2201 = vmatprep.subr.mxu0 %v2089
        %2202 = vmatpush1.msra.mxu0 %v2087
        %2203 = vmatprep.subr.mxu0 0.0
        %2204 = vmatpush2.msra.mxu0 0.0
        %2205 = vmatprep.subr.mxu0 0.0
        %2206 = vmatpush2.msra.mxu0 0.0
        %2207 = vmatprep.subr.mxu0 0.0
        %2208 = vmatpush2.msra.mxu0 0.0
        %2209 = vmatprep.subr.mxu0 0.0
        %2210 = vmatpush2.msra.mxu0 0.0
        %2211 = vmatprep.subr.mxu0 0.0
        %2212 = vmatpush2.msra.mxu0 0.0
        %2213 = vmatprep.subr.mxu0 0.0
        %2214 = vmatpush2.msra.mxu0 0.0
        %2215 = vmatprep.subr.mxu0 0.0
        %2216 = vmatpush2.msra.mxu0 0.0
        %2217 = vmatprep.subr.mxu0 0.0
        %2218 = vmatpush2.msra.mxu0 0.0
        %2219 = vmatprep.subr.mxu0 0.0
        %2220 = vmatpush2.msra.mxu0 0.0
        %2221 = vmatprep.subr.mxu0 0.0
        %2222 = vmatpush2.msra.mxu0 0.0
        %2223 = vmatprep.subr.mxu0 0.0
        %2224 = vmatpush2.msra.mxu0 0.0
        %2225 = vmatprep.subr.mxu0 0.0
        %2226 = vmatpush2.msra.mxu0 0.0
        %2227 = vmatprep.subr.mxu0 0.0
        %2228 = vmatpush2.msra.mxu0 0.0
        %2229 = vmatprep.subr.mxu0 0.0
        %2230 = vmatpush2.msra.mxu0 0.0
        %2231 = vmatprep.subr.mxu0 0.0
        %2232 = vmatpush2.msra.mxu0 0.0
        %2233 = vmatprep.subr.mxu0 0.0
        %2234 = vmatpush2.msra.mxu0 0.0
        %2235 = vmatprep.mubr.f32.mxu0 0.0
        %2236 = vmatmul.mubr.f32.gmra.mxu0 %v2169
        %v2237 = vpop.f32.mrf.mxu0
        %v2238 = vadd.f32 0.0, %v2237
        %v2239 = vpop.f32.mrf.mxu0
        %v2240 = vadd.f32 0.0, %v2239
        %2241 = vdwg.mxu0
        %v2242 = vadd.f32 %v2167, %v2238
        %v2243 = vadd.f32 %v2168, %v2240
        %v2244 = vld [vmem:[%s4] sm:$0x3]
        %v2246 = vlaneseq
        %v2247 = vshrl.u32 %v2246, 7
        %v2248 = vsub.s32 0, %v2247
        %v2249 = vrot.slane %v2244, %v2248
        %v2250 = vlaneseq
        %v2251 = vshrl.u32 %v2250, 7
        %v2252 = vsub.s32 1, %v2251
        %v2253 = vrot.slane %v2244, %v2252
        %v2256 = vadd.f32 %v2242, %v2249
        %v2257 = vadd.f32 %v2243, %v2253
        %v2258 = vmax.f32 %v2256, 0.0
        %v2259 = vmax.f32 %v2257, 0.0
        %v2260 = vmax.f32 %v2258, %v2259
        %v2261 = vsel %vm2093, %v1237, 0
        %2263 = vmatprep.subr.mxu0 0.0
        %2264 = vmatpush1.msra.mxu0 0.0
        %2265 = vmatprep.subr.mxu0 0.0
        %2266 = vmatpush1.msra.mxu0 0.0
        %2267 = vmatprep.subr.mxu0 0.0
        %2268 = vmatpush1.msra.mxu0 0.0
        %2269 = vmatprep.subr.mxu0 0.0
        %2270 = vmatpush1.msra.mxu0 0.0
        %2271 = vmatprep.subr.mxu0 0.0
        %2272 = vmatpush1.msra.mxu0 0.0
        %2273 = vmatprep.subr.mxu0 0.0
        %2274 = vmatpush1.msra.mxu0 0.0
        %2275 = vmatprep.subr.mxu0 0.0
        %2276 = vmatpush1.msra.mxu0 0.0
        %2277 = vmatprep.subr.mxu0 0.0
        %2278 = vmatpush1.msra.mxu0 0.0
        %2279 = vmatprep.subr.mxu0 0.0
        %2280 = vmatpush1.msra.mxu0 0.0
        %2281 = vmatprep.subr.mxu0 0.0
        %2282 = vmatpush1.msra.mxu0 0.0
        %2283 = vmatprep.subr.mxu0 0.0
        %2284 = vmatpush1.msra.mxu0 0.0
        %2285 = vmatprep.subr.mxu0 0.0
        %2286 = vmatpush1.msra.mxu0 0.0
        %2287 = vmatprep.subr.mxu0 0.0
        %2288 = vmatpush1.msra.mxu0 0.0
        %2289 = vmatprep.subr.mxu0 0.0
        %2290 = vmatpush1.msra.mxu0 0.0
        %2291 = vmatprep.subr.mxu0 0.0
        %2292 = vmatpush1.msra.mxu0 0.0
        %2293 = vmatprep.subr.mxu0 0.0
        %2294 = vmatpush1.msra.mxu0 %v2260
        %2295 = vmatprep.subr.mxu0 0.0
        %2296 = vmatpush2.msra.mxu0 0.0
        %2297 = vmatprep.subr.mxu0 0.0
        %2298 = vmatpush2.msra.mxu0 0.0
        %2299 = vmatprep.subr.mxu0 0.0
        %2300 = vmatpush2.msra.mxu0 0.0
        %2301 = vmatprep.subr.mxu0 0.0
        %2302 = vmatpush2.msra.mxu0 0.0
        %2303 = vmatprep.subr.mxu0 0.0
        %2304 = vmatpush2.msra.mxu0 0.0
        %2305 = vmatprep.subr.mxu0 0.0
        %2306 = vmatpush2.msra.mxu0 0.0
        %2307 = vmatprep.subr.mxu0 0.0
        %2308 = vmatpush2.msra.mxu0 0.0
        %2309 = vmatprep.subr.mxu0 0.0
        %2310 = vmatpush2.msra.mxu0 0.0
        %2311 = vmatprep.subr.mxu0 0.0
        %2312 = vmatpush2.msra.mxu0 0.0
        %2313 = vmatprep.subr.mxu0 0.0
        %2314 = vmatpush2.msra.mxu0 0.0
        %2315 = vmatprep.subr.mxu0 0.0
        %2316 = vmatpush2.msra.mxu0 0.0
        %2317 = vmatprep.subr.mxu0 0.0
        %2318 = vmatpush2.msra.mxu0 0.0
        %2319 = vmatprep.subr.mxu0 0.0
        %2320 = vmatpush2.msra.mxu0 0.0
        %2321 = vmatprep.subr.mxu0 0.0
        %2322 = vmatpush2.msra.mxu0 0.0
        %2323 = vmatprep.subr.mxu0 0.0
        %2324 = vmatpush2.msra.mxu0 0.0
        %2325 = vmatprep.subr.mxu0 0.0
        %2326 = vmatpush2.msra.mxu0 0.0
        %2327 = vmatprep.mubr.f32.mxu0 0.0
        %2328 = vmatmul.mubr.f32.gmra.mxu0 %v2261
        %v2329 = vpop.f32.mrf.mxu0
        %v2330 = vadd.f32 0.0, %v2329
        %v2331 = vpop.f32.mrf.mxu0
        %2332 = vdwg.mxu0
        %v2333 = vsel %vm2093, %v1241, 0
        %2335 = vmatprep.subr.mxu0 0.0
        %2336 = vmatpush1.msra.mxu0 0.0
        %2337 = vmatprep.subr.mxu0 0.0
        %2338 = vmatpush1.msra.mxu0 0.0
        %2339 = vmatprep.subr.mxu0 0.0
        %2340 = vmatpush1.msra.mxu0 0.0
        %2341 = vmatprep.subr.mxu0 0.0
        %2342 = vmatpush1.msra.mxu0 0.0
        %2343 = vmatprep.subr.mxu0 0.0
        %2344 = vmatpush1.msra.mxu0 0.0
        %2345 = vmatprep.subr.mxu0 0.0
        %2346 = vmatpush1.msra.mxu0 0.0
        %2347 = vmatprep.subr.mxu0 0.0
        %2348 = vmatpush1.msra.mxu0 0.0
        %2349 = vmatprep.subr.mxu0 0.0
        %2350 = vmatpush1.msra.mxu0 0.0
        %2351 = vmatprep.subr.mxu0 0.0
        %2352 = vmatpush1.msra.mxu0 0.0
        %2353 = vmatprep.subr.mxu0 0.0
        %2354 = vmatpush1.msra.mxu0 0.0
        %2355 = vmatprep.subr.mxu0 0.0
        %2356 = vmatpush1.msra.mxu0 0.0
        %2357 = vmatprep.subr.mxu0 0.0
        %2358 = vmatpush1.msra.mxu0 0.0
        %2359 = vmatprep.subr.mxu0 0.0
        %2360 = vmatpush1.msra.mxu0 0.0
        %2361 = vmatprep.subr.mxu0 0.0
        %2362 = vmatpush1.msra.mxu0 0.0
        %2363 = vmatprep.subr.mxu0 0.0
        %2364 = vmatpush1.msra.mxu0 0.0
        %2365 = vmatprep.subr.mxu0 0.0
        %2366 = vmatpush1.msra.mxu0 %v2260
        %2367 = vmatprep.subr.mxu0 0.0
        %2368 = vmatpush2.msra.mxu0 0.0
        %2369 = vmatprep.subr.mxu0 0.0
        %2370 = vmatpush2.msra.mxu0 0.0
        %2371 = vmatprep.subr.mxu0 0.0
        %2372 = vmatpush2.msra.mxu0 0.0
        %2373 = vmatprep.subr.mxu0 0.0
        %2374 = vmatpush2.msra.mxu0 0.0
        %2375 = vmatprep.subr.mxu0 0.0
        %2376 = vmatpush2.msra.mxu0 0.0
        %2377 = vmatprep.subr.mxu0 0.0
        %2378 = vmatpush2.msra.mxu0 0.0
        %2379 = vmatprep.subr.mxu0 0.0
        %2380 = vmatpush2.msra.mxu0 0.0
        %2381 = vmatprep.subr.mxu0 0.0
        %2382 = vmatpush2.msra.mxu0 0.0
        %2383 = vmatprep.subr.mxu0 0.0
        %2384 = vmatpush2.msra.mxu0 0.0
        %2385 = vmatprep.subr.mxu0 0.0
        %2386 = vmatpush2.msra.mxu0 0.0
        %2387 = vmatprep.subr.mxu0 0.0
        %2388 = vmatpush2.msra.mxu0 0.0
        %2389 = vmatprep.subr.mxu0 0.0
        %2390 = vmatpush2.msra.mxu0 0.0
        %2391 = vmatprep.subr.mxu0 0.0
        %2392 = vmatpush2.msra.mxu0 0.0
        %2393 = vmatprep.subr.mxu0 0.0
        %2394 = vmatpush2.msra.mxu0 0.0
        %2395 = vmatprep.subr.mxu0 0.0
        %2396 = vmatpush2.msra.mxu0 0.0
        %2397 = vmatprep.subr.mxu0 0.0
        %2398 = vmatpush2.msra.mxu0 0.0
        %2399 = vmatprep.mubr.f32.mxu0 0.0
        %2400 = vmatmul.mubr.f32.gmra.mxu0 %v2333
        %v2401 = vpop.f32.mrf.mxu0
        %v2402 = vadd.f32 0.0, %v2401
        %v2403 = vpop.f32.mrf.mxu0
        %2404 = vdwg.mxu0
        %v2405 = vmax.f32 %v2330, %v2402
        %v2406 = vpack.c.bf16 %v2405, %v2405
        %v2407 = vld [vmem:[#allocation7] sm:$0xff]
        %v2408 = vld [vmem:[#allocation7 + $0x8] sm:$0xf]
        %v2409 = vld [vmem:[#allocation7 + $0xc] sm:$0xff]
        %v2410 = vld [vmem:[#allocation7 + $0x14] sm:$0xf]
        %v2411 = vld [vmem:[#allocation7 + $0x18] sm:$0xff]
        %v2412 = vld [vmem:[#allocation7 + $0x20] sm:$0xf]
        %v2413 = vld [vmem:[#allocation7 + $0x24] sm:$0xff]
        %v2414 = vld [vmem:[#allocation7 + $0x2c] sm:$0xf]
        %v2415 = vld [vmem:[#allocation7 + $0x30] sm:$0xff]
        %v2416 = vld [vmem:[#allocation7 + $0x38] sm:$0xf]
        %v2417 = vld [vmem:[#allocation7 + $0x3c] sm:$0xff]
        %v2418 = vld [vmem:[#allocation7 + $0x44] sm:$0xf]
        %v2419 = vld [vmem:[#allocation7 + $0x48] sm:$0xff]
        %v2420 = vld [vmem:[#allocation7 + $0x50] sm:$0xf]
        %v2421 = vld [vmem:[#allocation7 + $0x54] sm:$0xff]
        %v2422 = vld [vmem:[#allocation7 + $0x5c] sm:$0xf]
        %v2423 = vld [vmem:[#allocation7 + $0x60] sm:$0xff]
        %v2424 = vld [vmem:[#allocation7 + $0x68] sm:$0xf]
        %v2425 = vld [vmem:[#allocation7 + $0x6c] sm:$0xff]
        %v2426 = vld [vmem:[#allocation7 + $0x74] sm:$0xf]
        %v2427 = vld [vmem:[#allocation7 + $0x78] sm:$0xff]
        %v2428 = vld [vmem:[#allocation7 + $0x80] sm:$0xf]
        %v2429 = vld [vmem:[#allocation7 + $0x84] sm:$0xff]
        %v2430 = vld [vmem:[#allocation7 + $0x8c] sm:$0xf]
        %v2431 = vld [vmem:[#allocation7 + $0x90] sm:$0xff]
        %v2432 = vld [vmem:[#allocation7 + $0x98] sm:$0xf]
        %v2433 = vld [vmem:[#allocation7 + $0x9c] sm:$0xff]
        %v2434 = vld [vmem:[#allocation7 + $0xa4] sm:$0xf]
        %v2435 = vld [vmem:[#allocation7 + $0xa8] sm:$0xff]
        %v2436 = vld [vmem:[#allocation7 + $0xb0] sm:$0xf]
        %v2437 = vld [vmem:[#allocation7 + $0xb4] sm:$0xff]
        %v2438 = vld [vmem:[#allocation7 + $0xbc] sm:$0xf]
        %v2471 = vunpack.c.l.b16 %v2407
        %v2472 = vunpack.c.h.b16 %v2407
        %v2473 = vunpack.c.l.b16 %v2408
        %v2474 = vunpack.c.l.b16 %v2409
        %v2475 = vunpack.c.h.b16 %v2409
        %v2476 = vunpack.c.l.b16 %v2410
        %v2477 = vunpack.c.l.b16 %v2411
        %v2478 = vunpack.c.h.b16 %v2411
        %v2479 = vunpack.c.l.b16 %v2412
        %v2480 = vunpack.c.l.b16 %v2413
        %v2481 = vunpack.c.h.b16 %v2413
        %v2482 = vunpack.c.l.b16 %v2414
        %v2483 = vunpack.c.l.b16 %v2415
        %v2484 = vunpack.c.h.b16 %v2415
        %v2485 = vunpack.c.l.b16 %v2416
        %v2486 = vunpack.c.l.b16 %v2417
        %v2487 = vunpack.c.h.b16 %v2417
        %v2488 = vunpack.c.l.b16 %v2418
        %v2489 = vunpack.c.l.b16 %v2419
        %v2490 = vunpack.c.h.b16 %v2419
        %v2491 = vunpack.c.l.b16 %v2420
        %v2492 = vunpack.c.l.b16 %v2421
        %v2493 = vunpack.c.h.b16 %v2421
        %v2494 = vunpack.c.l.b16 %v2422
        %v2495 = vunpack.c.l.b16 %v2423
        %v2496 = vunpack.c.h.b16 %v2423
        %v2497 = vunpack.c.l.b16 %v2424
        %v2498 = vunpack.c.l.b16 %v2425
        %v2499 = vunpack.c.h.b16 %v2425
        %v2500 = vunpack.c.l.b16 %v2426
        %v2501 = vunpack.c.l.b16 %v2427
        %v2502 = vunpack.c.h.b16 %v2427
        %v2503 = vunpack.c.l.b16 %v2428
        %v2504 = vunpack.c.l.b16 %v2429
        %v2505 = vunpack.c.h.b16 %v2429
        %v2506 = vunpack.c.l.b16 %v2430
        %v2507 = vunpack.c.l.b16 %v2431
        %v2508 = vunpack.c.h.b16 %v2431
        %v2509 = vunpack.c.l.b16 %v2432
        %v2510 = vunpack.c.l.b16 %v2433
        %v2511 = vunpack.c.h.b16 %v2433
        %v2512 = vunpack.c.l.b16 %v2434
        %v2513 = vunpack.c.l.b16 %v2435
        %v2514 = vunpack.c.h.b16 %v2435
        %v2515 = vunpack.c.l.b16 %v2436
        %v2516 = vunpack.c.l.b16 %v2437
        %v2517 = vunpack.c.h.b16 %v2437
        %v2518 = vunpack.c.l.b16 %v2438
        %v2519 = vpack.c.b16 %v2474, %v2471
        %v2520 = vpack.c.b16 %v2475, %v2472
        %v2521 = vpack.c.b16 %v2476, %v2473
        %v2522 = vpack.c.b16 %v2480, %v2477
        %v2523 = vpack.c.b16 %v2481, %v2478
        %v2524 = vpack.c.b16 %v2482, %v2479
        %v2525 = vpack.c.b16 %v2486, %v2483
        %v2526 = vpack.c.b16 %v2487, %v2484
        %v2527 = vpack.c.b16 %v2488, %v2485
        %v2528 = vpack.c.b16 %v2492, %v2489
        %v2529 = vpack.c.b16 %v2493, %v2490
        %v2530 = vpack.c.b16 %v2494, %v2491
        %v2531 = vpack.c.b16 %v2498, %v2495
        %v2532 = vpack.c.b16 %v2499, %v2496
        %v2533 = vpack.c.b16 %v2500, %v2497
        %v2534 = vpack.c.b16 %v2504, %v2501
        %v2535 = vpack.c.b16 %v2505, %v2502
        %v2536 = vpack.c.b16 %v2506, %v2503
        %v2537 = vpack.c.b16 %v2510, %v2507
        %v2538 = vpack.c.b16 %v2511, %v2508
        %v2539 = vpack.c.b16 %v2512, %v2509
        %v2540 = vpack.c.b16 %v2516, %v2513
        %v2541 = vpack.c.b16 %v2517, %v2514
        %v2542 = vpack.c.b16 %v2518, %v2515
        %2567 = vmatprep.subr.bf16.mxu0 %v2541
        %2568 = vmatpush1.bf16.msra.mxu0 %v2540
        %2569 = vmatprep.subr.bf16.mxu0 %v2538
        %2570 = vmatpush1.bf16.msra.mxu0 %v2537
        %2571 = vmatprep.subr.bf16.mxu0 %v2535
        %2572 = vmatpush1.bf16.msra.mxu0 %v2534
        %2573 = vmatprep.subr.bf16.mxu0 %v2532
        %2574 = vmatpush1.bf16.msra.mxu0 %v2531
        %2575 = vmatprep.subr.bf16.mxu0 %v2529
        %2576 = vmatpush1.bf16.msra.mxu0 %v2528
        %2577 = vmatprep.subr.bf16.mxu0 %v2526
        %2578 = vmatpush1.bf16.msra.mxu0 %v2525
        %2579 = vmatprep.subr.bf16.mxu0 %v2523
        %2580 = vmatpush1.bf16.msra.mxu0 %v2522
        %2581 = vmatprep.subr.bf16.mxu0 %v2520
        %2582 = vmatpush1.bf16.msra.mxu0 %v2519
        %2583 = vmatprep.subr.bf16.mxu0 0
        %2584 = vmatpush2.bf16.msra.mxu0 0
        %2585 = vmatprep.subr.bf16.mxu0 0
        %2586 = vmatpush2.bf16.msra.mxu0 0
        %2587 = vmatprep.subr.bf16.mxu0 0
        %2588 = vmatpush2.bf16.msra.mxu0 0
        %2589 = vmatprep.subr.bf16.mxu0 0
        %2590 = vmatpush2.bf16.msra.mxu0 0
        %2591 = vmatprep.subr.bf16.mxu0 0
        %2592 = vmatpush2.bf16.msra.mxu0 0
        %2593 = vmatprep.subr.bf16.mxu0 0
        %2594 = vmatpush2.bf16.msra.mxu0 0
        %2595 = vmatprep.subr.bf16.mxu0 0
        %2596 = vmatpush2.bf16.msra.mxu0 0
        %2597 = vmatprep.subr.bf16.mxu0 0
        %2598 = vmatpush2.bf16.msra.mxu0 0
        %2599 = vmatprep.mubr.bf16.mxu0 0
        %2600 = vmatmul.mubr.bf16.gmra.mxu0 %v2406
        %v2601 = vpop.f32.mrf.mxu0
        %v2602 = vadd.f32 0.0, %v2601
        %v2603 = vpop.f32.mrf.mxu0
        %v2604 = vadd.f32 0.0, %v2603
        %v2605 = vpop.f32.mrf.mxu0
        %v2606 = vpop.f32.mrf.mxu0
        %2607 = vdwg.mxu0
        %2608 = vmatprep.subr.bf16.mxu0 0
        %2609 = vmatpush1.bf16.msra.mxu0 %v2542
        %2610 = vmatprep.subr.bf16.mxu0 0
        %2611 = vmatpush1.bf16.msra.mxu0 %v2539
        %2612 = vmatprep.subr.bf16.mxu0 0
        %2613 = vmatpush1.bf16.msra.mxu0 %v2536
        %2614 = vmatprep.subr.bf16.mxu0 0
        %2615 = vmatpush1.bf16.msra.mxu0 %v2533
        %2616 = vmatprep.subr.bf16.mxu0 0
        %2617 = vmatpush1.bf16.msra.mxu0 %v2530
        %2618 = vmatprep.subr.bf16.mxu0 0
        %2619 = vmatpush1.bf16.msra.mxu0 %v2527
        %2620 = vmatprep.subr.bf16.mxu0 0
        %2621 = vmatpush1.bf16.msra.mxu0 %v2524
        %2622 = vmatprep.subr.bf16.mxu0 0
        %2623 = vmatpush1.bf16.msra.mxu0 %v2521
        %2624 = vmatprep.subr.bf16.mxu0 0
        %2625 = vmatpush2.bf16.msra.mxu0 0
        %2626 = vmatprep.subr.bf16.mxu0 0
        %2627 = vmatpush2.bf16.msra.mxu0 0
        %2628 = vmatprep.subr.bf16.mxu0 0
        %2629 = vmatpush2.bf16.msra.mxu0 0
        %2630 = vmatprep.subr.bf16.mxu0 0
        %2631 = vmatpush2.bf16.msra.mxu0 0
        %2632 = vmatprep.subr.bf16.mxu0 0
        %2633 = vmatpush2.bf16.msra.mxu0 0
        %2634 = vmatprep.subr.bf16.mxu0 0
        %2635 = vmatpush2.bf16.msra.mxu0 0
        %2636 = vmatprep.subr.bf16.mxu0 0
        %2637 = vmatpush2.bf16.msra.mxu0 0
        %2638 = vmatprep.subr.bf16.mxu0 0
        %2639 = vmatpush2.bf16.msra.mxu0 0
        %2640 = vmatprep.mubr.bf16.mxu0 0
        %2641 = vmatmul.mubr.bf16.gmra.mxu0 %v2406
        %v2642 = vpop.f32.mrf.mxu0
        %v2643 = vadd.f32 0.0, %v2642
        %v2644 = vpop.f32.mrf.mxu0
        %v2645 = vpop.f32.mrf.mxu0
        %v2646 = vpop.f32.mrf.mxu0
        %2647 = vdwg.mxu0
        %vm2648 = vcmask 31744
        %v2649 = vsel %vm2648, %v846, 0
        %vm2651 = vcmask 1043456
        %v2653 = vsel %vm2651, %v2604, 0
        %2655 = vmatprep.subr.mxu0 0.0
        %2656 = vmatpush1.msra.mxu0 0.0
        %2657 = vmatprep.subr.mxu0 0.0
        %2658 = vmatpush1.msra.mxu0 0.0
        %2659 = vmatprep.subr.mxu0 0.0
        %2660 = vmatpush1.msra.mxu0 0.0
        %2661 = vmatprep.subr.mxu0 0.0
        %2662 = vmatpush1.msra.mxu0 0.0
        %2663 = vmatprep.subr.mxu0 0.0
        %2664 = vmatpush1.msra.mxu0 0.0
        %2665 = vmatprep.subr.mxu0 0.0
        %2666 = vmatpush1.msra.mxu0 0.0
        %2667 = vmatprep.subr.mxu0 0.0
        %2668 = vmatpush1.msra.mxu0 0.0
        %2669 = vmatprep.subr.mxu0 0.0
        %2670 = vmatpush1.msra.mxu0 0.0
        %2671 = vmatprep.subr.mxu0 0.0
        %2672 = vmatpush1.msra.mxu0 0.0
        %2673 = vmatprep.subr.mxu0 0.0
        %2674 = vmatpush1.msra.mxu0 0.0
        %2675 = vmatprep.subr.mxu0 0.0
        %2676 = vmatpush1.msra.mxu0 0.0
        %2677 = vmatprep.subr.mxu0 0.0
        %2678 = vmatpush1.msra.mxu0 0.0
        %2679 = vmatprep.subr.mxu0 0.0
        %2680 = vmatpush1.msra.mxu0 0.0
        %2681 = vmatprep.subr.mxu0 0.0
        %2682 = vmatpush1.msra.mxu0 0.0
        %2683 = vmatprep.subr.mxu0 0.0
        %2684 = vmatpush1.msra.mxu0 0.0
        %2685 = vmatprep.subr.mxu0 0.0
        %2686 = vmatpush1.msra.mxu0 %v2653
        %2687 = vmatprep.subr.mxu0 0.0
        %2688 = vmatpush2.msra.mxu0 0.0
        %2689 = vmatprep.subr.mxu0 0.0
        %2690 = vmatpush2.msra.mxu0 0.0
        %2691 = vmatprep.subr.mxu0 0.0
        %2692 = vmatpush2.msra.mxu0 0.0
        %2693 = vmatprep.subr.mxu0 0.0
        %2694 = vmatpush2.msra.mxu0 0.0
        %2695 = vmatprep.subr.mxu0 0.0
        %2696 = vmatpush2.msra.mxu0 0.0
        %2697 = vmatprep.subr.mxu0 0.0
        %2698 = vmatpush2.msra.mxu0 0.0
        %2699 = vmatprep.subr.mxu0 0.0
        %2700 = vmatpush2.msra.mxu0 0.0
        %2701 = vmatprep.subr.mxu0 0.0
        %2702 = vmatpush2.msra.mxu0 0.0
        %2703 = vmatprep.subr.mxu0 0.0
        %2704 = vmatpush2.msra.mxu0 0.0
        %2705 = vmatprep.subr.mxu0 0.0
        %2706 = vmatpush2.msra.mxu0 0.0
        %2707 = vmatprep.subr.mxu0 0.0
        %2708 = vmatpush2.msra.mxu0 0.0
        %2709 = vmatprep.subr.mxu0 0.0
        %2710 = vmatpush2.msra.mxu0 0.0
        %2711 = vmatprep.subr.mxu0 0.0
        %2712 = vmatpush2.msra.mxu0 0.0
        %2713 = vmatprep.subr.mxu0 0.0
        %2714 = vmatpush2.msra.mxu0 0.0
        %2715 = vmatprep.subr.mxu0 0.0
        %2716 = vmatpush2.msra.mxu0 0.0
        %2717 = vmatprep.subr.mxu0 0.0
        %2718 = vmatpush2.msra.mxu0 0.0
        %2719 = vmatprep.mubr.f32.mxu0 0.0
        %2720 = vmatmul.mubr.f32.gmra.mxu0 %v2649
        %v2721 = vpop.f32.mrf.mxu0
        %v2722 = vadd.f32 0.0, %v2721
        %v2723 = vpop.f32.mrf.mxu0
        %2724 = vdwg.mxu0
        %v2725 = vadd.f32 %v2602, %v2722
        %v2726 = vsel %vm2648, %v854, 0
        %v2729 = vsel %vm2651, %v2643, 0
        %2731 = vmatprep.subr.mxu0 0.0
        %2732 = vmatpush1.msra.mxu0 0.0
        %2733 = vmatprep.subr.mxu0 0.0
        %2734 = vmatpush1.msra.mxu0 0.0
        %2735 = vmatprep.subr.mxu0 0.0
        %2736 = vmatpush1.msra.mxu0 0.0
        %2737 = vmatprep.subr.mxu0 0.0
        %2738 = vmatpush1.msra.mxu0 0.0
        %2739 = vmatprep.subr.mxu0 0.0
        %2740 = vmatpush1.msra.mxu0 0.0
        %2741 = vmatprep.subr.mxu0 0.0
        %2742 = vmatpush1.msra.mxu0 0.0
        %2743 = vmatprep.subr.mxu0 0.0
        %2744 = vmatpush1.msra.mxu0 0.0
        %2745 = vmatprep.subr.mxu0 0.0
        %2746 = vmatpush1.msra.mxu0 0.0
        %2747 = vmatprep.subr.mxu0 0.0
        %2748 = vmatpush1.msra.mxu0 0.0
        %2749 = vmatprep.subr.mxu0 0.0
        %2750 = vmatpush1.msra.mxu0 0.0
        %2751 = vmatprep.subr.mxu0 0.0
        %2752 = vmatpush1.msra.mxu0 0.0
        %2753 = vmatprep.subr.mxu0 0.0
        %2754 = vmatpush1.msra.mxu0 0.0
        %2755 = vmatprep.subr.mxu0 0.0
        %2756 = vmatpush1.msra.mxu0 0.0
        %2757 = vmatprep.subr.mxu0 0.0
        %2758 = vmatpush1.msra.mxu0 0.0
        %2759 = vmatprep.subr.mxu0 0.0
        %2760 = vmatpush1.msra.mxu0 0.0
        %2761 = vmatprep.subr.mxu0 0.0
        %2762 = vmatpush1.msra.mxu0 %v2729
        %2763 = vmatprep.subr.mxu0 0.0
        %2764 = vmatpush2.msra.mxu0 0.0
        %2765 = vmatprep.subr.mxu0 0.0
        %2766 = vmatpush2.msra.mxu0 0.0
        %2767 = vmatprep.subr.mxu0 0.0
        %2768 = vmatpush2.msra.mxu0 0.0
        %2769 = vmatprep.subr.mxu0 0.0
        %2770 = vmatpush2.msra.mxu0 0.0
        %2771 = vmatprep.subr.mxu0 0.0
        %2772 = vmatpush2.msra.mxu0 0.0
        %2773 = vmatprep.subr.mxu0 0.0
        %2774 = vmatpush2.msra.mxu0 0.0
        %2775 = vmatprep.subr.mxu0 0.0
        %2776 = vmatpush2.msra.mxu0 0.0
        %2777 = vmatprep.subr.mxu0 0.0
        %2778 = vmatpush2.msra.mxu0 0.0
        %2779 = vmatprep.subr.mxu0 0.0
        %2780 = vmatpush2.msra.mxu0 0.0
        %2781 = vmatprep.subr.mxu0 0.0
        %2782 = vmatpush2.msra.mxu0 0.0
        %2783 = vmatprep.subr.mxu0 0.0
        %2784 = vmatpush2.msra.mxu0 0.0
        %2785 = vmatprep.subr.mxu0 0.0
        %2786 = vmatpush2.msra.mxu0 0.0
        %2787 = vmatprep.subr.mxu0 0.0
        %2788 = vmatpush2.msra.mxu0 0.0
        %2789 = vmatprep.subr.mxu0 0.0
        %2790 = vmatpush2.msra.mxu0 0.0
        %2791 = vmatprep.subr.mxu0 0.0
        %2792 = vmatpush2.msra.mxu0 0.0
        %2793 = vmatprep.subr.mxu0 0.0
        %2794 = vmatpush2.msra.mxu0 0.0
        %2795 = vmatprep.mubr.f32.mxu0 0.0
        %2796 = vmatmul.mubr.f32.gmra.mxu0 %v2726
        %v2797 = vpop.f32.mrf.mxu0
        %v2798 = vadd.f32 0.0, %v2797
        %v2799 = vpop.f32.mrf.mxu0
        %2800 = vdwg.mxu0
        %v2801 = vadd.f32 %v2725, %v2798
        %v2802 = vld [vmem:[%s6] sm:$0x1]
        %v2804 = vlaneseq
        %v2805 = vshrl.u32 %v2804, 7
        %v2806 = vsub.s32 0, %v2805
        %v2807 = vrot.slane %v2802, %v2806
        %v2809 = vadd.f32 %v2801, %v2807
        %v2810 = vmax.f32 %v2809, 0.0
        %2812 = vrot.lane.b32.xlu0 %v2810, 64
        %v2813 = vpop.permute.xlu0 %2812
        %v2815 = vmax.f32 %v2810, %v2813
        %v2816 = vsel %vm2648, %v1237, 0
        %v2819 = vsel %vm2651, %v2815, 0
        %2821 = vmatprep.subr.mxu0 0.0
        %2822 = vmatpush1.msra.mxu0 0.0
        %2823 = vmatprep.subr.mxu0 0.0
        %2824 = vmatpush1.msra.mxu0 0.0
        %2825 = vmatprep.subr.mxu0 0.0
        %2826 = vmatpush1.msra.mxu0 0.0
        %2827 = vmatprep.subr.mxu0 0.0
        %2828 = vmatpush1.msra.mxu0 0.0
        %2829 = vmatprep.subr.mxu0 0.0
        %2830 = vmatpush1.msra.mxu0 0.0
        %2831 = vmatprep.subr.mxu0 0.0
        %2832 = vmatpush1.msra.mxu0 0.0
        %2833 = vmatprep.subr.mxu0 0.0
        %2834 = vmatpush1.msra.mxu0 0.0
        %2835 = vmatprep.subr.mxu0 0.0
        %2836 = vmatpush1.msra.mxu0 0.0
        %2837 = vmatprep.subr.mxu0 0.0
        %2838 = vmatpush1.msra.mxu0 0.0
        %2839 = vmatprep.subr.mxu0 0.0
        %2840 = vmatpush1.msra.mxu0 0.0
        %2841 = vmatprep.subr.mxu0 0.0
        %2842 = vmatpush1.msra.mxu0 0.0
        %2843 = vmatprep.subr.mxu0 0.0
        %2844 = vmatpush1.msra.mxu0 0.0
        %2845 = vmatprep.subr.mxu0 0.0
        %2846 = vmatpush1.msra.mxu0 0.0
        %2847 = vmatprep.subr.mxu0 0.0
        %2848 = vmatpush1.msra.mxu0 0.0
        %2849 = vmatprep.subr.mxu0 0.0
        %2850 = vmatpush1.msra.mxu0 0.0
        %2851 = vmatprep.subr.mxu0 0.0
        %2852 = vmatpush1.msra.mxu0 %v2819
        %2853 = vmatprep.subr.mxu0 0.0
        %2854 = vmatpush2.msra.mxu0 0.0
        %2855 = vmatprep.subr.mxu0 0.0
        %2856 = vmatpush2.msra.mxu0 0.0
        %2857 = vmatprep.subr.mxu0 0.0
        %2858 = vmatpush2.msra.mxu0 0.0
        %2859 = vmatprep.subr.mxu0 0.0
        %2860 = vmatpush2.msra.mxu0 0.0
        %2861 = vmatprep.subr.mxu0 0.0
        %2862 = vmatpush2.msra.mxu0 0.0
        %2863 = vmatprep.subr.mxu0 0.0
        %2864 = vmatpush2.msra.mxu0 0.0
        %2865 = vmatprep.subr.mxu0 0.0
        %2866 = vmatpush2.msra.mxu0 0.0
        %2867 = vmatprep.subr.mxu0 0.0
        %2868 = vmatpush2.msra.mxu0 0.0
        %2869 = vmatprep.subr.mxu0 0.0
        %2870 = vmatpush2.msra.mxu0 0.0
        %2871 = vmatprep.subr.mxu0 0.0
        %2872 = vmatpush2.msra.mxu0 0.0
        %2873 = vmatprep.subr.mxu0 0.0
        %2874 = vmatpush2.msra.mxu0 0.0
        %2875 = vmatprep.subr.mxu0 0.0
        %2876 = vmatpush2.msra.mxu0 0.0
        %2877 = vmatprep.subr.mxu0 0.0
        %2878 = vmatpush2.msra.mxu0 0.0
        %2879 = vmatprep.subr.mxu0 0.0
        %2880 = vmatpush2.msra.mxu0 0.0
        %2881 = vmatprep.subr.mxu0 0.0
        %2882 = vmatpush2.msra.mxu0 0.0
        %2883 = vmatprep.subr.mxu0 0.0
        %2884 = vmatpush2.msra.mxu0 0.0
        %2885 = vmatprep.mubr.f32.mxu0 0.0
        %2886 = vmatmul.mubr.f32.gmra.mxu0 %v2816
        %v2887 = vpop.f32.mrf.mxu0
        %v2888 = vadd.f32 0.0, %v2887
        %v2889 = vpop.f32.mrf.mxu0
        %2890 = vdwg.mxu0
        %v2891 = vsel %vm2648, %v1241, 0
        %2893 = vmatprep.subr.mxu0 0.0
        %2894 = vmatpush1.msra.mxu0 0.0
        %2895 = vmatprep.subr.mxu0 0.0
        %2896 = vmatpush1.msra.mxu0 0.0
        %2897 = vmatprep.subr.mxu0 0.0
        %2898 = vmatpush1.msra.mxu0 0.0
        %2899 = vmatprep.subr.mxu0 0.0
        %2900 = vmatpush1.msra.mxu0 0.0
        %2901 = vmatprep.subr.mxu0 0.0
        %2902 = vmatpush1.msra.mxu0 0.0
        %2903 = vmatprep.subr.mxu0 0.0
        %2904 = vmatpush1.msra.mxu0 0.0
        %2905 = vmatprep.subr.mxu0 0.0
        %2906 = vmatpush1.msra.mxu0 0.0
        %2907 = vmatprep.subr.mxu0 0.0
        %2908 = vmatpush1.msra.mxu0 0.0
        %2909 = vmatprep.subr.mxu0 0.0
        %2910 = vmatpush1.msra.mxu0 0.0
        %2911 = vmatprep.subr.mxu0 0.0
        %2912 = vmatpush1.msra.mxu0 0.0
        %2913 = vmatprep.subr.mxu0 0.0
        %2914 = vmatpush1.msra.mxu0 0.0
        %2915 = vmatprep.subr.mxu0 0.0
        %2916 = vmatpush1.msra.mxu0 0.0
        %2917 = vmatprep.subr.mxu0 0.0
        %2918 = vmatpush1.msra.mxu0 0.0
        %2919 = vmatprep.subr.mxu0 0.0
        %2920 = vmatpush1.msra.mxu0 0.0
        %2921 = vmatprep.subr.mxu0 0.0
        %2922 = vmatpush1.msra.mxu0 0.0
        %2923 = vmatprep.subr.mxu0 0.0
        %2924 = vmatpush1.msra.mxu0 %v2819
        %2925 = vmatprep.subr.mxu0 0.0
        %2926 = vmatpush2.msra.mxu0 0.0
        %2927 = vmatprep.subr.mxu0 0.0
        %2928 = vmatpush2.msra.mxu0 0.0
        %2929 = vmatprep.subr.mxu0 0.0
        %2930 = vmatpush2.msra.mxu0 0.0
        %2931 = vmatprep.subr.mxu0 0.0
        %2932 = vmatpush2.msra.mxu0 0.0
        %2933 = vmatprep.subr.mxu0 0.0
        %2934 = vmatpush2.msra.mxu0 0.0
        %2935 = vmatprep.subr.mxu0 0.0
        %2936 = vmatpush2.msra.mxu0 0.0
        %2937 = vmatprep.subr.mxu0 0.0
        %2938 = vmatpush2.msra.mxu0 0.0
        %2939 = vmatprep.subr.mxu0 0.0
        %2940 = vmatpush2.msra.mxu0 0.0
        %2941 = vmatprep.subr.mxu0 0.0
        %2942 = vmatpush2.msra.mxu0 0.0
        %2943 = vmatprep.subr.mxu0 0.0
        %2944 = vmatpush2.msra.mxu0 0.0
        %2945 = vmatprep.subr.mxu0 0.0
        %2946 = vmatpush2.msra.mxu0 0.0
        %2947 = vmatprep.subr.mxu0 0.0
        %2948 = vmatpush2.msra.mxu0 0.0
        %2949 = vmatprep.subr.mxu0 0.0
        %2950 = vmatpush2.msra.mxu0 0.0
        %2951 = vmatprep.subr.mxu0 0.0
        %2952 = vmatpush2.msra.mxu0 0.0
        %2953 = vmatprep.subr.mxu0 0.0
        %2954 = vmatpush2.msra.mxu0 0.0
        %2955 = vmatprep.subr.mxu0 0.0
        %2956 = vmatpush2.msra.mxu0 0.0
        %2957 = vmatprep.mubr.f32.mxu0 0.0
        %2958 = vmatmul.mubr.f32.gmra.mxu0 %v2891
        %v2959 = vpop.f32.mrf.mxu0
        %v2960 = vadd.f32 0.0, %v2959
        %v2961 = vpop.f32.mrf.mxu0
        %2962 = vdwg.mxu0
        %v2963 = vmax.f32 %v2888, %v2960
        %v2964 = vpack.c.bf16 %v2963, %v2963
        %v2965 = vld [vmem:[#allocation8] sm:$0xff]
        %v2966 = vld [vmem:[#allocation8 + $0x8] sm:$0xf]
        %v2967 = vld [vmem:[#allocation8 + $0xc] sm:$0xff]
        %v2968 = vld [vmem:[#allocation8 + $0x14] sm:$0xf]
        %v2969 = vld [vmem:[#allocation8 + $0x18] sm:$0xff]
        %v2970 = vld [vmem:[#allocation8 + $0x20] sm:$0xf]
        %v2971 = vld [vmem:[#allocation8 + $0x24] sm:$0xff]
        %v2972 = vld [vmem:[#allocation8 + $0x2c] sm:$0xf]
        %v2973 = vld [vmem:[#allocation8 + $0x30] sm:$0xff]
        %v2974 = vld [vmem:[#allocation8 + $0x38] sm:$0xf]
        %v2975 = vld [vmem:[#allocation8 + $0x3c] sm:$0xff]
        %v2976 = vld [vmem:[#allocation8 + $0x44] sm:$0xf]
        %v2977 = vld [vmem:[#allocation8 + $0x48] sm:$0xff]
        %v2978 = vld [vmem:[#allocation8 + $0x50] sm:$0xf]
        %v2979 = vld [vmem:[#allocation8 + $0x54] sm:$0xff]
        %v2980 = vld [vmem:[#allocation8 + $0x5c] sm:$0xf]
        %v2997 = vunpack.c.l.b16 %v2965
        %v2998 = vunpack.c.h.b16 %v2965
        %v2999 = vunpack.c.l.b16 %v2966
        %v3000 = vunpack.c.l.b16 %v2967
        %v3001 = vunpack.c.h.b16 %v2967
        %v3002 = vunpack.c.l.b16 %v2968
        %v3003 = vunpack.c.l.b16 %v2969
        %v3004 = vunpack.c.h.b16 %v2969
        %v3005 = vunpack.c.l.b16 %v2970
        %v3006 = vunpack.c.l.b16 %v2971
        %v3007 = vunpack.c.h.b16 %v2971
        %v3008 = vunpack.c.l.b16 %v2972
        %v3009 = vunpack.c.l.b16 %v2973
        %v3010 = vunpack.c.h.b16 %v2973
        %v3011 = vunpack.c.l.b16 %v2974
        %v3012 = vunpack.c.l.b16 %v2975
        %v3013 = vunpack.c.h.b16 %v2975
        %v3014 = vunpack.c.l.b16 %v2976
        %v3015 = vunpack.c.l.b16 %v2977
        %v3016 = vunpack.c.h.b16 %v2977
        %v3017 = vunpack.c.l.b16 %v2978
        %v3018 = vunpack.c.l.b16 %v2979
        %v3019 = vunpack.c.h.b16 %v2979
        %v3020 = vunpack.c.l.b16 %v2980
        %v3021 = vpack.c.b16 %v3000, %v2997
        %v3022 = vpack.c.b16 %v3001, %v2998
        %v3023 = vpack.c.b16 %v3002, %v2999
        %v3024 = vpack.c.b16 %v3006, %v3003
        %v3025 = vpack.c.b16 %v3007, %v3004
        %v3026 = vpack.c.b16 %v3008, %v3005
        %v3027 = vpack.c.b16 %v3012, %v3009
        %v3028 = vpack.c.b16 %v3013, %v3010
        %v3029 = vpack.c.b16 %v3014, %v3011
        %v3030 = vpack.c.b16 %v3018, %v3015
        %v3031 = vpack.c.b16 %v3019, %v3016
        %v3032 = vpack.c.b16 %v3020, %v3017
        %vm3045 = vcmask 523264
        %v3047 = vsel %vm3045, %v2964, 0
        %3049 = vmatprep.subr.bf16.mxu0 0
        %3050 = vmatpush1.bf16.msra.mxu0 0
        %3051 = vmatprep.subr.bf16.mxu0 0
        %3052 = vmatpush1.bf16.msra.mxu0 0
        %3053 = vmatprep.subr.bf16.mxu0 0
        %3054 = vmatpush1.bf16.msra.mxu0 0
        %3055 = vmatprep.subr.bf16.mxu0 0
        %3056 = vmatpush1.bf16.msra.mxu0 0
        %3057 = vmatprep.subr.bf16.mxu0 %v3031
        %3058 = vmatpush1.bf16.msra.mxu0 %v3030
        %3059 = vmatprep.subr.bf16.mxu0 %v3028
        %3060 = vmatpush1.bf16.msra.mxu0 %v3027
        %3061 = vmatprep.subr.bf16.mxu0 %v3025
        %3062 = vmatpush1.bf16.msra.mxu0 %v3024
        %3063 = vmatprep.subr.bf16.mxu0 %v3022
        %3064 = vmatpush1.bf16.msra.mxu0 %v3021
        %3065 = vmatprep.subr.bf16.mxu0 0
        %3066 = vmatpush2.bf16.msra.mxu0 0
        %3067 = vmatprep.subr.bf16.mxu0 0
        %3068 = vmatpush2.bf16.msra.mxu0 0
        %3069 = vmatprep.subr.bf16.mxu0 0
        %3070 = vmatpush2.bf16.msra.mxu0 0
        %3071 = vmatprep.subr.bf16.mxu0 0
        %3072 = vmatpush2.bf16.msra.mxu0 0
        %3073 = vmatprep.subr.bf16.mxu0 0
        %3074 = vmatpush2.bf16.msra.mxu0 0
        %3075 = vmatprep.subr.bf16.mxu0 0
        %3076 = vmatpush2.bf16.msra.mxu0 0
        %3077 = vmatprep.subr.bf16.mxu0 0
        %3078 = vmatpush2.bf16.msra.mxu0 0
        %3079 = vmatprep.subr.bf16.mxu0 0
        %3080 = vmatpush2.bf16.msra.mxu0 0
        %3081 = vmatprep.mubr.bf16.mxu0 0
        %3082 = vmatmul.mubr.bf16.gmra.mxu0 %v3047
        %v3083 = vpop.f32.mrf.mxu0
        %v3084 = vadd.f32 0.0, %v3083
        %v3085 = vpop.f32.mrf.mxu0
        %v3086 = vadd.f32 0.0, %v3085
        %v3087 = vpop.f32.mrf.mxu0
        %v3088 = vpop.f32.mrf.mxu0
        %3089 = vdwg.mxu0
        %3090 = vmatprep.subr.bf16.mxu0 0
        %3091 = vmatpush1.bf16.msra.mxu0 0
        %3092 = vmatprep.subr.bf16.mxu0 0
        %3093 = vmatpush1.bf16.msra.mxu0 0
        %3094 = vmatprep.subr.bf16.mxu0 0
        %3095 = vmatpush1.bf16.msra.mxu0 0
        %3096 = vmatprep.subr.bf16.mxu0 0
        %3097 = vmatpush1.bf16.msra.mxu0 0
        %3098 = vmatprep.subr.bf16.mxu0 0
        %3099 = vmatpush1.bf16.msra.mxu0 %v3032
        %3100 = vmatprep.subr.bf16.mxu0 0
        %3101 = vmatpush1.bf16.msra.mxu0 %v3029
        %3102 = vmatprep.subr.bf16.mxu0 0
        %3103 = vmatpush1.bf16.msra.mxu0 %v3026
        %3104 = vmatprep.subr.bf16.mxu0 0
        %3105 = vmatpush1.bf16.msra.mxu0 %v3023
        %3106 = vmatprep.subr.bf16.mxu0 0
        %3107 = vmatpush2.bf16.msra.mxu0 0
        %3108 = vmatprep.subr.bf16.mxu0 0
        %3109 = vmatpush2.bf16.msra.mxu0 0
        %3110 = vmatprep.subr.bf16.mxu0 0
        %3111 = vmatpush2.bf16.msra.mxu0 0
        %3112 = vmatprep.subr.bf16.mxu0 0
        %3113 = vmatpush2.bf16.msra.mxu0 0
        %3114 = vmatprep.subr.bf16.mxu0 0
        %3115 = vmatpush2.bf16.msra.mxu0 0
        %3116 = vmatprep.subr.bf16.mxu0 0
        %3117 = vmatpush2.bf16.msra.mxu0 0
        %3118 = vmatprep.subr.bf16.mxu0 0
        %3119 = vmatpush2.bf16.msra.mxu0 0
        %3120 = vmatprep.subr.bf16.mxu0 0
        %3121 = vmatpush2.bf16.msra.mxu0 0
        %3122 = vmatprep.mubr.bf16.mxu0 0
        %3123 = vmatmul.mubr.bf16.gmra.mxu0 %v3047
        %v3124 = vpop.f32.mrf.mxu0
        %v3125 = vadd.f32 0.0, %v3124
        %v3126 = vpop.f32.mrf.mxu0
        %v3127 = vpop.f32.mrf.mxu0
        %v3128 = vpop.f32.mrf.mxu0
        %3129 = vdwg.mxu0
        %vm3130 = vcmask 15360
        %v3131 = vsel %vm3130, %v846, 0
        %vm3133 = vcmask 1041408
        %v3135 = vsel %vm3133, %v3086, 0
        %3137 = vmatprep.subr.mxu0 0.0
        %3138 = vmatpush1.msra.mxu0 0.0
        %3139 = vmatprep.subr.mxu0 0.0
        %3140 = vmatpush1.msra.mxu0 0.0
        %3141 = vmatprep.subr.mxu0 0.0
        %3142 = vmatpush1.msra.mxu0 0.0
        %3143 = vmatprep.subr.mxu0 0.0
        %3144 = vmatpush1.msra.mxu0 0.0
        %3145 = vmatprep.subr.mxu0 0.0
        %3146 = vmatpush1.msra.mxu0 0.0
        %3147 = vmatprep.subr.mxu0 0.0
        %3148 = vmatpush1.msra.mxu0 0.0
        %3149 = vmatprep.subr.mxu0 0.0
        %3150 = vmatpush1.msra.mxu0 0.0
        %3151 = vmatprep.subr.mxu0 0.0
        %3152 = vmatpush1.msra.mxu0 0.0
        %3153 = vmatprep.subr.mxu0 0.0
        %3154 = vmatpush1.msra.mxu0 0.0
        %3155 = vmatprep.subr.mxu0 0.0
        %3156 = vmatpush1.msra.mxu0 0.0
        %3157 = vmatprep.subr.mxu0 0.0
        %3158 = vmatpush1.msra.mxu0 0.0
        %3159 = vmatprep.subr.mxu0 0.0
        %3160 = vmatpush1.msra.mxu0 0.0
        %3161 = vmatprep.subr.mxu0 0.0
        %3162 = vmatpush1.msra.mxu0 0.0
        %3163 = vmatprep.subr.mxu0 0.0
        %3164 = vmatpush1.msra.mxu0 0.0
        %3165 = vmatprep.subr.mxu0 0.0
        %3166 = vmatpush1.msra.mxu0 0.0
        %3167 = vmatprep.subr.mxu0 0.0
        %3168 = vmatpush1.msra.mxu0 %v3135
        %3169 = vmatprep.subr.mxu0 0.0
        %3170 = vmatpush2.msra.mxu0 0.0
        %3171 = vmatprep.subr.mxu0 0.0
        %3172 = vmatpush2.msra.mxu0 0.0
        %3173 = vmatprep.subr.mxu0 0.0
        %3174 = vmatpush2.msra.mxu0 0.0
        %3175 = vmatprep.subr.mxu0 0.0
        %3176 = vmatpush2.msra.mxu0 0.0
        %3177 = vmatprep.subr.mxu0 0.0
        %3178 = vmatpush2.msra.mxu0 0.0
        %3179 = vmatprep.subr.mxu0 0.0
        %3180 = vmatpush2.msra.mxu0 0.0
        %3181 = vmatprep.subr.mxu0 0.0
        %3182 = vmatpush2.msra.mxu0 0.0
        %3183 = vmatprep.subr.mxu0 0.0
        %3184 = vmatpush2.msra.mxu0 0.0
        %3185 = vmatprep.subr.mxu0 0.0
        %3186 = vmatpush2.msra.mxu0 0.0
        %3187 = vmatprep.subr.mxu0 0.0
        %3188 = vmatpush2.msra.mxu0 0.0
        %3189 = vmatprep.subr.mxu0 0.0
        %3190 = vmatpush2.msra.mxu0 0.0
        %3191 = vmatprep.subr.mxu0 0.0
        %3192 = vmatpush2.msra.mxu0 0.0
        %3193 = vmatprep.subr.mxu0 0.0
        %3194 = vmatpush2.msra.mxu0 0.0
        %3195 = vmatprep.subr.mxu0 0.0
        %3196 = vmatpush2.msra.mxu0 0.0
        %3197 = vmatprep.subr.mxu0 0.0
        %3198 = vmatpush2.msra.mxu0 0.0
        %3199 = vmatprep.subr.mxu0 0.0
        %3200 = vmatpush2.msra.mxu0 0.0
        %3201 = vmatprep.mubr.f32.mxu0 0.0
        %3202 = vmatmul.mubr.f32.gmra.mxu0 %v3131
        %v3203 = vpop.f32.mrf.mxu0
        %v3204 = vadd.f32 0.0, %v3203
        %v3205 = vpop.f32.mrf.mxu0
        %3206 = vdwg.mxu0
        %v3207 = vadd.f32 %v3084, %v3204
        %v3208 = vsel %vm3130, %v854, 0
        %v3211 = vsel %vm3133, %v3125, 0
        %3213 = vmatprep.subr.mxu0 0.0
        %3214 = vmatpush1.msra.mxu0 0.0
        %3215 = vmatprep.subr.mxu0 0.0
        %3216 = vmatpush1.msra.mxu0 0.0
        %3217 = vmatprep.subr.mxu0 0.0
        %3218 = vmatpush1.msra.mxu0 0.0
        %3219 = vmatprep.subr.mxu0 0.0
        %3220 = vmatpush1.msra.mxu0 0.0
        %3221 = vmatprep.subr.mxu0 0.0
        %3222 = vmatpush1.msra.mxu0 0.0
        %3223 = vmatprep.subr.mxu0 0.0
        %3224 = vmatpush1.msra.mxu0 0.0
        %3225 = vmatprep.subr.mxu0 0.0
        %3226 = vmatpush1.msra.mxu0 0.0
        %3227 = vmatprep.subr.mxu0 0.0
        %3228 = vmatpush1.msra.mxu0 0.0
        %3229 = vmatprep.subr.mxu0 0.0
        %3230 = vmatpush1.msra.mxu0 0.0
        %3231 = vmatprep.subr.mxu0 0.0
        %3232 = vmatpush1.msra.mxu0 0.0
        %3233 = vmatprep.subr.mxu0 0.0
        %3234 = vmatpush1.msra.mxu0 0.0
        %3235 = vmatprep.subr.mxu0 0.0
        %3236 = vmatpush1.msra.mxu0 0.0
        %3237 = vmatprep.subr.mxu0 0.0
        %3238 = vmatpush1.msra.mxu0 0.0
        %3239 = vmatprep.subr.mxu0 0.0
        %3240 = vmatpush1.msra.mxu0 0.0
        %3241 = vmatprep.subr.mxu0 0.0
        %3242 = vmatpush1.msra.mxu0 0.0
        %3243 = vmatprep.subr.mxu0 0.0
        %3244 = vmatpush1.msra.mxu0 %v3211
        %3245 = vmatprep.subr.mxu0 0.0
        %3246 = vmatpush2.msra.mxu0 0.0
        %3247 = vmatprep.subr.mxu0 0.0
        %3248 = vmatpush2.msra.mxu0 0.0
        %3249 = vmatprep.subr.mxu0 0.0
        %3250 = vmatpush2.msra.mxu0 0.0
        %3251 = vmatprep.subr.mxu0 0.0
        %3252 = vmatpush2.msra.mxu0 0.0
        %3253 = vmatprep.subr.mxu0 0.0
        %3254 = vmatpush2.msra.mxu0 0.0
        %3255 = vmatprep.subr.mxu0 0.0
        %3256 = vmatpush2.msra.mxu0 0.0
        %3257 = vmatprep.subr.mxu0 0.0
        %3258 = vmatpush2.msra.mxu0 0.0
        %3259 = vmatprep.subr.mxu0 0.0
        %3260 = vmatpush2.msra.mxu0 0.0
        %3261 = vmatprep.subr.mxu0 0.0
        %3262 = vmatpush2.msra.mxu0 0.0
        %3263 = vmatprep.subr.mxu0 0.0
        %3264 = vmatpush2.msra.mxu0 0.0
        %3265 = vmatprep.subr.mxu0 0.0
        %3266 = vmatpush2.msra.mxu0 0.0
        %3267 = vmatprep.subr.mxu0 0.0
        %3268 = vmatpush2.msra.mxu0 0.0
        %3269 = vmatprep.subr.mxu0 0.0
        %3270 = vmatpush2.msra.mxu0 0.0
        %3271 = vmatprep.subr.mxu0 0.0
        %3272 = vmatpush2.msra.mxu0 0.0
        %3273 = vmatprep.subr.mxu0 0.0
        %3274 = vmatpush2.msra.mxu0 0.0
        %3275 = vmatprep.subr.mxu0 0.0
        %3276 = vmatpush2.msra.mxu0 0.0
        %3277 = vmatprep.mubr.f32.mxu0 0.0
        %3278 = vmatmul.mubr.f32.gmra.mxu0 %v3208
        %v3279 = vpop.f32.mrf.mxu0
        %v3280 = vadd.f32 0.0, %v3279
        %v3281 = vpop.f32.mrf.mxu0
        %3282 = vdwg.mxu0
        %v3283 = vadd.f32 %v3207, %v3280
        %v3284 = vld [vmem:[%s8] sm:$0x1]
        %v3286 = vlaneseq
        %v3287 = vshrl.u32 %v3286, 7
        %v3288 = vsub.s32 0, %v3287
        %v3289 = vrot.slane %v3284, %v3288
        %v3291 = vadd.f32 %v3283, %v3289
        %v3292 = vmax.f32 %v3291, 0.0
        %3294 = vrot.lane.b32.xlu0 %v3292, 64
        %v3295 = vpop.permute.xlu0 %3294
        %v3297 = vmax.f32 %v3292, %v3295
        %v3298 = vsel %vm3130, %v1237, 0
        %v3301 = vsel %vm3133, %v3297, 0
        %3303 = vmatprep.subr.mxu0 0.0
        %3304 = vmatpush1.msra.mxu0 0.0
        %3305 = vmatprep.subr.mxu0 0.0
        %3306 = vmatpush1.msra.mxu0 0.0
        %3307 = vmatprep.subr.mxu0 0.0
        %3308 = vmatpush1.msra.mxu0 0.0
        %3309 = vmatprep.subr.mxu0 0.0
        %3310 = vmatpush1.msra.mxu0 0.0
        %3311 = vmatprep.subr.mxu0 0.0
        %3312 = vmatpush1.msra.mxu0 0.0
        %3313 = vmatprep.subr.mxu0 0.0
        %3314 = vmatpush1.msra.mxu0 0.0
        %3315 = vmatprep.subr.mxu0 0.0
        %3316 = vmatpush1.msra.mxu0 0.0
        %3317 = vmatprep.subr.mxu0 0.0
        %3318 = vmatpush1.msra.mxu0 0.0
        %3319 = vmatprep.subr.mxu0 0.0
        %3320 = vmatpush1.msra.mxu0 0.0
        %3321 = vmatprep.subr.mxu0 0.0
        %3322 = vmatpush1.msra.mxu0 0.0
        %3323 = vmatprep.subr.mxu0 0.0
        %3324 = vmatpush1.msra.mxu0 0.0
        %3325 = vmatprep.subr.mxu0 0.0
        %3326 = vmatpush1.msra.mxu0 0.0
        %3327 = vmatprep.subr.mxu0 0.0
        %3328 = vmatpush1.msra.mxu0 0.0
        %3329 = vmatprep.subr.mxu0 0.0
        %3330 = vmatpush1.msra.mxu0 0.0
        %3331 = vmatprep.subr.mxu0 0.0
        %3332 = vmatpush1.msra.mxu0 0.0
        %3333 = vmatprep.subr.mxu0 0.0
        %3334 = vmatpush1.msra.mxu0 %v3301
        %3335 = vmatprep.subr.mxu0 0.0
        %3336 = vmatpush2.msra.mxu0 0.0
        %3337 = vmatprep.subr.mxu0 0.0
        %3338 = vmatpush2.msra.mxu0 0.0
        %3339 = vmatprep.subr.mxu0 0.0
        %3340 = vmatpush2.msra.mxu0 0.0
        %3341 = vmatprep.subr.mxu0 0.0
        %3342 = vmatpush2.msra.mxu0 0.0
        %3343 = vmatprep.subr.mxu0 0.0
        %3344 = vmatpush2.msra.mxu0 0.0
        %3345 = vmatprep.subr.mxu0 0.0
        %3346 = vmatpush2.msra.mxu0 0.0
        %3347 = vmatprep.subr.mxu0 0.0
        %3348 = vmatpush2.msra.mxu0 0.0
        %3349 = vmatprep.subr.mxu0 0.0
        %3350 = vmatpush2.msra.mxu0 0.0
        %3351 = vmatprep.subr.mxu0 0.0
        %3352 = vmatpush2.msra.mxu0 0.0
        %3353 = vmatprep.subr.mxu0 0.0
        %3354 = vmatpush2.msra.mxu0 0.0
        %3355 = vmatprep.subr.mxu0 0.0
        %3356 = vmatpush2.msra.mxu0 0.0
        %3357 = vmatprep.subr.mxu0 0.0
        %3358 = vmatpush2.msra.mxu0 0.0
        %3359 = vmatprep.subr.mxu0 0.0
        %3360 = vmatpush2.msra.mxu0 0.0
        %3361 = vmatprep.subr.mxu0 0.0
        %3362 = vmatpush2.msra.mxu0 0.0
        %3363 = vmatprep.subr.mxu0 0.0
        %3364 = vmatpush2.msra.mxu0 0.0
        %3365 = vmatprep.subr.mxu0 0.0
        %3366 = vmatpush2.msra.mxu0 0.0
        %3367 = vmatprep.mubr.f32.mxu0 0.0
        %3368 = vmatmul.mubr.f32.gmra.mxu0 %v3298
        %v3369 = vpop.f32.mrf.mxu0
        %v3370 = vadd.f32 0.0, %v3369
        %v3371 = vpop.f32.mrf.mxu0
        %3372 = vdwg.mxu0
        %v3373 = vsel %vm3130, %v1241, 0
        %3375 = vmatprep.subr.mxu0 0.0
        %3376 = vmatpush1.msra.mxu0 0.0
        %3377 = vmatprep.subr.mxu0 0.0
        %3378 = vmatpush1.msra.mxu0 0.0
        %3379 = vmatprep.subr.mxu0 0.0
        %3380 = vmatpush1.msra.mxu0 0.0
        %3381 = vmatprep.subr.mxu0 0.0
        %3382 = vmatpush1.msra.mxu0 0.0
        %3383 = vmatprep.subr.mxu0 0.0
        %3384 = vmatpush1.msra.mxu0 0.0
        %3385 = vmatprep.subr.mxu0 0.0
        %3386 = vmatpush1.msra.mxu0 0.0
        %3387 = vmatprep.subr.mxu0 0.0
        %3388 = vmatpush1.msra.mxu0 0.0
        %3389 = vmatprep.subr.mxu0 0.0
        %3390 = vmatpush1.msra.mxu0 0.0
        %3391 = vmatprep.subr.mxu0 0.0
        %3392 = vmatpush1.msra.mxu0 0.0
        %3393 = vmatprep.subr.mxu0 0.0
        %3394 = vmatpush1.msra.mxu0 0.0
        %3395 = vmatprep.subr.mxu0 0.0
        %3396 = vmatpush1.msra.mxu0 0.0
        %3397 = vmatprep.subr.mxu0 0.0
        %3398 = vmatpush1.msra.mxu0 0.0
        %3399 = vmatprep.subr.mxu0 0.0
        %3400 = vmatpush1.msra.mxu0 0.0
        %3401 = vmatprep.subr.mxu0 0.0
        %3402 = vmatpush1.msra.mxu0 0.0
        %3403 = vmatprep.subr.mxu0 0.0
        %3404 = vmatpush1.msra.mxu0 0.0
        %3405 = vmatprep.subr.mxu0 0.0
        %3406 = vmatpush1.msra.mxu0 %v3301
        %3407 = vmatprep.subr.mxu0 0.0
        %3408 = vmatpush2.msra.mxu0 0.0
        %3409 = vmatprep.subr.mxu0 0.0
        %3410 = vmatpush2.msra.mxu0 0.0
        %3411 = vmatprep.subr.mxu0 0.0
        %3412 = vmatpush2.msra.mxu0 0.0
        %3413 = vmatprep.subr.mxu0 0.0
        %3414 = vmatpush2.msra.mxu0 0.0
        %3415 = vmatprep.subr.mxu0 0.0
        %3416 = vmatpush2.msra.mxu0 0.0
        %3417 = vmatprep.subr.mxu0 0.0
        %3418 = vmatpush2.msra.mxu0 0.0
        %3419 = vmatprep.subr.mxu0 0.0
        %3420 = vmatpush2.msra.mxu0 0.0
        %3421 = vmatprep.subr.mxu0 0.0
        %3422 = vmatpush2.msra.mxu0 0.0
        %3423 = vmatprep.subr.mxu0 0.0
        %3424 = vmatpush2.msra.mxu0 0.0
        %3425 = vmatprep.subr.mxu0 0.0
        %3426 = vmatpush2.msra.mxu0 0.0
        %3427 = vmatprep.subr.mxu0 0.0
        %3428 = vmatpush2.msra.mxu0 0.0
        %3429 = vmatprep.subr.mxu0 0.0
        %3430 = vmatpush2.msra.mxu0 0.0
        %3431 = vmatprep.subr.mxu0 0.0
        %3432 = vmatpush2.msra.mxu0 0.0
        %3433 = vmatprep.subr.mxu0 0.0
        %3434 = vmatpush2.msra.mxu0 0.0
        %3435 = vmatprep.subr.mxu0 0.0
        %3436 = vmatpush2.msra.mxu0 0.0
        %3437 = vmatprep.subr.mxu0 0.0
        %3438 = vmatpush2.msra.mxu0 0.0
        %3439 = vmatprep.mubr.f32.mxu0 0.0
        %3440 = vmatmul.mubr.f32.gmra.mxu0 %v3373
        %v3441 = vpop.f32.mrf.mxu0
        %v3442 = vadd.f32 0.0, %v3441
        %v3443 = vpop.f32.mrf.mxu0
        %3444 = vdwg.mxu0
        %v3445 = vmax.f32 %v3370, %v3442
        %v3446 = vpack.c.bf16 %v3445, %v3445
        %v3447 = vld [vmem:[%s9] sm:$0xf]
        %v3448 = vld [vmem:[%s9 + $0x4] sm:$0xf]
        %v3449 = vld [vmem:[%s9 + $0x8] sm:$0xf]
        %v3450 = vld [vmem:[%s9 + $0xc] sm:$0xf]
        %v3451 = vld [vmem:[%s9 + $0x10] sm:$0xf]
        %v3452 = vld [vmem:[%s9 + $0x14] sm:$0xf]
        %v3453 = vld [vmem:[%s9 + $0x18] sm:$0xf]
        %v3454 = vld [vmem:[%s9 + $0x1c] sm:$0xf]
        %v3455 = vld [vmem:[%s10] sm:$0x1]
        %v3464 = vunpack.c.l.b16 %v3447
        %v3465 = vunpack.c.l.b16 %v3448
        %v3466 = vunpack.c.l.b16 %v3449
        %v3467 = vunpack.c.l.b16 %v3450
        %v3468 = vunpack.c.l.b16 %v3451
        %v3469 = vunpack.c.l.b16 %v3452
        %v3470 = vunpack.c.l.b16 %v3453
        %v3471 = vunpack.c.l.b16 %v3454
        %v3472 = vpack.c.b16 %v3465, %v3464
        %v3473 = vpack.c.b16 %v3467, %v3466
        %v3474 = vpack.c.b16 %v3469, %v3468
        %v3475 = vpack.c.b16 %v3471, %v3470
        %v3481 = vsel %vm3045, %v3446, 0
        %3483 = vmatprep.subr.bf16.mxu0 0
        %3484 = vmatpush1.bf16.msra.mxu0 0
        %3485 = vmatprep.subr.bf16.mxu0 0
        %3486 = vmatpush1.bf16.msra.mxu0 0
        %3487 = vmatprep.subr.bf16.mxu0 0
        %3488 = vmatpush1.bf16.msra.mxu0 0
        %3489 = vmatprep.subr.bf16.mxu0 0
        %3490 = vmatpush1.bf16.msra.mxu0 0
        %3491 = vmatprep.subr.bf16.mxu0 0
        %3492 = vmatpush1.bf16.msra.mxu0 %v3475
        %3493 = vmatprep.subr.bf16.mxu0 0
        %3494 = vmatpush1.bf16.msra.mxu0 %v3474
        %3495 = vmatprep.subr.bf16.mxu0 0
        %3496 = vmatpush1.bf16.msra.mxu0 %v3473
        %3497 = vmatprep.subr.bf16.mxu0 0
        %3498 = vmatpush1.bf16.msra.mxu0 %v3472
        %3499 = vmatprep.subr.bf16.mxu0 0
        %3500 = vmatpush2.bf16.msra.mxu0 0
        %3501 = vmatprep.subr.bf16.mxu0 0
        %3502 = vmatpush2.bf16.msra.mxu0 0
        %3503 = vmatprep.subr.bf16.mxu0 0
        %3504 = vmatpush2.bf16.msra.mxu0 0
        %3505 = vmatprep.subr.bf16.mxu0 0
        %3506 = vmatpush2.bf16.msra.mxu0 0
        %3507 = vmatprep.subr.bf16.mxu0 0
        %3508 = vmatpush2.bf16.msra.mxu0 0
        %3509 = vmatprep.subr.bf16.mxu0 0
        %3510 = vmatpush2.bf16.msra.mxu0 0
        %3511 = vmatprep.subr.bf16.mxu0 0
        %3512 = vmatpush2.bf16.msra.mxu0 0
        %3513 = vmatprep.subr.bf16.mxu0 0
        %3514 = vmatpush2.bf16.msra.mxu0 0
        %3515 = vmatprep.mubr.bf16.mxu0 0
        %3516 = vmatmul.mubr.bf16.gmra.mxu0 %v3481
        %v3517 = vpop.f32.mrf.mxu0
        %v3518 = vadd.f32 %v3455, %v3517
        %v3519 = vpop.f32.mrf.mxu0
        %v3520 = vpop.f32.mrf.mxu0
        %v3521 = vpop.f32.mrf.mxu0
        %3522 = vdwg.mxu0
        %v3523 = vmax.f32 %v3518, 0.0
        %v3524 = vpack.c.bf16 %v3523, %v3523
        %v3525 = vld [vmem:[%s11] sm:$0xf]
        %v3526 = vld [vmem:[%s11 + $0x4] sm:$0xf]
        %v3527 = vld [vmem:[%s11 + $0x8] sm:$0xf]
        %v3528 = vld [vmem:[%s11 + $0xc] sm:$0xf]
        %v3529 = vld [vmem:[%s12] sm:$0x1]
        %v3534 = vunpack.c.l.b16 %v3525
        %v3535 = vunpack.c.l.b16 %v3526
        %v3536 = vunpack.c.l.b16 %v3527
        %v3537 = vunpack.c.l.b16 %v3528
        %v3538 = vpack.c.b16 %v3535, %v3534
        %v3539 = vpack.c.b16 %v3537, %v3536
        %vm3542 = vcmask 261120
        %v3544 = vsel %vm3542, %v3524, 0
        %3546 = vmatprep.subr.bf16.mxu0 0
        %3547 = vmatpush1.bf16.msra.mxu0 0
        %3548 = vmatprep.subr.bf16.mxu0 0
        %3549 = vmatpush1.bf16.msra.mxu0 0
        %3550 = vmatprep.subr.bf16.mxu0 0
        %3551 = vmatpush1.bf16.msra.mxu0 0
        %3552 = vmatprep.subr.bf16.mxu0 0
        %3553 = vmatpush1.bf16.msra.mxu0 0
        %3554 = vmatprep.subr.bf16.mxu0 0
        %3555 = vmatpush1.bf16.msra.mxu0 0
        %3556 = vmatprep.subr.bf16.mxu0 0
        %3557 = vmatpush1.bf16.msra.mxu0 0
        %3558 = vmatprep.subr.bf16.mxu0 0
        %3559 = vmatpush1.bf16.msra.mxu0 %v3539
        %3560 = vmatprep.subr.bf16.mxu0 0
        %3561 = vmatpush1.bf16.msra.mxu0 %v3538
        %3562 = vmatprep.subr.bf16.mxu0 0
        %3563 = vmatpush2.bf16.msra.mxu0 0
        %3564 = vmatprep.subr.bf16.mxu0 0
        %3565 = vmatpush2.bf16.msra.mxu0 0
        %3566 = vmatprep.subr.bf16.mxu0 0
        %3567 = vmatpush2.bf16.msra.mxu0 0
        %3568 = vmatprep.subr.bf16.mxu0 0
        %3569 = vmatpush2.bf16.msra.mxu0 0
        %3570 = vmatprep.subr.bf16.mxu0 0
        %3571 = vmatpush2.bf16.msra.mxu0 0
        %3572 = vmatprep.subr.bf16.mxu0 0
        %3573 = vmatpush2.bf16.msra.mxu0 0
        %3574 = vmatprep.subr.bf16.mxu0 0
        %3575 = vmatpush2.bf16.msra.mxu0 0
        %3576 = vmatprep.subr.bf16.mxu0 0
        %3577 = vmatpush2.bf16.msra.mxu0 0
        %3578 = vmatprep.mubr.bf16.mxu0 0
        %3579 = vmatmul.mubr.bf16.gmra.mxu0 %v3544
        %v3580 = vpop.f32.mrf.mxu0
        %v3581 = vadd.f32 %v3529, %v3580
        %v3582 = vpop.f32.mrf.mxu0
        %v3583 = vpop.f32.mrf.mxu0
        %v3584 = vpop.f32.mrf.mxu0
        %3585 = vdwg.mxu0
        %vm3586 = vcmask 24576
        %3587 = vst.msk [vmem:[%s491] sm:$0x1] %vm3586, %v3581
        %s3588 = sand.u32 %s316, 1
        %s3589 = scalar_lea.sflag [#allocation4], %s3588
        %s3590 = sand.u32 %s316, 1
        %s3591 = scalar_lea.vmem [#allocation10], %s3590
        // Predicated region
        $region89: #{cnn_forward.1} parent=71 // pred_check
          %p3592 = pneg %p326
        $region90: #{cnn_forward.1} parent=71 // pred_check_branch
          %3594 = sbr.rel (%p3592) target = $region92
        $region91: #{cnn_forward.1} parent=71 // pred_region
          %s3596 = ssub.s32 16, 16
          %3597 = vsyncadd %s3589, %s3596
          %s3598 = smul.addr %s30, 16
          %s3599 = scalar_lea.hbm %s13, %s3598
          %s3601 = sshll.u32 %s3591, 4
          %s3602 = int_to_ptr.vmem [resolvable:$true] %s3601
          %3604 = dma.vmem_to_hbm [thread:$0]  %s3602, 16, %s3599, %s3589
        $region92: #{cnn_forward.1} parent=71 // pred_fallthru
          _
      $region72: #{cnn_forward.1} parent=5 // pred_fallthru
        _
      %p3605 = scmp.le.s32.totalorder 2, %s25
      // Predicated region
      $region93: #{cnn_forward.1} parent=5 // pred_check
        %p3606 = pneg %p3605
      $region94: #{cnn_forward.1} parent=5 // pred_check_branch
        %3608 = sbr.rel (%p3606) target = $region96
      $region95: #{cnn_forward.1} parent=5 // pred_region
        %s3609 = ssub.s32 %s25, 2
        // Predicated region
        $region97: #{cnn_forward.1} parent=95 // pred_check
          %p3610 = pneg %p332
        $region98: #{cnn_forward.1} parent=95 // pred_check_branch
          %3612 = sbr.rel (%p3610) target = $region100
        $region99: #{cnn_forward.1} parent=95 // pred_region
          %s3613 = sand.u32 %s317, 1
          %s3614 = scalar_lea.sflag [#allocation4], %s3613
          %s3615 = sand.u32 %s317, 1
          %s3616 = scalar_lea.vmem [#allocation10], %s3615
          %3617 = dma.done %s3614, 16
        $region100: #{cnn_forward.1} parent=95 // pred_fallthru
          _
      $region96: #{cnn_forward.1} parent=5 // pred_fallthru
        _
    $region6: #{cnn_forward.1} parent=1 // loop_footer
      %s29 = sadd.s32 1, %s25
    $region7: #{cnn_forward.1} parent=1 // loop_footer_branch
      %24 = sbr.rel target = $region3
    $region8: #{cnn_forward.1} parent=1 // loop_exit
      _
    %3618 = vsyncpa [#allocation3], 1
    %s3619 = scalar_lea.sflag [#allocation3], 1
    %3620 = vsyncpa %s3619, 1
    %3621 = vsyncpa [#allocation6], 1
    %3622 = vsyncpa [#allocation9], 1
    %3623 = vsyncpa [#allocation4], 1
    %s3624 = scalar_lea.sflag [#allocation4], 1
    %3625 = vsyncpa %s3624, 1

</llo_original>
